<compile_context>
chip_gen: v6e
topology: v6e:2x2x1
jax: 0.10.0
libtpu: 0.0.40
codegen_flags: <defaults>
</compile_context>

<pallas_src>
import jax
import jax.numpy as jnp
from jax.experimental import pallas as pl
from jax.experimental.pallas import tpu as pltpu

VMEM_BUDGET = 32 * 1024 * 1024  # explicit budget (v7x: 64 MiB physical / 32 MiB scoped default)


# --------------------------------------------------------------- kernel A ---
def embed_proj_kernel(ids_ref, emb_hbm, wih_ref, b_ref, gout_ref, xemb_sc, sem):
    """Embedding gather (HBM -> VMEM DMA per row) + hoisted input projection.

    ids_ref : (T*S,) int32 SMEM (scalar prefetch)  flattened token ids
    emb_hbm : (V, E) f32   HBM (pl.ANY)            embedding table (never VMEM-resident)
    wih_ref : (E, 4H) bf16 VMEM                    LSTM input weights (pre-transposed)
    b_ref   : (1, 4H) f32  VMEM                    b_ih + b_hh (folded here, not per step)
    gout_ref: (TR, 4H) f32                         gates_in tile for this grid step
    xemb_sc : (TR, E) f32  VMEM scratch            gathered embedding rows
    sem     : DMA semaphores, one per row in the tile
    """
    tr = xemb_sc.shape[0]
    base = pl.program_id(0) * tr

    # Gather TR embedding rows from HBM with concurrent row DMAs.
    for r in range(tr):                       # static, small tile
        pltpu.make_async_copy(emb_hbm.at[ids_ref[base + r]],
                              xemb_sc.at[r], sem.at[r]).start()
    for r in range(tr):
        pltpu.make_async_copy(emb_hbm.at[0], xemb_sc.at[r], sem.at[r]).wait()

    x = xemb_sc[...].astype(jnp.bfloat16)     # bf16 MXU operand, f32 accumulate
    gout_ref[...] = (
        jnp.dot(x, wih_ref[...], preferred_element_type=jnp.float32) + b_ref[...])


# --------------------------------------------------------------- kernel B ---
def lstm_kernel(gin_ref, whh_ref, hall_ref, h_sc, c_sc):
    """Serial LSTM recurrence. Per step: one (S,H)@(H,4H) matmul + gate math.

    gin_ref : (T*S, 4H) f32  precomputed x@W_ih + b  (time-major rows)
    whh_ref : (H, 4H)   bf16 recurrent weights (pre-transposed)
    hall_ref: (T*S, H)  bf16 output: hidden state of every step
    h_sc/c_sc: (S, H)   f32  recurrent state (kept f32; v5e-safe gate math)
    """
    S, H = h_sc.shape
    T = gin_ref.shape[0] // S

    h_sc[...] = jnp.zeros_like(h_sc)
    c_sc[...] = jnp.zeros_like(c_sc)

    # T is small/static -> fully unrolled so the LLO scheduler sees the whole chain.
    @pl.loop(0, T, unroll=True)
    def _(t):
        row = t * S
        gates = gin_ref[pl.ds(row, S), :] + jnp.dot(
            h_sc[...].astype(jnp.bfloat16), whh_ref[...],
            preferred_element_type=jnp.float32)                     # (S, 4H) f32
        # H = 128 -> lane-aligned, full-vreg gate slices.
        i_g = jax.nn.sigmoid(gates[:, 0 * H:1 * H])
        f_g = jax.nn.sigmoid(gates[:, 1 * H:2 * H])
        g_g = jnp.tanh(gates[:, 2 * H:3 * H])
        o_g = jax.nn.sigmoid(gates[:, 3 * H:4 * H])
        c_new = f_g * c_sc[...] + i_g * g_g
        h_new = o_g * jnp.tanh(c_new)
        c_sc[...] = c_new
        h_sc[...] = h_new
        hall_ref[pl.ds(row, S), :] = h_new.astype(jnp.bfloat16)     # time-major


# --------------------------------------------------------------- kernel C ---
def fc_kernel(h_ref, wfc_ref, bfc_ref, out_ref):
    """Final Linear on the flattened hidden states, tiled over T (parallel).

    h_ref  : (TT, S*H) bf16   flattened hidden-state tile (K = S*H)
    wfc_ref: (S*H, Vpad) bf16 FC weight, pre-transposed + lane-padded
    bfc_ref: (1, Vpad) f32
    out_ref: (TT, Vpad) f32   lane-dense output slab
    """
    out_ref[...] = (
        jnp.dot(h_ref[...], wfc_ref[...], preferred_element_type=jnp.float32)
        + bfc_ref[...])


# ---------------------------------------------------------------- wrapper ---
def _pick_tile(n, candidates=(128, 64, 32, 16, 8)):
    for c in candidates:
        if n % c == 0 and n // c >= 2:
            return c
    for c in candidates:
        if n % c == 0:
            return c
    return n


def network_forward(x_ids, params):
    T, S = x_ids.shape
    H = params["w_hh"].shape[1]                     # w_hh: (4H, H)
    Vout = params["w_fc"].shape[0]
    V, E = params["embed"].shape
    R = T * S
    G4 = 4 * H
    vpad = ((Vout + 127) // 128) * 128              # lane-dense output width

    # One-time layout / dtype plumbing (outside the kernels).
    ids_flat = x_ids.reshape(R).astype(jnp.int32)
    wih_bf = params["w_ih"].T.astype(jnp.bfloat16)                       # (E, 4H)
    whh_bf = params["w_hh"].T.astype(jnp.bfloat16)                       # (H, 4H)
    b_row = (params["b_ih"] + params["b_hh"]).reshape(1, G4).astype(jnp.float32)
    wfc_bf = jnp.pad(params["w_fc"].T.astype(jnp.bfloat16),
                     ((0, 0), (0, vpad - Vout)))                         # (S*H, Vpad)
    bfc_row = jnp.pad(params["b_fc"].astype(jnp.float32),
                      (0, vpad - Vout)).reshape(1, vpad)

    # ---- kernel A: embedding gather + hoisted input projection (gridded) ----
    tr = _pick_tile(R)
    gates_in = pl.pallas_call(
        embed_proj_kernel,
        out_shape=jax.ShapeDtypeStruct((R, G4), jnp.float32),
        grid_spec=pltpu.PrefetchScalarGridSpec(
            num_scalar_prefetch=1,
            grid=(R // tr,),
            in_specs=[pl.BlockSpec(memory_space=pl.ANY),               # table stays in HBM
                      pl.BlockSpec((E, G4), lambda i, ids: (0, 0)),    # W_ih (resident)
                      pl.BlockSpec((1, G4), lambda i, ids: (0, 0))],   # bias
            out_specs=pl.BlockSpec((tr, G4), lambda i, ids: (i, 0)),
            scratch_shapes=[pltpu.VMEM((tr, E), jnp.float32),
                            pltpu.SemaphoreType.DMA((tr,))]),
        compiler_params=pltpu.CompilerParams(
            dimension_semantics=("parallel",),
            vmem_limit_bytes=VMEM_BUDGET),
    )(ids_flat, params["embed"], wih_bf, b_row)

    # ---- kernel B: serial LSTM recurrence (grid-less, weights resident) -----
    # TODO(synk): for very long T, stream gates_in / hall in T-tiles instead of
    # keeping them fully VMEM-resident (matters for v7x's 64 MiB VMEM).
    hall = pl.pallas_call(
        lstm_kernel,
        out_shape=jax.ShapeDtypeStruct((R, H), jnp.bfloat16),
        in_specs=[pl.BlockSpec(memory_space=pltpu.MemorySpace.VMEM),
                  pl.BlockSpec(memory_space=pltpu.MemorySpace.VMEM)],
        out_specs=pl.BlockSpec(memory_space=pltpu.MemorySpace.VMEM),
        scratch_shapes=[pltpu.VMEM((S, H), jnp.float32),
                        pltpu.VMEM((S, H), jnp.float32)],
        compiler_params=pltpu.CompilerParams(vmem_limit_bytes=VMEM_BUDGET),
    )(gates_in, whh_bf)

    # ---- kernel C: flatten + FC, gridded over T tiles (parallel) ------------
    h_flat = hall.reshape(T, S * H)            # flatten order matches torch reshape
    tt = T if T <= 128 else _pick_tile(T)
    out_pad = pl.pallas_call(
        fc_kernel,
        out_shape=jax.ShapeDtypeStruct((T, vpad), jnp.float32),
        grid=(T // tt,),
        in_specs=[pl.BlockSpec((tt, S * H), lambda i: (i, 0)),
                  pl.BlockSpec((S * H, vpad), lambda i: (0, 0)),
                  pl.BlockSpec((1, vpad), lambda i: (0, 0))],
        out_specs=pl.BlockSpec((tt, vpad), lambda i: (i, 0)),
        compiler_params=pltpu.CompilerParams(
            dimension_semantics=("parallel",),
            vmem_limit_bytes=VMEM_BUDGET),
    )(h_flat, wfc_bf, bfc_row)

    return out_pad[:, :Vout]


# -------------------------------------------------------------- reference ---
def network_ref(x_ids, params):
    x_emb = jnp.take(params["embed"], x_ids, axis=0)
    w_ih, w_hh = params["w_ih"], params["w_hh"]
    b = params["b_ih"] + params["b_hh"]
    S = x_ids.shape[1]
    H = w_hh.shape[1]

    def step(carry, x_t):
        h, c = carry
        gates = x_t @ w_ih.T + h @ w_hh.T + b
        i, f, g, o = jnp.split(gates, 4, axis=-1)
        i, f, o = jax.nn.sigmoid(i), jax.nn.sigmoid(f), jax.nn.sigmoid(o)
        g = jnp.tanh(g)
        c = f * c + i * g
        h = o * jnp.tanh(c)
        return (h, c), h

    h0 = jnp.zeros((S, H), jnp.float32)
    c0 = jnp.zeros((S, H), jnp.float32)
    _, out = jax.lax.scan(step, (h0, c0), x_emb)
    out = out.reshape(out.shape[0], -1)
    return out @ params["w_fc"].T + params["b_fc"]


# ------------------------------------------------------------------- main ---
if __name__ == "__main__":
    # Small shapes consistent with the module's __init__ (hidden_size default
    # 128 kept so gate slices are lane-aligned; the rest shrunk).
    VOCAB = 32
    SEQ_LEN = 8      # sequence_len (x.shape[1], the LSTM "batch")
    EMB = 16         # embedding_dim
    HID = 128        # hidden_size (module default)
    VOUT = 16        # Vout
    BATCH = 4        # x.shape[0] (time steps for the LSTM)

    key = jax.random.PRNGKey(0)
    ks = jax.random.split(key, 8)
    scale = 1.0 / jnp.sqrt(HID)
    fc_scale = 1.0 / jnp.sqrt(SEQ_LEN * HID)
    params = {
        "embed": jax.random.normal(ks[0], (VOCAB, EMB), jnp.float32),
        "w_ih": jax.random.uniform(ks[1], (4 * HID, EMB), jnp.float32, -scale, scale),
        "w_hh": jax.random.uniform(ks[2], (4 * HID, HID), jnp.float32, -scale, scale),
        "b_ih": jax.random.uniform(ks[3], (4 * HID,), jnp.float32, -scale, scale),
        "b_hh": jax.random.uniform(ks[4], (4 * HID,), jnp.float32, -scale, scale),
        "w_fc": jax.random.uniform(ks[5], (VOUT, SEQ_LEN * HID), jnp.float32,
                                   -fc_scale, fc_scale),
        "b_fc": jax.random.uniform(ks[6], (VOUT,), jnp.float32,
                                   -fc_scale, fc_scale),
    }

    x_ids = jax.random.randint(ks[7], (BATCH, SEQ_LEN), 0, VOCAB, jnp.int32)

    out = jax.jit(network_forward)(x_ids, params)
    out = jax.block_until_ready(out)

    ref = network_ref(x_ids, params)
    assert out.shape == (BATCH, VOUT), out.shape
    # bf16 MXU operands with f32 accumulation -> tolerance relaxed vs pure-f32 ref.
    assert jnp.allclose(out, ref, atol=5e-2, rtol=5e-2), (
        f"max abs diff {jnp.max(jnp.abs(out - ref))}")

    print("KERNEL_OK")
</pallas_src>

<mosaic_0001>
module attributes {stable_mosaic.version = 11 : i64} {
  func.func @lstm_kernel(%arg0: memref<32x512xf32, #tpu.memory_space<vmem>>, %arg1: memref<128x512xbf16, #tpu.memory_space<vmem>>, %arg2: memref<32x128xbf16, #tpu.memory_space<vmem>>, %arg3: memref<8x128xf32, #tpu.memory_space<vmem>>, %arg4: memref<8x128xf32, #tpu.memory_space<vmem>>) attributes {dimension_semantics = [], scalar_prefetch = 0 : i64, scratch_operands = 2 : i64, tpu.core_type = #tpu.core_type<tc>} {
    %cst = arith.constant 0.000000e+00 : f32
    %0 = vector.broadcast %cst : f32 to vector<8x128xf32>
    %c0 = arith.constant 0 : index
    %c0_0 = arith.constant 0 : index
    %1 = vector.load %arg3[%c0, %c0_0] : memref<8x128xf32, #tpu.memory_space<vmem>>, vector<8x128xf32>
    tpu.vector_store %arg3[%c0, %c0_0], %0 {strides = array<i32>} : memref<8x128xf32, #tpu.memory_space<vmem>>, vector<8x128xf32>,
    %cst_1 = arith.constant 0.000000e+00 : f32
    %2 = vector.broadcast %cst_1 : f32 to vector<8x128xf32>
    %c0_2 = arith.constant 0 : index
    %c0_3 = arith.constant 0 : index
    %3 = vector.load %arg4[%c0_2, %c0_3] : memref<8x128xf32, #tpu.memory_space<vmem>>, vector<8x128xf32>
    tpu.vector_store %arg4[%c0_2, %c0_3], %2 {strides = array<i32>} : memref<8x128xf32, #tpu.memory_space<vmem>>, vector<8x128xf32>,
    %c0_i32 = arith.constant 0 : i32
    %c1_i32 = arith.constant 1 : i32
    %4 = arith.muli %c0_i32, %c1_i32 : i32
    %c0_i32_4 = arith.constant 0 : i32
    %5 = arith.addi %c0_i32_4, %4 : i32
    %c8_i32 = arith.constant 8 : i32
    %6 = arith.muli %5, %c8_i32 : i32
    %7 = arith.index_cast %6 : i32 to index
    %c0_5 = arith.constant 0 : index
    %8 = vector.load %arg0[%7, %c0_5] : memref<32x512xf32, #tpu.memory_space<vmem>>, vector<8x512xf32>
    %c0_6 = arith.constant 0 : index
    %c0_7 = arith.constant 0 : index
    %9 = vector.load %arg3[%c0_6, %c0_7] : memref<8x128xf32, #tpu.memory_space<vmem>>, vector<8x128xf32>
    %10 = arith.truncf %9 : vector<8x128xf32> to vector<8x128xbf16>
    %c0_8 = arith.constant 0 : index
    %c0_9 = arith.constant 0 : index
    %11 = vector.load %arg1[%c0_8, %c0_9] : memref<128x512xbf16, #tpu.memory_space<vmem>>, vector<128x512xbf16>
    %cst_10 = arith.constant dense<0.000000e+00> : vector<8x512xf32>
    %12 = tpu.matmul %10, %11, %cst_10 {dimension_numbers = #tpu.dot_dimension_numbers<[1], [0], [0], [1], [0, 0, 1, 1], [], []>} : vector<8x128xbf16>, vector<128x512xbf16>, vector<8x512xf32> -> vector<8x512xf32>
    %13 = arith.addf %8, %12 : vector<8x512xf32>
    %14 = vector.extract_strided_slice %13 {offsets = [0, 0], sizes = [8, 128], strides = [1, 1]} : vector<8x512xf32> to vector<8x128xf32>
    %15 = arith.negf %14 : vector<8x128xf32>
    %16 = math.exp %15 : vector<8x128xf32>
    %cst_11 = arith.constant 1.000000e+00 : f32
    %17 = vector.broadcast %cst_11 : f32 to vector<8x128xf32>
    %18 = arith.addf %17, %16 : vector<8x128xf32>
    %19 = arith.divf %17, %18 : vector<8x128xf32>
    %20 = vector.extract_strided_slice %13 {offsets = [0, 128], sizes = [8, 128], strides = [1, 1]} : vector<8x512xf32> to vector<8x128xf32>
    %21 = arith.negf %20 : vector<8x128xf32>
    %22 = math.exp %21 : vector<8x128xf32>
    %cst_12 = arith.constant 1.000000e+00 : f32
    %23 = vector.broadcast %cst_12 : f32 to vector<8x128xf32>
    %24 = arith.addf %23, %22 : vector<8x128xf32>
    %25 = arith.divf %23, %24 : vector<8x128xf32>
    %26 = vector.extract_strided_slice %13 {offsets = [0, 256], sizes = [8, 128], strides = [1, 1]} : vector<8x512xf32> to vector<8x128xf32>
    %27 = math.tanh %26 : vector<8x128xf32>
    %28 = vector.extract_strided_slice %13 {offsets = [0, 384], sizes = [8, 128], strides = [1, 1]} : vector<8x512xf32> to vector<8x128xf32>
    %29 = arith.negf %28 : vector<8x128xf32>
    %30 = math.exp %29 : vector<8x128xf32>
    %cst_13 = arith.constant 1.000000e+00 : f32
    %31 = vector.broadcast %cst_13 : f32 to vector<8x128xf32>
    %32 = arith.addf %31, %30 : vector<8x128xf32>
    %33 = arith.divf %31, %32 : vector<8x128xf32>
    %c0_14 = arith.constant 0 : index
    %c0_15 = arith.constant 0 : index
    %34 = vector.load %arg4[%c0_14, %c0_15] : memref<8x128xf32, #tpu.memory_space<vmem>>, vector<8x128xf32>
    %35 = arith.mulf %25, %34 : vector<8x128xf32>
    %36 = arith.mulf %19, %27 : vector<8x128xf32>
    %37 = arith.addf %35, %36 : vector<8x128xf32>
    %38 = math.tanh %37 : vector<8x128xf32>
    %39 = arith.mulf %33, %38 : vector<8x128xf32>
    %c0_16 = arith.constant 0 : index
    %c0_17 = arith.constant 0 : index
    %40 = vector.load %arg4[%c0_16, %c0_17] : memref<8x128xf32, #tpu.memory_space<vmem>>, vector<8x128xf32>
    tpu.vector_store %arg4[%c0_16, %c0_17], %37 {strides = array<i32>} : memref<8x128xf32, #tpu.memory_space<vmem>>, vector<8x128xf32>,
    %c0_18 = arith.constant 0 : index
    %c0_19 = arith.constant 0 : index
    %41 = vector.load %arg3[%c0_18, %c0_19] : memref<8x128xf32, #tpu.memory_space<vmem>>, vector<8x128xf32>
    tpu.vector_store %arg3[%c0_18, %c0_19], %39 {strides = array<i32>} : memref<8x128xf32, #tpu.memory_space<vmem>>, vector<8x128xf32>,
    %42 = arith.truncf %39 : vector<8x128xf32> to vector<8x128xbf16>
    %43 = arith.index_cast %6 : i32 to index
    %c0_20 = arith.constant 0 : index
    %44 = vector.load %arg2[%43, %c0_20] : memref<32x128xbf16, #tpu.memory_space<vmem>>, vector<8x128xbf16>
    tpu.vector_store %arg2[%43, %c0_20], %42 {strides = array<i32>} : memref<32x128xbf16, #tpu.memory_space<vmem>>, vector<8x128xbf16>,
    %c1_i32_21 = arith.constant 1 : i32
    %c1_i32_22 = arith.constant 1 : i32
    %45 = arith.muli %c1_i32_21, %c1_i32_22 : i32
    %c0_i32_23 = arith.constant 0 : i32
    %46 = arith.addi %c0_i32_23, %45 : i32
    %c8_i32_24 = arith.constant 8 : i32
    %47 = arith.muli %46, %c8_i32_24 : i32
    %48 = arith.index_cast %47 : i32 to index
    %c0_25 = arith.constant 0 : index
    %49 = vector.load %arg0[%48, %c0_25] : memref<32x512xf32, #tpu.memory_space<vmem>>, vector<8x512xf32>
    %c0_26 = arith.constant 0 : index
    %c0_27 = arith.constant 0 : index
    %50 = vector.load %arg3[%c0_26, %c0_27] : memref<8x128xf32, #tpu.memory_space<vmem>>, vector<8x128xf32>
    %51 = arith.truncf %50 : vector<8x128xf32> to vector<8x128xbf16>
    %c0_28 = arith.constant 0 : index
    %c0_29 = arith.constant 0 : index
    %52 = vector.load %arg1[%c0_28, %c0_29] : memref<128x512xbf16, #tpu.memory_space<vmem>>, vector<128x512xbf16>
    %cst_30 = arith.constant dense<0.000000e+00> : vector<8x512xf32>
    %53 = tpu.matmul %51, %52, %cst_30 {dimension_numbers = #tpu.dot_dimension_numbers<[1], [0], [0], [1], [0, 0, 1, 1], [], []>} : vector<8x128xbf16>, vector<128x512xbf16>, vector<8x512xf32> -> vector<8x512xf32>
    %54 = arith.addf %49, %53 : vector<8x512xf32>
    %55 = vector.extract_strided_slice %54 {offsets = [0, 0], sizes = [8, 128], strides = [1, 1]} : vector<8x512xf32> to vector<8x128xf32>
    %56 = arith.negf %55 : vector<8x128xf32>
    %57 = math.exp %56 : vector<8x128xf32>
    %cst_31 = arith.constant 1.000000e+00 : f32
    %58 = vector.broadcast %cst_31 : f32 to vector<8x128xf32>
    %59 = arith.addf %58, %57 : vector<8x128xf32>
    %60 = arith.divf %58, %59 : vector<8x128xf32>
    %61 = vector.extract_strided_slice %54 {offsets = [0, 128], sizes = [8, 128], strides = [1, 1]} : vector<8x512xf32> to vector<8x128xf32>
    %62 = arith.negf %61 : vector<8x128xf32>
    %63 = math.exp %62 : vector<8x128xf32>
    %cst_32 = arith.constant 1.000000e+00 : f32
    %64 = vector.broadcast %cst_32 : f32 to vector<8x128xf32>
    %65 = arith.addf %64, %63 : vector<8x128xf32>
    %66 = arith.divf %64, %65 : vector<8x128xf32>
    %67 = vector.extract_strided_slice %54 {offsets = [0, 256], sizes = [8, 128], strides = [1, 1]} : vector<8x512xf32> to vector<8x128xf32>
    %68 = math.tanh %67 : vector<8x128xf32>
    %69 = vector.extract_strided_slice %54 {offsets = [0, 384], sizes = [8, 128], strides = [1, 1]} : vector<8x512xf32> to vector<8x128xf32>
    %70 = arith.negf %69 : vector<8x128xf32>
    %71 = math.exp %70 : vector<8x128xf32>
    %cst_33 = arith.constant 1.000000e+00 : f32
    %72 = vector.broadcast %cst_33 : f32 to vector<8x128xf32>
    %73 = arith.addf %72, %71 : vector<8x128xf32>
    %74 = arith.divf %72, %73 : vector<8x128xf32>
    %c0_34 = arith.constant 0 : index
    %c0_35 = arith.constant 0 : index
    %75 = vector.load %arg4[%c0_34, %c0_35] : memref<8x128xf32, #tpu.memory_space<vmem>>, vector<8x128xf32>
    %76 = arith.mulf %66, %75 : vector<8x128xf32>
    %77 = arith.mulf %60, %68 : vector<8x128xf32>
    %78 = arith.addf %76, %77 : vector<8x128xf32>
    %79 = math.tanh %78 : vector<8x128xf32>
    %80 = arith.mulf %74, %79 : vector<8x128xf32>
    %c0_36 = arith.constant 0 : index
    %c0_37 = arith.constant 0 : index
    %81 = vector.load %arg4[%c0_36, %c0_37] : memref<8x128xf32, #tpu.memory_space<vmem>>, vector<8x128xf32>
    tpu.vector_store %arg4[%c0_36, %c0_37], %78 {strides = array<i32>} : memref<8x128xf32, #tpu.memory_space<vmem>>, vector<8x128xf32>,
    %c0_38 = arith.constant 0 : index
    %c0_39 = arith.constant 0 : index
    %82 = vector.load %arg3[%c0_38, %c0_39] : memref<8x128xf32, #tpu.memory_space<vmem>>, vector<8x128xf32>
    tpu.vector_store %arg3[%c0_38, %c0_39], %80 {strides = array<i32>} : memref<8x128xf32, #tpu.memory_space<vmem>>, vector<8x128xf32>,
    %83 = arith.truncf %80 : vector<8x128xf32> to vector<8x128xbf16>
    %84 = arith.index_cast %47 : i32 to index
    %c0_40 = arith.constant 0 : index
    %85 = vector.load %arg2[%84, %c0_40] : memref<32x128xbf16, #tpu.memory_space<vmem>>, vector<8x128xbf16>
    tpu.vector_store %arg2[%84, %c0_40], %83 {strides = array<i32>} : memref<32x128xbf16, #tpu.memory_space<vmem>>, vector<8x128xbf16>,
    %c2_i32 = arith.constant 2 : i32
    %c1_i32_41 = arith.constant 1 : i32
    %86 = arith.muli %c2_i32, %c1_i32_41 : i32
    %c0_i32_42 = arith.constant 0 : i32
    %87 = arith.addi %c0_i32_42, %86 : i32
    %c8_i32_43 = arith.constant 8 : i32
    %88 = arith.muli %87, %c8_i32_43 : i32
    %89 = arith.index_cast %88 : i32 to index
    %c0_44 = arith.constant 0 : index
    %90 = vector.load %arg0[%89, %c0_44] : memref<32x512xf32, #tpu.memory_space<vmem>>, vector<8x512xf32>
    %c0_45 = arith.constant 0 : index
    %c0_46 = arith.constant 0 : index
    %91 = vector.load %arg3[%c0_45, %c0_46] : memref<8x128xf32, #tpu.memory_space<vmem>>, vector<8x128xf32>
    %92 = arith.truncf %91 : vector<8x128xf32> to vector<8x128xbf16>
    %c0_47 = arith.constant 0 : index
    %c0_48 = arith.constant 0 : index
    %93 = vector.load %arg1[%c0_47, %c0_48] : memref<128x512xbf16, #tpu.memory_space<vmem>>, vector<128x512xbf16>
    %cst_49 = arith.constant dense<0.000000e+00> : vector<8x512xf32>
    %94 = tpu.matmul %92, %93, %cst_49 {dimension_numbers = #tpu.dot_dimension_numbers<[1], [0], [0], [1], [0, 0, 1, 1], [], []>} : vector<8x128xbf16>, vector<128x512xbf16>, vector<8x512xf32> -> vector<8x512xf32>
    %95 = arith.addf %90, %94 : vector<8x512xf32>
    %96 = vector.extract_strided_slice %95 {offsets = [0, 0], sizes = [8, 128], strides = [1, 1]} : vector<8x512xf32> to vector<8x128xf32>
    %97 = arith.negf %96 : vector<8x128xf32>
    %98 = math.exp %97 : vector<8x128xf32>
    %cst_50 = arith.constant 1.000000e+00 : f32
    %99 = vector.broadcast %cst_50 : f32 to vector<8x128xf32>
    %100 = arith.addf %99, %98 : vector<8x128xf32>
    %101 = arith.divf %99, %100 : vector<8x128xf32>
    %102 = vector.extract_strided_slice %95 {offsets = [0, 128], sizes = [8, 128], strides = [1, 1]} : vector<8x512xf32> to vector<8x128xf32>
    %103 = arith.negf %102 : vector<8x128xf32>
    %104 = math.exp %103 : vector<8x128xf32>
    %cst_51 = arith.constant 1.000000e+00 : f32
    %105 = vector.broadcast %cst_51 : f32 to vector<8x128xf32>
    %106 = arith.addf %105, %104 : vector<8x128xf32>
    %107 = arith.divf %105, %106 : vector<8x128xf32>
    %108 = vector.extract_strided_slice %95 {offsets = [0, 256], sizes = [8, 128], strides = [1, 1]} : vector<8x512xf32> to vector<8x128xf32>
    %109 = math.tanh %108 : vector<8x128xf32>
    %110 = vector.extract_strided_slice %95 {offsets = [0, 384], sizes = [8, 128], strides = [1, 1]} : vector<8x512xf32> to vector<8x128xf32>
    %111 = arith.negf %110 : vector<8x128xf32>
    %112 = math.exp %111 : vector<8x128xf32>
    %cst_52 = arith.constant 1.000000e+00 : f32
    %113 = vector.broadcast %cst_52 : f32 to vector<8x128xf32>
    %114 = arith.addf %113, %112 : vector<8x128xf32>
    %115 = arith.divf %113, %114 : vector<8x128xf32>
    %c0_53 = arith.constant 0 : index
    %c0_54 = arith.constant 0 : index
    %116 = vector.load %arg4[%c0_53, %c0_54] : memref<8x128xf32, #tpu.memory_space<vmem>>, vector<8x128xf32>
    %117 = arith.mulf %107, %116 : vector<8x128xf32>
    %118 = arith.mulf %101, %109 : vector<8x128xf32>
    %119 = arith.addf %117, %118 : vector<8x128xf32>
    %120 = math.tanh %119 : vector<8x128xf32>
    %121 = arith.mulf %115, %120 : vector<8x128xf32>
    %c0_55 = arith.constant 0 : index
    %c0_56 = arith.constant 0 : index
    %122 = vector.load %arg4[%c0_55, %c0_56] : memref<8x128xf32, #tpu.memory_space<vmem>>, vector<8x128xf32>
    tpu.vector_store %arg4[%c0_55, %c0_56], %119 {strides = array<i32>} : memref<8x128xf32, #tpu.memory_space<vmem>>, vector<8x128xf32>,
    %c0_57 = arith.constant 0 : index
    %c0_58 = arith.constant 0 : index
    %123 = vector.load %arg3[%c0_57, %c0_58] : memref<8x128xf32, #tpu.memory_space<vmem>>, vector<8x128xf32>
    tpu.vector_store %arg3[%c0_57, %c0_58], %121 {strides = array<i32>} : memref<8x128xf32, #tpu.memory_space<vmem>>, vector<8x128xf32>,
    %124 = arith.truncf %121 : vector<8x128xf32> to vector<8x128xbf16>
    %125 = arith.index_cast %88 : i32 to index
    %c0_59 = arith.constant 0 : index
    %126 = vector.load %arg2[%125, %c0_59] : memref<32x128xbf16, #tpu.memory_space<vmem>>, vector<8x128xbf16>
    tpu.vector_store %arg2[%125, %c0_59], %124 {strides = array<i32>} : memref<32x128xbf16, #tpu.memory_space<vmem>>, vector<8x128xbf16>,
    %c3_i32 = arith.constant 3 : i32
    %c1_i32_60 = arith.constant 1 : i32
    %127 = arith.muli %c3_i32, %c1_i32_60 : i32
    %c0_i32_61 = arith.constant 0 : i32
    %128 = arith.addi %c0_i32_61, %127 : i32
    %c8_i32_62 = arith.constant 8 : i32
    %129 = arith.muli %128, %c8_i32_62 : i32
    %130 = arith.index_cast %129 : i32 to index
    %c0_63 = arith.constant 0 : index
    %131 = vector.load %arg0[%130, %c0_63] : memref<32x512xf32, #tpu.memory_space<vmem>>, vector<8x512xf32>
    %c0_64 = arith.constant 0 : index
    %c0_65 = arith.constant 0 : index
    %132 = vector.load %arg3[%c0_64, %c0_65] : memref<8x128xf32, #tpu.memory_space<vmem>>, vector<8x128xf32>
    %133 = arith.truncf %132 : vector<8x128xf32> to vector<8x128xbf16>
    %c0_66 = arith.constant 0 : index
    %c0_67 = arith.constant 0 : index
    %134 = vector.load %arg1[%c0_66, %c0_67] : memref<128x512xbf16, #tpu.memory_space<vmem>>, vector<128x512xbf16>
    %cst_68 = arith.constant dense<0.000000e+00> : vector<8x512xf32>
    %135 = tpu.matmul %133, %134, %cst_68 {dimension_numbers = #tpu.dot_dimension_numbers<[1], [0], [0], [1], [0, 0, 1, 1], [], []>} : vector<8x128xbf16>, vector<128x512xbf16>, vector<8x512xf32> -> vector<8x512xf32>
    %136 = arith.addf %131, %135 : vector<8x512xf32>
    %137 = vector.extract_strided_slice %136 {offsets = [0, 0], sizes = [8, 128], strides = [1, 1]} : vector<8x512xf32> to vector<8x128xf32>
    %138 = arith.negf %137 : vector<8x128xf32>
    %139 = math.exp %138 : vector<8x128xf32>
    %cst_69 = arith.constant 1.000000e+00 : f32
    %140 = vector.broadcast %cst_69 : f32 to vector<8x128xf32>
    %141 = arith.addf %140, %139 : vector<8x128xf32>
    %142 = arith.divf %140, %141 : vector<8x128xf32>
    %143 = vector.extract_strided_slice %136 {offsets = [0, 128], sizes = [8, 128], strides = [1, 1]} : vector<8x512xf32> to vector<8x128xf32>
    %144 = arith.negf %143 : vector<8x128xf32>
    %145 = math.exp %144 : vector<8x128xf32>
    %cst_70 = arith.constant 1.000000e+00 : f32
    %146 = vector.broadcast %cst_70 : f32 to vector<8x128xf32>
    %147 = arith.addf %146, %145 : vector<8x128xf32>
    %148 = arith.divf %146, %147 : vector<8x128xf32>
    %149 = vector.extract_strided_slice %136 {offsets = [0, 256], sizes = [8, 128], strides = [1, 1]} : vector<8x512xf32> to vector<8x128xf32>
    %150 = math.tanh %149 : vector<8x128xf32>
    %151 = vector.extract_strided_slice %136 {offsets = [0, 384], sizes = [8, 128], strides = [1, 1]} : vector<8x512xf32> to vector<8x128xf32>
    %152 = arith.negf %151 : vector<8x128xf32>
    %153 = math.exp %152 : vector<8x128xf32>
    %cst_71 = arith.constant 1.000000e+00 : f32
    %154 = vector.broadcast %cst_71 : f32 to vector<8x128xf32>
    %155 = arith.addf %154, %153 : vector<8x128xf32>
    %156 = arith.divf %154, %155 : vector<8x128xf32>
    %c0_72 = arith.constant 0 : index
    %c0_73 = arith.constant 0 : index
    %157 = vector.load %arg4[%c0_72, %c0_73] : memref<8x128xf32, #tpu.memory_space<vmem>>, vector<8x128xf32>
    %158 = arith.mulf %148, %157 : vector<8x128xf32>
    %159 = arith.mulf %142, %150 : vector<8x128xf32>
    %160 = arith.addf %158, %159 : vector<8x128xf32>
    %161 = math.tanh %160 : vector<8x128xf32>
    %162 = arith.mulf %156, %161 : vector<8x128xf32>
    %c0_74 = arith.constant 0 : index
    %c0_75 = arith.constant 0 : index
    %163 = vector.load %arg4[%c0_74, %c0_75] : memref<8x128xf32, #tpu.memory_space<vmem>>, vector<8x128xf32>
    tpu.vector_store %arg4[%c0_74, %c0_75], %160 {strides = array<i32>} : memref<8x128xf32, #tpu.memory_space<vmem>>, vector<8x128xf32>,
    %c0_76 = arith.constant 0 : index
    %c0_77 = arith.constant 0 : index
    %164 = vector.load %arg3[%c0_76, %c0_77] : memref<8x128xf32, #tpu.memory_space<vmem>>, vector<8x128xf32>
    tpu.vector_store %arg3[%c0_76, %c0_77], %162 {strides = array<i32>} : memref<8x128xf32, #tpu.memory_space<vmem>>, vector<8x128xf32>,
    %165 = arith.truncf %162 : vector<8x128xf32> to vector<8x128xbf16>
    %166 = arith.index_cast %129 : i32 to index
    %c0_78 = arith.constant 0 : index
    %167 = vector.load %arg2[%166, %c0_78] : memref<32x128xbf16, #tpu.memory_space<vmem>>, vector<8x128xbf16>
    tpu.vector_store %arg2[%166, %c0_78], %165 {strides = array<i32>} : memref<32x128xbf16, #tpu.memory_space<vmem>>, vector<8x128xbf16>,
    %c4_i32 = arith.constant 4 : i32
    return
  }
}

module attributes {stable_mosaic.version = 11 : i64} {
  func.func @fc_kernel(%arg0: i32, %arg1: memref<4x1024xbf16, #tpu.memory_space<vmem>>, %arg2: memref<1024x128xbf16, #tpu.memory_space<vmem>>, %arg3: memref<1x128xf32, #tpu.memory_space<vmem>>, %arg4: memref<4x128xf32, #tpu.memory_space<vmem>>) attributes {dimension_semantics = [#tpu.dimension_semantics<parallel>], iteration_bounds = array<i64: 1>, scalar_prefetch = 0 : i64, scratch_operands = 0 : i64, tpu.core_type = #tpu.core_type<tc>, window_params = [{transform_indices = @transform_0, window_bounds = array<i64: 4, 1024>}, {pipeline_mode = #tpu.pipeline_mode<synchronous>, transform_indices = @transform_1, window_bounds = array<i64: 1024, 128>}, {pipeline_mode = #tpu.pipeline_mode<synchronous>, transform_indices = @transform_2, window_bounds = array<i64: 1, 128>}, {transform_indices = @transform_3, window_bounds = array<i64: 4, 128>}]} {
    %c0 = arith.constant 0 : index
    %c0_0 = arith.constant 0 : index
    %0 = vector.load %arg1[%c0, %c0_0] : memref<4x1024xbf16, #tpu.memory_space<vmem>>, vector<4x1024xbf16>
    %c0_1 = arith.constant 0 : index
    %c0_2 = arith.constant 0 : index
    %1 = vector.load %arg2[%c0_1, %c0_2] : memref<1024x128xbf16, #tpu.memory_space<vmem>>, vector<1024x128xbf16>
    %cst = arith.constant dense<0.000000e+00> : vector<4x128xf32>
    %2 = tpu.matmul %0, %1, %cst {dimension_numbers = #tpu.dot_dimension_numbers<[1], [0], [0], [1], [0, 0, 1, 1], [], []>} : vector<4x1024xbf16>, vector<1024x128xbf16>, vector<4x128xf32> -> vector<4x128xf32>
    %c0_3 = arith.constant 0 : index
    %c0_4 = arith.constant 0 : index
    %3 = vector.load %arg3[%c0_3, %c0_4] : memref<1x128xf32, #tpu.memory_space<vmem>>, vector<1x128xf32>
    %4 = vector.broadcast %3 : vector<1x128xf32> to vector<4x128xf32>
    %5 = arith.addf %2, %4 : vector<4x128xf32>
    %c0_5 = arith.constant 0 : index
    %c0_6 = arith.constant 0 : index
    %6 = vector.load %arg4[%c0_5, %c0_6] : memref<4x128xf32, #tpu.memory_space<vmem>>, vector<4x128xf32>
    tpu.vector_store %arg4[%c0_5, %c0_6], %5 {strides = array<i32>} : memref<4x128xf32, #tpu.memory_space<vmem>>, vector<4x128xf32>,
    return
  }
  func.func @transform_0(%arg0: i32) -> (i32, i32) {
    %c0_i32 = arith.constant 0 : i32
    %c0_i32_0 = arith.constant 0 : i32
    return %arg0, %c0_i32 : i32, i32
  }
  func.func @transform_1(%arg0: i32) -> (i32, i32) {
    %c0_i32 = arith.constant 0 : i32
    %c0_i32_0 = arith.constant 0 : i32
    %c0_i32_1 = arith.constant 0 : i32
    return %c0_i32, %c0_i32_0 : i32, i32
  }
  func.func @transform_2(%arg0: i32) -> (i32, i32) {
    %c0_i32 = arith.constant 0 : i32
    %c0_i32_0 = arith.constant 0 : i32
    %c0_i32_1 = arith.constant 0 : i32
    return %c0_i32, %c0_i32_0 : i32, i32
  }
  func.func @transform_3(%arg0: i32) -> (i32, i32) {
    %c0_i32 = arith.constant 0 : i32
    %c0_i32_0 = arith.constant 0 : i32
    return %arg0, %c0_i32 : i32, i32
  }
}

module attributes {stable_mosaic.version = 11 : i64} {
  func.func @embed_proj_kernel(%arg0: i32, %arg1: memref<32xi32, #tpu.memory_space<smem>>, %arg2: memref<32x16xf32, #tpu.memory_space<any>>, %arg3: memref<16x512xbf16, #tpu.memory_space<vmem>>, %arg4: memref<1x512xf32, #tpu.memory_space<vmem>>, %arg5: memref<16x512xf32, #tpu.memory_space<vmem>>, %arg6: memref<16x16xf32, #tpu.memory_space<vmem>>, %arg7: memref<16x!tpu.dma_semaphore, #tpu.memory_space<semaphore_mem>>) attributes {dimension_semantics = [#tpu.dimension_semantics<parallel>], iteration_bounds = array<i64: 2>, scalar_prefetch = 1 : i64, scratch_operands = 2 : i64, tpu.core_type = #tpu.core_type<tc>, window_params = [{}, {pipeline_mode = #tpu.pipeline_mode<synchronous>, transform_indices = @transform_1, window_bounds = array<i64: 16, 512>}, {pipeline_mode = #tpu.pipeline_mode<synchronous>, transform_indices = @transform_2, window_bounds = array<i64: 1, 512>}, {transform_indices = @transform_3, window_bounds = array<i64: 16, 512>}]} {
    %c16_i32 = arith.constant 16 : i32
    %0 = arith.muli %arg0, %c16_i32 : i32
    %c0_i32 = arith.constant 0 : i32
    %1 = arith.addi %0, %c0_i32 : i32
    %2 = arith.index_cast %1 : i32 to index
    %3 = memref.load %arg1[%2] : memref<32xi32, #tpu.memory_space<smem>>
    %c0_i32_0 = arith.constant 0 : i32
    %c0_i32_1 = arith.constant 0 : i32
    %c0_i32_2 = arith.constant 0 : i32
    %4 = tpu.memref_slice %arg2[%3, %c0_i32_2] : memref<32x16xf32, #tpu.memory_space<any>> -> memref<1x16xf32, #tpu.memory_space<any>>
    %5 = tpu.memref_squeeze %4 : memref<1x16xf32, #tpu.memory_space<any>> -> memref<16xf32, #tpu.memory_space<any>>
    %c0_i32_3 = arith.constant 0 : i32
    %6 = tpu.memref_slice %arg6[%c0_i32_0, %c0_i32_3] : memref<16x16xf32, #tpu.memory_space<vmem>> -> memref<1x16xf32, #tpu.memory_space<vmem>>
    %7 = tpu.memref_squeeze %6 : memref<1x16xf32, #tpu.memory_space<vmem>> -> memref<16xf32, #tpu.memory_space<vmem>>
    %8 = tpu.memref_slice %arg7[%c0_i32_1] : memref<16x!tpu.dma_semaphore, #tpu.memory_space<semaphore_mem>> -> memref<1x!tpu.dma_semaphore, #tpu.memory_space<semaphore_mem>>
    %9 = tpu.memref_squeeze %8 : memref<1x!tpu.dma_semaphore, #tpu.memory_space<semaphore_mem>> -> memref<!tpu.dma_semaphore, #tpu.memory_space<semaphore_mem>>
    tpu.enqueue_dma source(%5 : memref<16xf32, #tpu.memory_space<any>>) target(%7 : memref<16xf32, #tpu.memory_space<vmem>>) target_semaphore(%9 : memref<!tpu.dma_semaphore, #tpu.memory_space<semaphore_mem>>)
    %c1_i32 = arith.constant 1 : i32
    %10 = arith.addi %0, %c1_i32 : i32
    %11 = arith.index_cast %10 : i32 to index
    %12 = memref.load %arg1[%11] : memref<32xi32, #tpu.memory_space<smem>>
    %c1_i32_4 = arith.constant 1 : i32
    %c1_i32_5 = arith.constant 1 : i32
    %c0_i32_6 = arith.constant 0 : i32
    %13 = tpu.memref_slice %arg2[%12, %c0_i32_6] : memref<32x16xf32, #tpu.memory_space<any>> -> memref<1x16xf32, #tpu.memory_space<any>>
    %14 = tpu.memref_squeeze %13 : memref<1x16xf32, #tpu.memory_space<any>> -> memref<16xf32, #tpu.memory_space<any>>
    %c0_i32_7 = arith.constant 0 : i32
    %15 = tpu.memref_slice %arg6[%c1_i32_4, %c0_i32_7] : memref<16x16xf32, #tpu.memory_space<vmem>> -> memref<1x16xf32, #tpu.memory_space<vmem>>
    %16 = tpu.memref_squeeze %15 : memref<1x16xf32, #tpu.memory_space<vmem>> -> memref<16xf32, #tpu.memory_space<vmem>>
    %17 = tpu.memref_slice %arg7[%c1_i32_5] : memref<16x!tpu.dma_semaphore, #tpu.memory_space<semaphore_mem>> -> memref<1x!tpu.dma_semaphore, #tpu.memory_space<semaphore_mem>>
    %18 = tpu.memref_squeeze %17 : memref<1x!tpu.dma_semaphore, #tpu.memory_space<semaphore_mem>> -> memref<!tpu.dma_semaphore, #tpu.memory_space<semaphore_mem>>
    tpu.enqueue_dma source(%14 : memref<16xf32, #tpu.memory_space<any>>) target(%16 : memref<16xf32, #tpu.memory_space<vmem>>) target_semaphore(%18 : memref<!tpu.dma_semaphore, #tpu.memory_space<semaphore_mem>>)
    %c2_i32 = arith.constant 2 : i32
    %19 = arith.addi %0, %c2_i32 : i32
    %20 = arith.index_cast %19 : i32 to index
    %21 = memref.load %arg1[%20] : memref<32xi32, #tpu.memory_space<smem>>
    %c2_i32_8 = arith.constant 2 : i32
    %c2_i32_9 = arith.constant 2 : i32
    %c0_i32_10 = arith.constant 0 : i32
    %22 = tpu.memref_slice %arg2[%21, %c0_i32_10] : memref<32x16xf32, #tpu.memory_space<any>> -> memref<1x16xf32, #tpu.memory_space<any>>
    %23 = tpu.memref_squeeze %22 : memref<1x16xf32, #tpu.memory_space<any>> -> memref<16xf32, #tpu.memory_space<any>>
    %c0_i32_11 = arith.constant 0 : i32
    %24 = tpu.memref_slice %arg6[%c2_i32_8, %c0_i32_11] : memref<16x16xf32, #tpu.memory_space<vmem>> -> memref<1x16xf32, #tpu.memory_space<vmem>>
    %25 = tpu.memref_squeeze %24 : memref<1x16xf32, #tpu.memory_space<vmem>> -> memref<16xf32, #tpu.memory_space<vmem>>
    %26 = tpu.memref_slice %arg7[%c2_i32_9] : memref<16x!tpu.dma_semaphore, #tpu.memory_space<semaphore_mem>> -> memref<1x!tpu.dma_semaphore, #tpu.memory_space<semaphore_mem>>
    %27 = tpu.memref_squeeze %26 : memref<1x!tpu.dma_semaphore, #tpu.memory_space<semaphore_mem>> -> memref<!tpu.dma_semaphore, #tpu.memory_space<semaphore_mem>>
    tpu.enqueue_dma source(%23 : memref<16xf32, #tpu.memory_space<any>>) target(%25 : memref<16xf32, #tpu.memory_space<vmem>>) target_semaphore(%27 : memref<!tpu.dma_semaphore, #tpu.memory_space<semaphore_mem>>)
    %c3_i32 = arith.constant 3 : i32
    %28 = arith.addi %0, %c3_i32 : i32
    %29 = arith.index_cast %28 : i32 to index
    %30 = memref.load %arg1[%29] : memref<32xi32, #tpu.memory_space<smem>>
    %c3_i32_12 = arith.constant 3 : i32
    %c3_i32_13 = arith.constant 3 : i32
    %c0_i32_14 = arith.constant 0 : i32
    %31 = tpu.memref_slice %arg2[%30, %c0_i32_14] : memref<32x16xf32, #tpu.memory_space<any>> -> memref<1x16xf32, #tpu.memory_space<any>>
    %32 = tpu.memref_squeeze %31 : memref<1x16xf32, #tpu.memory_space<any>> -> memref<16xf32, #tpu.memory_space<any>>
    %c0_i32_15 = arith.constant 0 : i32
    %33 = tpu.memref_slice %arg6[%c3_i32_12, %c0_i32_15] : memref<16x16xf32, #tpu.memory_space<vmem>> -> memref<1x16xf32, #tpu.memory_space<vmem>>
    %34 = tpu.memref_squeeze %33 : memref<1x16xf32, #tpu.memory_space<vmem>> -> memref<16xf32, #tpu.memory_space<vmem>>
    %35 = tpu.memref_slice %arg7[%c3_i32_13] : memref<16x!tpu.dma_semaphore, #tpu.memory_space<semaphore_mem>> -> memref<1x!tpu.dma_semaphore, #tpu.memory_space<semaphore_mem>>
    %36 = tpu.memref_squeeze %35 : memref<1x!tpu.dma_semaphore, #tpu.memory_space<semaphore_mem>> -> memref<!tpu.dma_semaphore, #tpu.memory_space<semaphore_mem>>
    tpu.enqueue_dma source(%32 : memref<16xf32, #tpu.memory_space<any>>) target(%34 : memref<16xf32, #tpu.memory_space<vmem>>) target_semaphore(%36 : memref<!tpu.dma_semaphore, #tpu.memory_space<semaphore_mem>>)
    %c4_i32 = arith.constant 4 : i32
    %37 = arith.addi %0, %c4_i32 : i32
    %38 = arith.index_cast %37 : i32 to index
    %39 = memref.load %arg1[%38] : memref<32xi32, #tpu.memory_space<smem>>
    %c4_i32_16 = arith.constant 4 : i32
    %c4_i32_17 = arith.constant 4 : i32
    %c0_i32_18 = arith.constant 0 : i32
    %40 = tpu.memref_slice %arg2[%39, %c0_i32_18] : memref<32x16xf32, #tpu.memory_space<any>> -> memref<1x16xf32, #tpu.memory_space<any>>
    %41 = tpu.memref_squeeze %40 : memref<1x16xf32, #tpu.memory_space<any>> -> memref<16xf32, #tpu.memory_space<any>>
    %c0_i32_19 = arith.constant 0 : i32
    %42 = tpu.memref_slice %arg6[%c4_i32_16, %c0_i32_19] : memref<16x16xf32, #tpu.memory_space<vmem>> -> memref<1x16xf32, #tpu.memory_space<vmem>>
    %43 = tpu.memref_squeeze %42 : memref<1x16xf32, #tpu.memory_space<vmem>> -> memref<16xf32, #tpu.memory_space<vmem>>
    %44 = tpu.memref_slice %arg7[%c4_i32_17] : memref<16x!tpu.dma_semaphore, #tpu.memory_space<semaphore_mem>> -> memref<1x!tpu.dma_semaphore, #tpu.memory_space<semaphore_mem>>
    %45 = tpu.memref_squeeze %44 : memref<1x!tpu.dma_semaphore, #tpu.memory_space<semaphore_mem>> -> memref<!tpu.dma_semaphore, #tpu.memory_space<semaphore_mem>>
    tpu.enqueue_dma source(%41 : memref<16xf32, #tpu.memory_space<any>>) target(%43 : memref<16xf32, #tpu.memory_space<vmem>>) target_semaphore(%45 : memref<!tpu.dma_semaphore, #tpu.memory_space<semaphore_mem>>)
    %c5_i32 = arith.constant 5 : i32
    %46 = arith.addi %0, %c5_i32 : i32
    %47 = arith.index_cast %46 : i32 to index
    %48 = memref.load %arg1[%47] : memref<32xi32, #tpu.memory_space<smem>>
    %c5_i32_20 = arith.constant 5 : i32
    %c5_i32_21 = arith.constant 5 : i32
    %c0_i32_22 = arith.constant 0 : i32
    %49 = tpu.memref_slice %arg2[%48, %c0_i32_22] : memref<32x16xf32, #tpu.memory_space<any>> -> memref<1x16xf32, #tpu.memory_space<any>>
    %50 = tpu.memref_squeeze %49 : memref<1x16xf32, #tpu.memory_space<any>> -> memref<16xf32, #tpu.memory_space<any>>
    %c0_i32_23 = arith.constant 0 : i32
    %51 = tpu.memref_slice %arg6[%c5_i32_20, %c0_i32_23] : memref<16x16xf32, #tpu.memory_space<vmem>> -> memref<1x16xf32, #tpu.memory_space<vmem>>
    %52 = tpu.memref_squeeze %51 : memref<1x16xf32, #tpu.memory_space<vmem>> -> memref<16xf32, #tpu.memory_space<vmem>>
    %53 = tpu.memref_slice %arg7[%c5_i32_21] : memref<16x!tpu.dma_semaphore, #tpu.memory_space<semaphore_mem>> -> memref<1x!tpu.dma_semaphore, #tpu.memory_space<semaphore_mem>>
    %54 = tpu.memref_squeeze %53 : memref<1x!tpu.dma_semaphore, #tpu.memory_space<semaphore_mem>> -> memref<!tpu.dma_semaphore, #tpu.memory_space<semaphore_mem>>
    tpu.enqueue_dma source(%50 : memref<16xf32, #tpu.memory_space<any>>) target(%52 : memref<16xf32, #tpu.memory_space<vmem>>) target_semaphore(%54 : memref<!tpu.dma_semaphore, #tpu.memory_space<semaphore_mem>>)
    %c6_i32 = arith.constant 6 : i32
    %55 = arith.addi %0, %c6_i32 : i32
    %56 = arith.index_cast %55 : i32 to index
    %57 = memref.load %arg1[%56] : memref<32xi32, #tpu.memory_space<smem>>
    %c6_i32_24 = arith.constant 6 : i32
    %c6_i32_25 = arith.constant 6 : i32
    %c0_i32_26 = arith.constant 0 : i32
    %58 = tpu.memref_slice %arg2[%57, %c0_i32_26] : memref<32x16xf32, #tpu.memory_space<any>> -> memref<1x16xf32, #tpu.memory_space<any>>
    %59 = tpu.memref_squeeze %58 : memref<1x16xf32, #tpu.memory_space<any>> -> memref<16xf32, #tpu.memory_space<any>>
    %c0_i32_27 = arith.constant 0 : i32
    %60 = tpu.memref_slice %arg6[%c6_i32_24, %c0_i32_27] : memref<16x16xf32, #tpu.memory_space<vmem>> -> memref<1x16xf32, #tpu.memory_space<vmem>>
    %61 = tpu.memref_squeeze %60 : memref<1x16xf32, #tpu.memory_space<vmem>> -> memref<16xf32, #tpu.memory_space<vmem>>
    %62 = tpu.memref_slice %arg7[%c6_i32_25] : memref<16x!tpu.dma_semaphore, #tpu.memory_space<semaphore_mem>> -> memref<1x!tpu.dma_semaphore, #tpu.memory_space<semaphore_mem>>
    %63 = tpu.memref_squeeze %62 : memref<1x!tpu.dma_semaphore, #tpu.memory_space<semaphore_mem>> -> memref<!tpu.dma_semaphore, #tpu.memory_space<semaphore_mem>>
    tpu.enqueue_dma source(%59 : memref<16xf32, #tpu.memory_space<any>>) target(%61 : memref<16xf32, #tpu.memory_space<vmem>>) target_semaphore(%63 : memref<!tpu.dma_semaphore, #tpu.memory_space<semaphore_mem>>)
    %c7_i32 = arith.constant 7 : i32
    %64 = arith.addi %0, %c7_i32 : i32
    %65 = arith.index_cast %64 : i32 to index
    %66 = memref.load %arg1[%65] : memref<32xi32, #tpu.memory_space<smem>>
    %c7_i32_28 = arith.constant 7 : i32
    %c7_i32_29 = arith.constant 7 : i32
    %c0_i32_30 = arith.constant 0 : i32
    %67 = tpu.memref_slice %arg2[%66, %c0_i32_30] : memref<32x16xf32, #tpu.memory_space<any>> -> memref<1x16xf32, #tpu.memory_space<any>>
    %68 = tpu.memref_squeeze %67 : memref<1x16xf32, #tpu.memory_space<any>> -> memref<16xf32, #tpu.memory_space<any>>
    %c0_i32_31 = arith.constant 0 : i32
    %69 = tpu.memref_slice %arg6[%c7_i32_28, %c0_i32_31] : memref<16x16xf32, #tpu.memory_space<vmem>> -> memref<1x16xf32, #tpu.memory_space<vmem>>
    %70 = tpu.memref_squeeze %69 : memref<1x16xf32, #tpu.memory_space<vmem>> -> memref<16xf32, #tpu.memory_space<vmem>>
    %71 = tpu.memref_slice %arg7[%c7_i32_29] : memref<16x!tpu.dma_semaphore, #tpu.memory_space<semaphore_mem>> -> memref<1x!tpu.dma_semaphore, #tpu.memory_space<semaphore_mem>>
    %72 = tpu.memref_squeeze %71 : memref<1x!tpu.dma_semaphore, #tpu.memory_space<semaphore_mem>> -> memref<!tpu.dma_semaphore, #tpu.memory_space<semaphore_mem>>
    tpu.enqueue_dma source(%68 : memref<16xf32, #tpu.memory_space<any>>) target(%70 : memref<16xf32, #tpu.memory_space<vmem>>) target_semaphore(%72 : memref<!tpu.dma_semaphore, #tpu.memory_space<semaphore_mem>>)
    %c8_i32 = arith.constant 8 : i32
    %73 = arith.addi %0, %c8_i32 : i32
    %74 = arith.index_cast %73 : i32 to index
    %75 = memref.load %arg1[%74] : memref<32xi32, #tpu.memory_space<smem>>
    %c8_i32_32 = arith.constant 8 : i32
    %c8_i32_33 = arith.constant 8 : i32
    %c0_i32_34 = arith.constant 0 : i32
    %76 = tpu.memref_slice %arg2[%75, %c0_i32_34] : memref<32x16xf32, #tpu.memory_space<any>> -> memref<1x16xf32, #tpu.memory_space<any>>
    %77 = tpu.memref_squeeze %76 : memref<1x16xf32, #tpu.memory_space<any>> -> memref<16xf32, #tpu.memory_space<any>>
    %c0_i32_35 = arith.constant 0 : i32
    %78 = tpu.memref_slice %arg6[%c8_i32_32, %c0_i32_35] : memref<16x16xf32, #tpu.memory_space<vmem>> -> memref<1x16xf32, #tpu.memory_space<vmem>>
    %79 = tpu.memref_squeeze %78 : memref<1x16xf32, #tpu.memory_space<vmem>> -> memref<16xf32, #tpu.memory_space<vmem>>
    %80 = tpu.memref_slice %arg7[%c8_i32_33] : memref<16x!tpu.dma_semaphore, #tpu.memory_space<semaphore_mem>> -> memref<1x!tpu.dma_semaphore, #tpu.memory_space<semaphore_mem>>
    %81 = tpu.memref_squeeze %80 : memref<1x!tpu.dma_semaphore, #tpu.memory_space<semaphore_mem>> -> memref<!tpu.dma_semaphore, #tpu.memory_space<semaphore_mem>>
    tpu.enqueue_dma source(%77 : memref<16xf32, #tpu.memory_space<any>>) target(%79 : memref<16xf32, #tpu.memory_space<vmem>>) target_semaphore(%81 : memref<!tpu.dma_semaphore, #tpu.memory_space<semaphore_mem>>)
    %c9_i32 = arith.constant 9 : i32
    %82 = arith.addi %0, %c9_i32 : i32
    %83 = arith.index_cast %82 : i32 to index
    %84 = memref.load %arg1[%83] : memref<32xi32, #tpu.memory_space<smem>>
    %c9_i32_36 = arith.constant 9 : i32
    %c9_i32_37 = arith.constant 9 : i32
    %c0_i32_38 = arith.constant 0 : i32
    %85 = tpu.memref_slice %arg2[%84, %c0_i32_38] : memref<32x16xf32, #tpu.memory_space<any>> -> memref<1x16xf32, #tpu.memory_space<any>>
    %86 = tpu.memref_squeeze %85 : memref<1x16xf32, #tpu.memory_space<any>> -> memref<16xf32, #tpu.memory_space<any>>
    %c0_i32_39 = arith.constant 0 : i32
    %87 = tpu.memref_slice %arg6[%c9_i32_36, %c0_i32_39] : memref<16x16xf32, #tpu.memory_space<vmem>> -> memref<1x16xf32, #tpu.memory_space<vmem>>
    %88 = tpu.memref_squeeze %87 : memref<1x16xf32, #tpu.memory_space<vmem>> -> memref<16xf32, #tpu.memory_space<vmem>>
    %89 = tpu.memref_slice %arg7[%c9_i32_37] : memref<16x!tpu.dma_semaphore, #tpu.memory_space<semaphore_mem>> -> memref<1x!tpu.dma_semaphore, #tpu.memory_space<semaphore_mem>>
    %90 = tpu.memref_squeeze %89 : memref<1x!tpu.dma_semaphore, #tpu.memory_space<semaphore_mem>> -> memref<!tpu.dma_semaphore, #tpu.memory_space<semaphore_mem>>
    tpu.enqueue_dma source(%86 : memref<16xf32, #tpu.memory_space<any>>) target(%88 : memref<16xf32, #tpu.memory_space<vmem>>) target_semaphore(%90 : memref<!tpu.dma_semaphore, #tpu.memory_space<semaphore_mem>>)
    %c10_i32 = arith.constant 10 : i32
    %91 = arith.addi %0, %c10_i32 : i32
    %92 = arith.index_cast %91 : i32 to index
    %93 = memref.load %arg1[%92] : memref<32xi32, #tpu.memory_space<smem>>
    %c10_i32_40 = arith.constant 10 : i32
    %c10_i32_41 = arith.constant 10 : i32
    %c0_i32_42 = arith.constant 0 : i32
    %94 = tpu.memref_slice %arg2[%93, %c0_i32_42] : memref<32x16xf32, #tpu.memory_space<any>> -> memref<1x16xf32, #tpu.memory_space<any>>
    %95 = tpu.memref_squeeze %94 : memref<1x16xf32, #tpu.memory_space<any>> -> memref<16xf32, #tpu.memory_space<any>>
    %c0_i32_43 = arith.constant 0 : i32
    %96 = tpu.memref_slice %arg6[%c10_i32_40, %c0_i32_43] : memref<16x16xf32, #tpu.memory_space<vmem>> -> memref<1x16xf32, #tpu.memory_space<vmem>>
    %97 = tpu.memref_squeeze %96 : memref<1x16xf32, #tpu.memory_space<vmem>> -> memref<16xf32, #tpu.memory_space<vmem>>
    %98 = tpu.memref_slice %arg7[%c10_i32_41] : memref<16x!tpu.dma_semaphore, #tpu.memory_space<semaphore_mem>> -> memref<1x!tpu.dma_semaphore, #tpu.memory_space<semaphore_mem>>
    %99 = tpu.memref_squeeze %98 : memref<1x!tpu.dma_semaphore, #tpu.memory_space<semaphore_mem>> -> memref<!tpu.dma_semaphore, #tpu.memory_space<semaphore_mem>>
    tpu.enqueue_dma source(%95 : memref<16xf32, #tpu.memory_space<any>>) target(%97 : memref<16xf32, #tpu.memory_space<vmem>>) target_semaphore(%99 : memref<!tpu.dma_semaphore, #tpu.memory_space<semaphore_mem>>)
    %c11_i32 = arith.constant 11 : i32
    %100 = arith.addi %0, %c11_i32 : i32
    %101 = arith.index_cast %100 : i32 to index
    %102 = memref.load %arg1[%101] : memref<32xi32, #tpu.memory_space<smem>>
    %c11_i32_44 = arith.constant 11 : i32
    %c11_i32_45 = arith.constant 11 : i32
    %c0_i32_46 = arith.constant 0 : i32
    %103 = tpu.memref_slice %arg2[%102, %c0_i32_46] : memref<32x16xf32, #tpu.memory_space<any>> -> memref<1x16xf32, #tpu.memory_space<any>>
    %104 = tpu.memref_squeeze %103 : memref<1x16xf32, #tpu.memory_space<any>> -> memref<16xf32, #tpu.memory_space<any>>
    %c0_i32_47 = arith.constant 0 : i32
    %105 = tpu.memref_slice %arg6[%c11_i32_44, %c0_i32_47] : memref<16x16xf32, #tpu.memory_space<vmem>> -> memref<1x16xf32, #tpu.memory_space<vmem>>
    %106 = tpu.memref_squeeze %105 : memref<1x16xf32, #tpu.memory_space<vmem>> -> memref<16xf32, #tpu.memory_space<vmem>>
    %107 = tpu.memref_slice %arg7[%c11_i32_45] : memref<16x!tpu.dma_semaphore, #tpu.memory_space<semaphore_mem>> -> memref<1x!tpu.dma_semaphore, #tpu.memory_space<semaphore_mem>>
    %108 = tpu.memref_squeeze %107 : memref<1x!tpu.dma_semaphore, #tpu.memory_space<semaphore_mem>> -> memref<!tpu.dma_semaphore, #tpu.memory_space<semaphore_mem>>
    tpu.enqueue_dma source(%104 : memref<16xf32, #tpu.memory_space<any>>) target(%106 : memref<16xf32, #tpu.memory_space<vmem>>) target_semaphore(%108 : memref<!tpu.dma_semaphore, #tpu.memory_space<semaphore_mem>>)
    %c12_i32 = arith.constant 12 : i32
    %109 = arith.addi %0, %c12_i32 : i32
    %110 = arith.index_cast %109 : i32 to index
    %111 = memref.load %arg1[%110] : memref<32xi32, #tpu.memory_space<smem>>
    %c12_i32_48 = arith.constant 12 : i32
    %c12_i32_49 = arith.constant 12 : i32
    %c0_i32_50 = arith.constant 0 : i32
    %112 = tpu.memref_slice %arg2[%111, %c0_i32_50] : memref<32x16xf32, #tpu.memory_space<any>> -> memref<1x16xf32, #tpu.memory_space<any>>
    %113 = tpu.memref_squeeze %112 : memref<1x16xf32, #tpu.memory_space<any>> -> memref<16xf32, #tpu.memory_space<any>>
    %c0_i32_51 = arith.constant 0 : i32
    %114 = tpu.memref_slice %arg6[%c12_i32_48, %c0_i32_51] : memref<16x16xf32, #tpu.memory_space<vmem>> -> memref<1x16xf32, #tpu.memory_space<vmem>>
    %115 = tpu.memref_squeeze %114 : memref<1x16xf32, #tpu.memory_space<vmem>> -> memref<16xf32, #tpu.memory_space<vmem>>
    %116 = tpu.memref_slice %arg7[%c12_i32_49] : memref<16x!tpu.dma_semaphore, #tpu.memory_space<semaphore_mem>> -> memref<1x!tpu.dma_semaphore, #tpu.memory_space<semaphore_mem>>
    %117 = tpu.memref_squeeze %116 : memref<1x!tpu.dma_semaphore, #tpu.memory_space<semaphore_mem>> -> memref<!tpu.dma_semaphore, #tpu.memory_space<semaphore_mem>>
    tpu.enqueue_dma source(%113 : memref<16xf32, #tpu.memory_space<any>>) target(%115 : memref<16xf32, #tpu.memory_space<vmem>>) target_semaphore(%117 : memref<!tpu.dma_semaphore, #tpu.memory_space<semaphore_mem>>)
    %c13_i32 = arith.constant 13 : i32
    %118 = arith.addi %0, %c13_i32 : i32
    %119 = arith.index_cast %118 : i32 to index
    %120 = memref.load %arg1[%119] : memref<32xi32, #tpu.memory_space<smem>>
    %c13_i32_52 = arith.constant 13 : i32
    %c13_i32_53 = arith.constant 13 : i32
    %c0_i32_54 = arith.constant 0 : i32
    %121 = tpu.memref_slice %arg2[%120, %c0_i32_54] : memref<32x16xf32, #tpu.memory_space<any>> -> memref<1x16xf32, #tpu.memory_space<any>>
    %122 = tpu.memref_squeeze %121 : memref<1x16xf32, #tpu.memory_space<any>> -> memref<16xf32, #tpu.memory_space<any>>
    %c0_i32_55 = arith.constant 0 : i32
    %123 = tpu.memref_slice %arg6[%c13_i32_52, %c0_i32_55] : memref<16x16xf32, #tpu.memory_space<vmem>> -> memref<1x16xf32, #tpu.memory_space<vmem>>
    %124 = tpu.memref_squeeze %123 : memref<1x16xf32, #tpu.memory_space<vmem>> -> memref<16xf32, #tpu.memory_space<vmem>>
    %125 = tpu.memref_slice %arg7[%c13_i32_53] : memref<16x!tpu.dma_semaphore, #tpu.memory_space<semaphore_mem>> -> memref<1x!tpu.dma_semaphore, #tpu.memory_space<semaphore_mem>>
    %126 = tpu.memref_squeeze %125 : memref<1x!tpu.dma_semaphore, #tpu.memory_space<semaphore_mem>> -> memref<!tpu.dma_semaphore, #tpu.memory_space<semaphore_mem>>
    tpu.enqueue_dma source(%122 : memref<16xf32, #tpu.memory_space<any>>) target(%124 : memref<16xf32, #tpu.memory_space<vmem>>) target_semaphore(%126 : memref<!tpu.dma_semaphore, #tpu.memory_space<semaphore_mem>>)
    %c14_i32 = arith.constant 14 : i32
    %127 = arith.addi %0, %c14_i32 : i32
    %128 = arith.index_cast %127 : i32 to index
    %129 = memref.load %arg1[%128] : memref<32xi32, #tpu.memory_space<smem>>
    %c14_i32_56 = arith.constant 14 : i32
    %c14_i32_57 = arith.constant 14 : i32
    %c0_i32_58 = arith.constant 0 : i32
    %130 = tpu.memref_slice %arg2[%129, %c0_i32_58] : memref<32x16xf32, #tpu.memory_space<any>> -> memref<1x16xf32, #tpu.memory_space<any>>
    %131 = tpu.memref_squeeze %130 : memref<1x16xf32, #tpu.memory_space<any>> -> memref<16xf32, #tpu.memory_space<any>>
    %c0_i32_59 = arith.constant 0 : i32
    %132 = tpu.memref_slice %arg6[%c14_i32_56, %c0_i32_59] : memref<16x16xf32, #tpu.memory_space<vmem>> -> memref<1x16xf32, #tpu.memory_space<vmem>>
    %133 = tpu.memref_squeeze %132 : memref<1x16xf32, #tpu.memory_space<vmem>> -> memref<16xf32, #tpu.memory_space<vmem>>
    %134 = tpu.memref_slice %arg7[%c14_i32_57] : memref<16x!tpu.dma_semaphore, #tpu.memory_space<semaphore_mem>> -> memref<1x!tpu.dma_semaphore, #tpu.memory_space<semaphore_mem>>
    %135 = tpu.memref_squeeze %134 : memref<1x!tpu.dma_semaphore, #tpu.memory_space<semaphore_mem>> -> memref<!tpu.dma_semaphore, #tpu.memory_space<semaphore_mem>>
    tpu.enqueue_dma source(%131 : memref<16xf32, #tpu.memory_space<any>>) target(%133 : memref<16xf32, #tpu.memory_space<vmem>>) target_semaphore(%135 : memref<!tpu.dma_semaphore, #tpu.memory_space<semaphore_mem>>)
    %c15_i32 = arith.constant 15 : i32
    %136 = arith.addi %0, %c15_i32 : i32
    %137 = arith.index_cast %136 : i32 to index
    %138 = memref.load %arg1[%137] : memref<32xi32, #tpu.memory_space<smem>>
    %c15_i32_60 = arith.constant 15 : i32
    %c15_i32_61 = arith.constant 15 : i32
    %c0_i32_62 = arith.constant 0 : i32
    %139 = tpu.memref_slice %arg2[%138, %c0_i32_62] : memref<32x16xf32, #tpu.memory_space<any>> -> memref<1x16xf32, #tpu.memory_space<any>>
    %140 = tpu.memref_squeeze %139 : memref<1x16xf32, #tpu.memory_space<any>> -> memref<16xf32, #tpu.memory_space<any>>
    %c0_i32_63 = arith.constant 0 : i32
    %141 = tpu.memref_slice %arg6[%c15_i32_60, %c0_i32_63] : memref<16x16xf32, #tpu.memory_space<vmem>> -> memref<1x16xf32, #tpu.memory_space<vmem>>
    %142 = tpu.memref_squeeze %141 : memref<1x16xf32, #tpu.memory_space<vmem>> -> memref<16xf32, #tpu.memory_space<vmem>>
    %143 = tpu.memref_slice %arg7[%c15_i32_61] : memref<16x!tpu.dma_semaphore, #tpu.memory_space<semaphore_mem>> -> memref<1x!tpu.dma_semaphore, #tpu.memory_space<semaphore_mem>>
    %144 = tpu.memref_squeeze %143 : memref<1x!tpu.dma_semaphore, #tpu.memory_space<semaphore_mem>> -> memref<!tpu.dma_semaphore, #tpu.memory_space<semaphore_mem>>
    tpu.enqueue_dma source(%140 : memref<16xf32, #tpu.memory_space<any>>) target(%142 : memref<16xf32, #tpu.memory_space<vmem>>) target_semaphore(%144 : memref<!tpu.dma_semaphore, #tpu.memory_space<semaphore_mem>>)
    %c0_i32_64 = arith.constant 0 : i32
    %c0_i32_65 = arith.constant 0 : i32
    %c0_i32_66 = arith.constant 0 : i32
    %c0_i32_67 = arith.constant 0 : i32
    %145 = tpu.memref_slice %arg2[%c0_i32_64, %c0_i32_67] : memref<32x16xf32, #tpu.memory_space<any>> -> memref<1x16xf32, #tpu.memory_space<any>>
    %146 = tpu.memref_squeeze %145 : memref<1x16xf32, #tpu.memory_space<any>> -> memref<16xf32, #tpu.memory_space<any>>
    %c0_i32_68 = arith.constant 0 : i32
    %147 = tpu.memref_slice %arg6[%c0_i32_65, %c0_i32_68] : memref<16x16xf32, #tpu.memory_space<vmem>> -> memref<1x16xf32, #tpu.memory_space<vmem>>
    %148 = tpu.memref_squeeze %147 : memref<1x16xf32, #tpu.memory_space<vmem>> -> memref<16xf32, #tpu.memory_space<vmem>>
    %149 = tpu.memref_slice %arg7[%c0_i32_66] : memref<16x!tpu.dma_semaphore, #tpu.memory_space<semaphore_mem>> -> memref<1x!tpu.dma_semaphore, #tpu.memory_space<semaphore_mem>>
    %150 = tpu.memref_squeeze %149 : memref<1x!tpu.dma_semaphore, #tpu.memory_space<semaphore_mem>> -> memref<!tpu.dma_semaphore, #tpu.memory_space<semaphore_mem>>
    tpu.wait_dma2 semaphore(%150 : memref<!tpu.dma_semaphore, #tpu.memory_space<semaphore_mem>>) src(%146 : memref<16xf32, #tpu.memory_space<any>>) dst(%148 : memref<16xf32, #tpu.memory_space<vmem>>)
    %c0_i32_69 = arith.constant 0 : i32
    %c1_i32_70 = arith.constant 1 : i32
    %c1_i32_71 = arith.constant 1 : i32
    %c0_i32_72 = arith.constant 0 : i32
    %151 = tpu.memref_slice %arg2[%c0_i32_69, %c0_i32_72] : memref<32x16xf32, #tpu.memory_space<any>> -> memref<1x16xf32, #tpu.memory_space<any>>
    %152 = tpu.memref_squeeze %151 : memref<1x16xf32, #tpu.memory_space<any>> -> memref<16xf32, #tpu.memory_space<any>>
    %c0_i32_73 = arith.constant 0 : i32
    %153 = tpu.memref_slice %arg6[%c1_i32_70, %c0_i32_73] : memref<16x16xf32, #tpu.memory_space<vmem>> -> memref<1x16xf32, #tpu.memory_space<vmem>>
    %154 = tpu.memref_squeeze %153 : memref<1x16xf32, #tpu.memory_space<vmem>> -> memref<16xf32, #tpu.memory_space<vmem>>
    %155 = tpu.memref_slice %arg7[%c1_i32_71] : memref<16x!tpu.dma_semaphore, #tpu.memory_space<semaphore_mem>> -> memref<1x!tpu.dma_semaphore, #tpu.memory_space<semaphore_mem>>
    %156 = tpu.memref_squeeze %155 : memref<1x!tpu.dma_semaphore, #tpu.memory_space<semaphore_mem>> -> memref<!tpu.dma_semaphore, #tpu.memory_space<semaphore_mem>>
    tpu.wait_dma2 semaphore(%156 : memref<!tpu.dma_semaphore, #tpu.memory_space<semaphore_mem>>) src(%152 : memref<16xf32, #tpu.memory_space<any>>) dst(%154 : memref<16xf32, #tpu.memory_space<vmem>>)
    %c0_i32_74 = arith.constant 0 : i32
    %c2_i32_75 = arith.constant 2 : i32
    %c2_i32_76 = arith.constant 2 : i32
    %c0_i32_77 = arith.constant 0 : i32
    %157 = tpu.memref_slice %arg2[%c0_i32_74, %c0_i32_77] : memref<32x16xf32, #tpu.memory_space<any>> -> memref<1x16xf32, #tpu.memory_space<any>>
    %158 = tpu.memref_squeeze %157 : memref<1x16xf32, #tpu.memory_space<any>> -> memref<16xf32, #tpu.memory_space<any>>
    %c0_i32_78 = arith.constant 0 : i32
    %159 = tpu.memref_slice %arg6[%c2_i32_75, %c0_i32_78] : memref<16x16xf32, #tpu.memory_space<vmem>> -> memref<1x16xf32, #tpu.memory_space<vmem>>
    %160 = tpu.memref_squeeze %159 : memref<1x16xf32, #tpu.memory_space<vmem>> -> memref<16xf32, #tpu.memory_space<vmem>>
    %161 = tpu.memref_slice %arg7[%c2_i32_76] : memref<16x!tpu.dma_semaphore, #tpu.memory_space<semaphore_mem>> -> memref<1x!tpu.dma_semaphore, #tpu.memory_space<semaphore_mem>>
    %162 = tpu.memref_squeeze %161 : memref<1x!tpu.dma_semaphore, #tpu.memory_space<semaphore_mem>> -> memref<!tpu.dma_semaphore, #tpu.memory_space<semaphore_mem>>
    tpu.wait_dma2 semaphore(%162 : memref<!tpu.dma_semaphore, #tpu.memory_space<semaphore_mem>>) src(%158 : memref<16xf32, #tpu.memory_space<any>>) dst(%160 : memref<16xf32, #tpu.memory_space<vmem>>)
    %c0_i32_79 = arith.constant 0 : i32
    %c3_i32_80 = arith.constant 3 : i32
    %c3_i32_81 = arith.constant 3 : i32
    %c0_i32_82 = arith.constant 0 : i32
    %163 = tpu.memref_slice %arg2[%c0_i32_79, %c0_i32_82] : memref<32x16xf32, #tpu.memory_space<any>> -> memref<1x16xf32, #tpu.memory_space<any>>
    %164 = tpu.memref_squeeze %163 : memref<1x16xf32, #tpu.memory_space<any>> -> memref<16xf32, #tpu.memory_space<any>>
    %c0_i32_83 = arith.constant 0 : i32
    %165 = tpu.memref_slice %arg6[%c3_i32_80, %c0_i32_83] : memref<16x16xf32, #tpu.memory_space<vmem>> -> memref<1x16xf32, #tpu.memory_space<vmem>>
    %166 = tpu.memref_squeeze %165 : memref<1x16xf32, #tpu.memory_space<vmem>> -> memref<16xf32, #tpu.memory_space<vmem>>
    %167 = tpu.memref_slice %arg7[%c3_i32_81] : memref<16x!tpu.dma_semaphore, #tpu.memory_space<semaphore_mem>> -> memref<1x!tpu.dma_semaphore, #tpu.memory_space<semaphore_mem>>
    %168 = tpu.memref_squeeze %167 : memref<1x!tpu.dma_semaphore, #tpu.memory_space<semaphore_mem>> -> memref<!tpu.dma_semaphore, #tpu.memory_space<semaphore_mem>>
    tpu.wait_dma2 semaphore(%168 : memref<!tpu.dma_semaphore, #tpu.memory_space<semaphore_mem>>) src(%164 : memref<16xf32, #tpu.memory_space<any>>) dst(%166 : memref<16xf32, #tpu.memory_space<vmem>>)
    %c0_i32_84 = arith.constant 0 : i32
    %c4_i32_85 = arith.constant 4 : i32
    %c4_i32_86 = arith.constant 4 : i32
    %c0_i32_87 = arith.constant 0 : i32
    %169 = tpu.memref_slice %arg2[%c0_i32_84, %c0_i32_87] : memref<32x16xf32, #tpu.memory_space<any>> -> memref<1x16xf32, #tpu.memory_space<any>>
    %170 = tpu.memref_squeeze %169 : memref<1x16xf32, #tpu.memory_space<any>> -> memref<16xf32, #tpu.memory_space<any>>
    %c0_i32_88 = arith.constant 0 : i32
    %171 = tpu.memref_slice %arg6[%c4_i32_85, %c0_i32_88] : memref<16x16xf32, #tpu.memory_space<vmem>> -> memref<1x16xf32, #tpu.memory_space<vmem>>
    %172 = tpu.memref_squeeze %171 : memref<1x16xf32, #tpu.memory_space<vmem>> -> memref<16xf32, #tpu.memory_space<vmem>>
    %173 = tpu.memref_slice %arg7[%c4_i32_86] : memref<16x!tpu.dma_semaphore, #tpu.memory_space<semaphore_mem>> -> memref<1x!tpu.dma_semaphore, #tpu.memory_space<semaphore_mem>>
    %174 = tpu.memref_squeeze %173 : memref<1x!tpu.dma_semaphore, #tpu.memory_space<semaphore_mem>> -> memref<!tpu.dma_semaphore, #tpu.memory_space<semaphore_mem>>
    tpu.wait_dma2 semaphore(%174 : memref<!tpu.dma_semaphore, #tpu.memory_space<semaphore_mem>>) src(%170 : memref<16xf32, #tpu.memory_space<any>>) dst(%172 : memref<16xf32, #tpu.memory_space<vmem>>)
    %c0_i32_89 = arith.constant 0 : i32
    %c5_i32_90 = arith.constant 5 : i32
    %c5_i32_91 = arith.constant 5 : i32
    %c0_i32_92 = arith.constant 0 : i32
    %175 = tpu.memref_slice %arg2[%c0_i32_89, %c0_i32_92] : memref<32x16xf32, #tpu.memory_space<any>> -> memref<1x16xf32, #tpu.memory_space<any>>
    %176 = tpu.memref_squeeze %175 : memref<1x16xf32, #tpu.memory_space<any>> -> memref<16xf32, #tpu.memory_space<any>>
    %c0_i32_93 = arith.constant 0 : i32
    %177 = tpu.memref_slice %arg6[%c5_i32_90, %c0_i32_93] : memref<16x16xf32, #tpu.memory_space<vmem>> -> memref<1x16xf32, #tpu.memory_space<vmem>>
    %178 = tpu.memref_squeeze %177 : memref<1x16xf32, #tpu.memory_space<vmem>> -> memref<16xf32, #tpu.memory_space<vmem>>
    %179 = tpu.memref_slice %arg7[%c5_i32_91] : memref<16x!tpu.dma_semaphore, #tpu.memory_space<semaphore_mem>> -> memref<1x!tpu.dma_semaphore, #tpu.memory_space<semaphore_mem>>
    %180 = tpu.memref_squeeze %179 : memref<1x!tpu.dma_semaphore, #tpu.memory_space<semaphore_mem>> -> memref<!tpu.dma_semaphore, #tpu.memory_space<semaphore_mem>>
    tpu.wait_dma2 semaphore(%180 : memref<!tpu.dma_semaphore, #tpu.memory_space<semaphore_mem>>) src(%176 : memref<16xf32, #tpu.memory_space<any>>) dst(%178 : memref<16xf32, #tpu.memory_space<vmem>>)
    %c0_i32_94 = arith.constant 0 : i32
    %c6_i32_95 = arith.constant 6 : i32
    %c6_i32_96 = arith.constant 6 : i32
    %c0_i32_97 = arith.constant 0 : i32
    %181 = tpu.memref_slice %arg2[%c0_i32_94, %c0_i32_97] : memref<32x16xf32, #tpu.memory_space<any>> -> memref<1x16xf32, #tpu.memory_space<any>>
    %182 = tpu.memref_squeeze %181 : memref<1x16xf32, #tpu.memory_space<any>> -> memref<16xf32, #tpu.memory_space<any>>
    %c0_i32_98 = arith.constant 0 : i32
    %183 = tpu.memref_slice %arg6[%c6_i32_95, %c0_i32_98] : memref<16x16xf32, #tpu.memory_space<vmem>> -> memref<1x16xf32, #tpu.memory_space<vmem>>
    %184 = tpu.memref_squeeze %183 : memref<1x16xf32, #tpu.memory_space<vmem>> -> memref<16xf32, #tpu.memory_space<vmem>>
    %185 = tpu.memref_slice %arg7[%c6_i32_96] : memref<16x!tpu.dma_semaphore, #tpu.memory_space<semaphore_mem>> -> memref<1x!tpu.dma_semaphore, #tpu.memory_space<semaphore_mem>>
    %186 = tpu.memref_squeeze %185 : memref<1x!tpu.dma_semaphore, #tpu.memory_space<semaphore_mem>> -> memref<!tpu.dma_semaphore, #tpu.memory_space<semaphore_mem>>
    tpu.wait_dma2 semaphore(%186 : memref<!tpu.dma_semaphore, #tpu.memory_space<semaphore_mem>>) src(%182 : memref<16xf32, #tpu.memory_space<any>>) dst(%184 : memref<16xf32, #tpu.memory_space<vmem>>)
    %c0_i32_99 = arith.constant 0 : i32
    %c7_i32_100 = arith.constant 7 : i32
    %c7_i32_101 = arith.constant 7 : i32
    %c0_i32_102 = arith.constant 0 : i32
    %187 = tpu.memref_slice %arg2[%c0_i32_99, %c0_i32_102] : memref<32x16xf32, #tpu.memory_space<any>> -> memref<1x16xf32, #tpu.memory_space<any>>
    %188 = tpu.memref_squeeze %187 : memref<1x16xf32, #tpu.memory_space<any>> -> memref<16xf32, #tpu.memory_space<any>>
    %c0_i32_103 = arith.constant 0 : i32
    %189 = tpu.memref_slice %arg6[%c7_i32_100, %c0_i32_103] : memref<16x16xf32, #tpu.memory_space<vmem>> -> memref<1x16xf32, #tpu.memory_space<vmem>>
    %190 = tpu.memref_squeeze %189 : memref<1x16xf32, #tpu.memory_space<vmem>> -> memref<16xf32, #tpu.memory_space<vmem>>
    %191 = tpu.memref_slice %arg7[%c7_i32_101] : memref<16x!tpu.dma_semaphore, #tpu.memory_space<semaphore_mem>> -> memref<1x!tpu.dma_semaphore, #tpu.memory_space<semaphore_mem>>
    %192 = tpu.memref_squeeze %191 : memref<1x!tpu.dma_semaphore, #tpu.memory_space<semaphore_mem>> -> memref<!tpu.dma_semaphore, #tpu.memory_space<semaphore_mem>>
    tpu.wait_dma2 semaphore(%192 : memref<!tpu.dma_semaphore, #tpu.memory_space<semaphore_mem>>) src(%188 : memref<16xf32, #tpu.memory_space<any>>) dst(%190 : memref<16xf32, #tpu.memory_space<vmem>>)
    %c0_i32_104 = arith.constant 0 : i32
    %c8_i32_105 = arith.constant 8 : i32
    %c8_i32_106 = arith.constant 8 : i32
    %c0_i32_107 = arith.constant 0 : i32
    %193 = tpu.memref_slice %arg2[%c0_i32_104, %c0_i32_107] : memref<32x16xf32, #tpu.memory_space<any>> -> memref<1x16xf32, #tpu.memory_space<any>>
    %194 = tpu.memref_squeeze %193 : memref<1x16xf32, #tpu.memory_space<any>> -> memref<16xf32, #tpu.memory_space<any>>
    %c0_i32_108 = arith.constant 0 : i32
    %195 = tpu.memref_slice %arg6[%c8_i32_105, %c0_i32_108] : memref<16x16xf32, #tpu.memory_space<vmem>> -> memref<1x16xf32, #tpu.memory_space<vmem>>
    %196 = tpu.memref_squeeze %195 : memref<1x16xf32, #tpu.memory_space<vmem>> -> memref<16xf32, #tpu.memory_space<vmem>>
    %197 = tpu.memref_slice %arg7[%c8_i32_106] : memref<16x!tpu.dma_semaphore, #tpu.memory_space<semaphore_mem>> -> memref<1x!tpu.dma_semaphore, #tpu.memory_space<semaphore_mem>>
    %198 = tpu.memref_squeeze %197 : memref<1x!tpu.dma_semaphore, #tpu.memory_space<semaphore_mem>> -> memref<!tpu.dma_semaphore, #tpu.memory_space<semaphore_mem>>
    tpu.wait_dma2 semaphore(%198 : memref<!tpu.dma_semaphore, #tpu.memory_space<semaphore_mem>>) src(%194 : memref<16xf32, #tpu.memory_space<any>>) dst(%196 : memref<16xf32, #tpu.memory_space<vmem>>)
    %c0_i32_109 = arith.constant 0 : i32
    %c9_i32_110 = arith.constant 9 : i32
    %c9_i32_111 = arith.constant 9 : i32
    %c0_i32_112 = arith.constant 0 : i32
    %199 = tpu.memref_slice %arg2[%c0_i32_109, %c0_i32_112] : memref<32x16xf32, #tpu.memory_space<any>> -> memref<1x16xf32, #tpu.memory_space<any>>
    %200 = tpu.memref_squeeze %199 : memref<1x16xf32, #tpu.memory_space<any>> -> memref<16xf32, #tpu.memory_space<any>>
    %c0_i32_113 = arith.constant 0 : i32
    %201 = tpu.memref_slice %arg6[%c9_i32_110, %c0_i32_113] : memref<16x16xf32, #tpu.memory_space<vmem>> -> memref<1x16xf32, #tpu.memory_space<vmem>>
    %202 = tpu.memref_squeeze %201 : memref<1x16xf32, #tpu.memory_space<vmem>> -> memref<16xf32, #tpu.memory_space<vmem>>
    %203 = tpu.memref_slice %arg7[%c9_i32_111] : memref<16x!tpu.dma_semaphore, #tpu.memory_space<semaphore_mem>> -> memref<1x!tpu.dma_semaphore, #tpu.memory_space<semaphore_mem>>
    %204 = tpu.memref_squeeze %203 : memref<1x!tpu.dma_semaphore, #tpu.memory_space<semaphore_mem>> -> memref<!tpu.dma_semaphore, #tpu.memory_space<semaphore_mem>>
    tpu.wait_dma2 semaphore(%204 : memref<!tpu.dma_semaphore, #tpu.memory_space<semaphore_mem>>) src(%200 : memref<16xf32, #tpu.memory_space<any>>) dst(%202 : memref<16xf32, #tpu.memory_space<vmem>>)
    %c0_i32_114 = arith.constant 0 : i32
    %c10_i32_115 = arith.constant 10 : i32
    %c10_i32_116 = arith.constant 10 : i32
    %c0_i32_117 = arith.constant 0 : i32
    %205 = tpu.memref_slice %arg2[%c0_i32_114, %c0_i32_117] : memref<32x16xf32, #tpu.memory_space<any>> -> memref<1x16xf32, #tpu.memory_space<any>>
    %206 = tpu.memref_squeeze %205 : memref<1x16xf32, #tpu.memory_space<any>> -> memref<16xf32, #tpu.memory_space<any>>
    %c0_i32_118 = arith.constant 0 : i32
    %207 = tpu.memref_slice %arg6[%c10_i32_115, %c0_i32_118] : memref<16x16xf32, #tpu.memory_space<vmem>> -> memref<1x16xf32, #tpu.memory_space<vmem>>
    %208 = tpu.memref_squeeze %207 : memref<1x16xf32, #tpu.memory_space<vmem>> -> memref<16xf32, #tpu.memory_space<vmem>>
    %209 = tpu.memref_slice %arg7[%c10_i32_116] : memref<16x!tpu.dma_semaphore, #tpu.memory_space<semaphore_mem>> -> memref<1x!tpu.dma_semaphore, #tpu.memory_space<semaphore_mem>>
    %210 = tpu.memref_squeeze %209 : memref<1x!tpu.dma_semaphore, #tpu.memory_space<semaphore_mem>> -> memref<!tpu.dma_semaphore, #tpu.memory_space<semaphore_mem>>
    tpu.wait_dma2 semaphore(%210 : memref<!tpu.dma_semaphore, #tpu.memory_space<semaphore_mem>>) src(%206 : memref<16xf32, #tpu.memory_space<any>>) dst(%208 : memref<16xf32, #tpu.memory_space<vmem>>)
    %c0_i32_119 = arith.constant 0 : i32
    %c11_i32_120 = arith.constant 11 : i32
    %c11_i32_121 = arith.constant 11 : i32
    %c0_i32_122 = arith.constant 0 : i32
    %211 = tpu.memref_slice %arg2[%c0_i32_119, %c0_i32_122] : memref<32x16xf32, #tpu.memory_space<any>> -> memref<1x16xf32, #tpu.memory_space<any>>
    %212 = tpu.memref_squeeze %211 : memref<1x16xf32, #tpu.memory_space<any>> -> memref<16xf32, #tpu.memory_space<any>>
    %c0_i32_123 = arith.constant 0 : i32
    %213 = tpu.memref_slice %arg6[%c11_i32_120, %c0_i32_123] : memref<16x16xf32, #tpu.memory_space<vmem>> -> memref<1x16xf32, #tpu.memory_space<vmem>>
    %214 = tpu.memref_squeeze %213 : memref<1x16xf32, #tpu.memory_space<vmem>> -> memref<16xf32, #tpu.memory_space<vmem>>
    %215 = tpu.memref_slice %arg7[%c11_i32_121] : memref<16x!tpu.dma_semaphore, #tpu.memory_space<semaphore_mem>> -> memref<1x!tpu.dma_semaphore, #tpu.memory_space<semaphore_mem>>
    %216 = tpu.memref_squeeze %215 : memref<1x!tpu.dma_semaphore, #tpu.memory_space<semaphore_mem>> -> memref<!tpu.dma_semaphore, #tpu.memory_space<semaphore_mem>>
    tpu.wait_dma2 semaphore(%216 : memref<!tpu.dma_semaphore, #tpu.memory_space<semaphore_mem>>) src(%212 : memref<16xf32, #tpu.memory_space<any>>) dst(%214 : memref<16xf32, #tpu.memory_space<vmem>>)
    %c0_i32_124 = arith.constant 0 : i32
    %c12_i32_125 = arith.constant 12 : i32
    %c12_i32_126 = arith.constant 12 : i32
    %c0_i32_127 = arith.constant 0 : i32
    %217 = tpu.memref_slice %arg2[%c0_i32_124, %c0_i32_127] : memref<32x16xf32, #tpu.memory_space<any>> -> memref<1x16xf32, #tpu.memory_space<any>>
    %218 = tpu.memref_squeeze %217 : memref<1x16xf32, #tpu.memory_space<any>> -> memref<16xf32, #tpu.memory_space<any>>
    %c0_i32_128 = arith.constant 0 : i32
    %219 = tpu.memref_slice %arg6[%c12_i32_125, %c0_i32_128] : memref<16x16xf32, #tpu.memory_space<vmem>> -> memref<1x16xf32, #tpu.memory_space<vmem>>
    %220 = tpu.memref_squeeze %219 : memref<1x16xf32, #tpu.memory_space<vmem>> -> memref<16xf32, #tpu.memory_space<vmem>>
    %221 = tpu.memref_slice %arg7[%c12_i32_126] : memref<16x!tpu.dma_semaphore, #tpu.memory_space<semaphore_mem>> -> memref<1x!tpu.dma_semaphore, #tpu.memory_space<semaphore_mem>>
    %222 = tpu.memref_squeeze %221 : memref<1x!tpu.dma_semaphore, #tpu.memory_space<semaphore_mem>> -> memref<!tpu.dma_semaphore, #tpu.memory_space<semaphore_mem>>
    tpu.wait_dma2 semaphore(%222 : memref<!tpu.dma_semaphore, #tpu.memory_space<semaphore_mem>>) src(%218 : memref<16xf32, #tpu.memory_space<any>>) dst(%220 : memref<16xf32, #tpu.memory_space<vmem>>)
    %c0_i32_129 = arith.constant 0 : i32
    %c13_i32_130 = arith.constant 13 : i32
    %c13_i32_131 = arith.constant 13 : i32
    %c0_i32_132 = arith.constant 0 : i32
    %223 = tpu.memref_slice %arg2[%c0_i32_129, %c0_i32_132] : memref<32x16xf32, #tpu.memory_space<any>> -> memref<1x16xf32, #tpu.memory_space<any>>
    %224 = tpu.memref_squeeze %223 : memref<1x16xf32, #tpu.memory_space<any>> -> memref<16xf32, #tpu.memory_space<any>>
    %c0_i32_133 = arith.constant 0 : i32
    %225 = tpu.memref_slice %arg6[%c13_i32_130, %c0_i32_133] : memref<16x16xf32, #tpu.memory_space<vmem>> -> memref<1x16xf32, #tpu.memory_space<vmem>>
    %226 = tpu.memref_squeeze %225 : memref<1x16xf32, #tpu.memory_space<vmem>> -> memref<16xf32, #tpu.memory_space<vmem>>
    %227 = tpu.memref_slice %arg7[%c13_i32_131] : memref<16x!tpu.dma_semaphore, #tpu.memory_space<semaphore_mem>> -> memref<1x!tpu.dma_semaphore, #tpu.memory_space<semaphore_mem>>
    %228 = tpu.memref_squeeze %227 : memref<1x!tpu.dma_semaphore, #tpu.memory_space<semaphore_mem>> -> memref<!tpu.dma_semaphore, #tpu.memory_space<semaphore_mem>>
    tpu.wait_dma2 semaphore(%228 : memref<!tpu.dma_semaphore, #tpu.memory_space<semaphore_mem>>) src(%224 : memref<16xf32, #tpu.memory_space<any>>) dst(%226 : memref<16xf32, #tpu.memory_space<vmem>>)
    %c0_i32_134 = arith.constant 0 : i32
    %c14_i32_135 = arith.constant 14 : i32
    %c14_i32_136 = arith.constant 14 : i32
    %c0_i32_137 = arith.constant 0 : i32
    %229 = tpu.memref_slice %arg2[%c0_i32_134, %c0_i32_137] : memref<32x16xf32, #tpu.memory_space<any>> -> memref<1x16xf32, #tpu.memory_space<any>>
    %230 = tpu.memref_squeeze %229 : memref<1x16xf32, #tpu.memory_space<any>> -> memref<16xf32, #tpu.memory_space<any>>
    %c0_i32_138 = arith.constant 0 : i32
    %231 = tpu.memref_slice %arg6[%c14_i32_135, %c0_i32_138] : memref<16x16xf32, #tpu.memory_space<vmem>> -> memref<1x16xf32, #tpu.memory_space<vmem>>
    %232 = tpu.memref_squeeze %231 : memref<1x16xf32, #tpu.memory_space<vmem>> -> memref<16xf32, #tpu.memory_space<vmem>>
    %233 = tpu.memref_slice %arg7[%c14_i32_136] : memref<16x!tpu.dma_semaphore, #tpu.memory_space<semaphore_mem>> -> memref<1x!tpu.dma_semaphore, #tpu.memory_space<semaphore_mem>>
    %234 = tpu.memref_squeeze %233 : memref<1x!tpu.dma_semaphore, #tpu.memory_space<semaphore_mem>> -> memref<!tpu.dma_semaphore, #tpu.memory_space<semaphore_mem>>
    tpu.wait_dma2 semaphore(%234 : memref<!tpu.dma_semaphore, #tpu.memory_space<semaphore_mem>>) src(%230 : memref<16xf32, #tpu.memory_space<any>>) dst(%232 : memref<16xf32, #tpu.memory_space<vmem>>)
    %c0_i32_139 = arith.constant 0 : i32
    %c15_i32_140 = arith.constant 15 : i32
    %c15_i32_141 = arith.constant 15 : i32
    %c0_i32_142 = arith.constant 0 : i32
    %235 = tpu.memref_slice %arg2[%c0_i32_139, %c0_i32_142] : memref<32x16xf32, #tpu.memory_space<any>> -> memref<1x16xf32, #tpu.memory_space<any>>
    %236 = tpu.memref_squeeze %235 : memref<1x16xf32, #tpu.memory_space<any>> -> memref<16xf32, #tpu.memory_space<any>>
    %c0_i32_143 = arith.constant 0 : i32
    %237 = tpu.memref_slice %arg6[%c15_i32_140, %c0_i32_143] : memref<16x16xf32, #tpu.memory_space<vmem>> -> memref<1x16xf32, #tpu.memory_space<vmem>>
    %238 = tpu.memref_squeeze %237 : memref<1x16xf32, #tpu.memory_space<vmem>> -> memref<16xf32, #tpu.memory_space<vmem>>
    %239 = tpu.memref_slice %arg7[%c15_i32_141] : memref<16x!tpu.dma_semaphore, #tpu.memory_space<semaphore_mem>> -> memref<1x!tpu.dma_semaphore, #tpu.memory_space<semaphore_mem>>
    %240 = tpu.memref_squeeze %239 : memref<1x!tpu.dma_semaphore, #tpu.memory_space<semaphore_mem>> -> memref<!tpu.dma_semaphore, #tpu.memory_space<semaphore_mem>>
    tpu.wait_dma2 semaphore(%240 : memref<!tpu.dma_semaphore, #tpu.memory_space<semaphore_mem>>) src(%236 : memref<16xf32, #tpu.memory_space<any>>) dst(%238 : memref<16xf32, #tpu.memory_space<vmem>>)
    %c0 = arith.constant 0 : index
    %c0_144 = arith.constant 0 : index
    %241 = vector.load %arg6[%c0, %c0_144] : memref<16x16xf32, #tpu.memory_space<vmem>>, vector<16x16xf32>
    %242 = arith.truncf %241 : vector<16x16xf32> to vector<16x16xbf16>
    %c0_145 = arith.constant 0 : index
    %c0_146 = arith.constant 0 : index
    %243 = vector.load %arg3[%c0_145, %c0_146] : memref<16x512xbf16, #tpu.memory_space<vmem>>, vector<16x512xbf16>
    %cst = arith.constant dense<0.000000e+00> : vector<16x512xf32>
    %244 = tpu.matmul %242, %243, %cst {dimension_numbers = #tpu.dot_dimension_numbers<[1], [0], [0], [1], [0, 0, 1, 1], [], []>} : vector<16x16xbf16>, vector<16x512xbf16>, vector<16x512xf32> -> vector<16x512xf32>
    %c0_147 = arith.constant 0 : index
    %c0_148 = arith.constant 0 : index
    %245 = vector.load %arg4[%c0_147, %c0_148] : memref<1x512xf32, #tpu.memory_space<vmem>>, vector<1x512xf32>
    %246 = vector.broadcast %245 : vector<1x512xf32> to vector<16x512xf32>
    %247 = arith.addf %244, %246 : vector<16x512xf32>
    %c0_149 = arith.constant 0 : index
    %c0_150 = arith.constant 0 : index
    %248 = vector.load %arg5[%c0_149, %c0_150] : memref<16x512xf32, #tpu.memory_space<vmem>>, vector<16x512xf32>
    tpu.vector_store %arg5[%c0_149, %c0_150], %247 {strides = array<i32>} : memref<16x512xf32, #tpu.memory_space<vmem>>, vector<16x512xf32>,
    return
  }
  func.func @transform_1(%arg0: i32, %arg1: memref<32xi32, #tpu.memory_space<smem>>) -> (i32, i32) {
    %c0_i32 = arith.constant 0 : i32
    %c0_i32_0 = arith.constant 0 : i32
    %c0_i32_1 = arith.constant 0 : i32
    return %c0_i32, %c0_i32_0 : i32, i32
  }
  func.func @transform_2(%arg0: i32, %arg1: memref<32xi32, #tpu.memory_space<smem>>) -> (i32, i32) {
    %c0_i32 = arith.constant 0 : i32
    %c0_i32_0 = arith.constant 0 : i32
    %c0_i32_1 = arith.constant 0 : i32
    return %c0_i32, %c0_i32_0 : i32, i32
  }
  func.func @transform_3(%arg0: i32, %arg1: memref<32xi32, #tpu.memory_space<smem>>) -> (i32, i32) {
    %c0_i32 = arith.constant 0 : i32
    %c0_i32_0 = arith.constant 0 : i32
    return %arg0, %c0_i32 : i32, i32
  }
}

</mosaic_0001>

<llo_original>
// kernel: network_forward.3
$region0: #{network_forward.3}
  #allocation0 [shape = 'u32[]', space=smem, size = 0x4, offset = 0x4, fixed_abs, tag = 'smem constant byte address 0x4 - core index']
  #allocation1 [shape = 'u32[144,128]{1,0:T(1,128)}', space=vmem, size = 0x12000, scoped, tag = 'internal scratch']
  #allocation2 [shape = 'f32[16,16]{1,0:T(8,128)}', space=vmem, size = 0x2000, scoped, tag = 'scratch operand']
  #allocation3 [shape = 's32[16]{0}', space=sflag, size = 0x40, scoped, tag = 'scratch operand']
  #allocation4 [shape = 's32[1]{0}', space=sflag, size = 0x4, scoped, tag = 'scoped memory for network_forward.3']
  #allocation5 [shape = 'u8[512]{0}', space=smem, size = 0x200, scoped, tag = 'prefetched SMEM operand 0']
  #allocation6 [shape = 's32[]', space=sflag, size = 0x4, offset = 0, fixed_abs, tag = 'sflag constant byte address 0x0 - dummy sync flag']
  #allocation7 [shape = 's32[]', space=sflag, size = 0x4, offset = 0, fixed_abs, tag = 'sflag constant byte address 0x0 - dummy sync flag']
  #allocation8 [shape = 's32[]', space=sflag, size = 0x4, offset = 0, fixed_abs, tag = 'sflag constant byte address 0x0 - dummy sync flag']
  #allocation9 [shape = 's32[]', space=sflag, size = 0x4, offset = 0, fixed_abs, tag = 'sflag constant byte address 0x0 - dummy sync flag']
  #allocation10 [shape = 's32[]', space=sflag, size = 0x4, offset = 0, fixed_abs, tag = 'sflag constant byte address 0x0 - dummy sync flag']
  #allocation11 [shape = 's32[]', space=sflag, size = 0x4, offset = 0, fixed_abs, tag = 'sflag constant byte address 0x0 - dummy sync flag']
  #allocation12 [shape = 's32[]', space=sflag, size = 0x4, offset = 0, fixed_abs, tag = 'sflag constant byte address 0x0 - dummy sync flag']
  #allocation13 [shape = 's32[]', space=sflag, size = 0x4, offset = 0, fixed_abs, tag = 'sflag constant byte address 0x0 - dummy sync flag']
  #allocation14 [shape = 's32[]', space=sflag, size = 0x4, offset = 0, fixed_abs, tag = 'sflag constant byte address 0x0 - dummy sync flag']
  #allocation15 [shape = 's32[]', space=sflag, size = 0x4, offset = 0, fixed_abs, tag = 'sflag constant byte address 0x0 - dummy sync flag']
  #allocation16 [shape = 's32[]', space=sflag, size = 0x4, offset = 0, fixed_abs, tag = 'sflag constant byte address 0x0 - dummy sync flag']
  #allocation17 [shape = 's32[]', space=sflag, size = 0x4, offset = 0, fixed_abs, tag = 'sflag constant byte address 0x0 - dummy sync flag']
  #allocation18 [shape = 's32[]', space=sflag, size = 0x4, offset = 0, fixed_abs, tag = 'sflag constant byte address 0x0 - dummy sync flag']
  #allocation19 [shape = 's32[]', space=sflag, size = 0x4, offset = 0, fixed_abs, tag = 'sflag constant byte address 0x0 - dummy sync flag']
  #allocation20 [shape = 's32[]', space=sflag, size = 0x4, offset = 0, fixed_abs, tag = 'sflag constant byte address 0x0 - dummy sync flag']
  #allocation21 [shape = 's32[]', space=sflag, size = 0x4, offset = 0, fixed_abs, tag = 'sflag constant byte address 0x0 - dummy sync flag']
  %s0 = inlined_call_operand.vmem [shape: s32[32], index: 0, kind: input, shape index: {}]
  %s1 = inlined_call_operand.vmem [shape: f32[32,16], index: 1, kind: input, shape index: {}]
  %s2 = inlined_call_operand.vmem [shape: bf16[16,512], index: 2, kind: input, shape index: {}]
  %s3 = inlined_call_operand.vmem [shape: f32[1,512], index: 3, kind: input, shape index: {}]
  %s4 = inlined_call_operand.vmem [shape: f32[32,512], index: 4, kind: output, shape index: {}]
  %s5 = sld [smem:[#allocation0]]
  $region521: #{network_forward.3} parent=0
    _
  %s7 = ssub.s32 1, %s5
  %s8 = scalar_select 0, %s7, %s5
  %s9 = sshll.u32 %s0, 4
  %s10 = int_to_ptr.vmem [resolvable:$true] %s9
  %12 = dma.vmem_to_smem %s10, 16, [#allocation5], [#allocation4]
  %13 = dma.done [#allocation4], 16
  %14 = sfence
  loop: start=0, step=1, limit=4
  $region2: #{network_forward.3} parent=0 // loop_pre_header
    _
  $region3: #{network_forward.3} parent=0 // loop_header
    %s16 = sphi 0, %s20
    %p17 = scmp.ge.s32.totalorder %s16, 4
    %s24 = sphi 0, %s24
    %s26 = sphi 0, %s24
    %s27 = sphi 0, %s26
    %s41 = sphi 0, %s27
    %s45 = sphi 0, %s45
    %s47 = sphi 0, %s45
    %s48 = sphi 0, %s47
    %s62 = sphi 0, %s48
    %s68 = sphi 0, %s70
    %s71 = sphi 0, %s68
    %s72 = sphi 0, %s71
    %s88 = sphi 0, %s72
  $region4: #{network_forward.3} parent=0 // loop_header_branch
    %19 = sbr.rel (%p17) target = $region8
  $region5: #{network_forward.3} parent=0 // loop_body
    %s21 = ssub.s32 %s16, 1
    %s22 = ssub.s32 %s16, 2
    %s23 = sadd.s32 %s16, 1
    %s25 = sadd.s32 %s24, 1
    %p28 = scmp.eq.s32.totalorder %s16, 1
    %p29 = scmp.ne.s32.totalorder %s24, %s26
    %p30 = scmp.eq.s32.totalorder %s16, 0
    %p31 = por %p29, %p30
    %p32 = scmp.ne.s32.totalorder %s24, %s26
    %p33 = scmp.eq.s32.totalorder %s21, 1
    %p34 = por %p32, %p33
    %p35 = scmp.ne.s32.totalorder %s26, %s27
    %p36 = scmp.eq.s32.totalorder %s21, 0
    %p37 = por %p35, %p36
    %p38 = scmp.ne.s32.totalorder %s26, %s27
    %p39 = scmp.eq.s32.totalorder %s22, 1
    %p40 = por %p38, %p39
    %p42 = scmp.ne.s32.totalorder %s27, %s41
    %p43 = scmp.eq.s32.totalorder %s22, 0
    %p44 = por %p42, %p43
    %s46 = sadd.s32 %s45, 1
    %p49 = scmp.eq.s32.totalorder %s16, 1
    %p50 = scmp.ne.s32.totalorder %s45, %s47
    %p51 = scmp.eq.s32.totalorder %s16, 0
    %p52 = por %p50, %p51
    %p53 = scmp.ne.s32.totalorder %s45, %s47
    %p54 = scmp.eq.s32.totalorder %s21, 1
    %p55 = por %p53, %p54
    %p56 = scmp.ne.s32.totalorder %s47, %s48
    %p57 = scmp.eq.s32.totalorder %s21, 0
    %p58 = por %p56, %p57
    %p59 = scmp.ne.s32.totalorder %s47, %s48
    %p60 = scmp.eq.s32.totalorder %s22, 1
    %p61 = por %p59, %p60
    %p63 = scmp.ne.s32.totalorder %s48, %s62
    %p64 = scmp.eq.s32.totalorder %s22, 0
    %p65 = por %p63, %p64
    %s66 = ssub.s32 %s16, %s23
    %p67 = scmp.eq.s32.totalorder %s66, 0
    %s69 = sadd.s32 %s68, 1
    %s70 = scalar_select %p67, %s68, %s69
    %p73 = pneg %p67
    %p74 = scmp.eq.s32.totalorder %s16, 1
    %p75 = por %p73, %p74
    %p76 = scmp.ne.s32.totalorder %s68, %s71
    %p77 = scmp.eq.s32.totalorder %s16, 0
    %p78 = por %p76, %p77
    %p79 = scmp.ne.s32.totalorder %s68, %s71
    %p80 = scmp.eq.s32.totalorder %s21, 1
    %p81 = por %p79, %p80
    %p82 = scmp.ne.s32.totalorder %s71, %s72
    %p83 = scmp.eq.s32.totalorder %s21, 0
    %p84 = por %p82, %p83
    %p85 = scmp.ne.s32.totalorder %s71, %s72
    %p86 = scmp.eq.s32.totalorder %s22, 1
    %p87 = por %p85, %p86
    %p89 = scmp.ne.s32.totalorder %s72, %s88
    %p90 = scmp.eq.s32.totalorder %s22, 0
    %p91 = por %p89, %p90
    %p92 = scmp.le.s32.totalorder 1, %s16
    %p93 = scmp.lt.s32.totalorder %s16, 3
    %p94 = pnand %p92, %p93
    %p95 = pneg %p94
    // Predicated region
    $region9: #{network_forward.3} parent=5 // pred_check
      _
    $region10: #{network_forward.3} parent=5 // pred_check_branch
      %97 = sbr.rel (%p94) target = $region12
    $region11: #{network_forward.3} parent=5 // pred_region
      %s98 = ssub.s32 %s16, 1
      // Predicated region
      $region13: #{network_forward.3} parent=11 // pred_check
        %p99 = pneg %p37
      $region14: #{network_forward.3} parent=11 // pred_check_branch
        %101 = sbr.rel (%p99) target = $region16
      $region15: #{network_forward.3} parent=11 // pred_region
        _
      $region16: #{network_forward.3} parent=11 // pred_fallthru
        _
      // Predicated region
      $region17: #{network_forward.3} parent=11 // pred_check
        %p102 = pneg %p58
      $region18: #{network_forward.3} parent=11 // pred_check_branch
        %104 = sbr.rel (%p102) target = $region20
      $region19: #{network_forward.3} parent=11 // pred_region
        _
      $region20: #{network_forward.3} parent=11 // pred_fallthru
        _
    $region12: #{network_forward.3} parent=5 // pred_fallthru
      _
    %p105 = scmp.lt.s32.totalorder %s16, 2
    // Predicated region
    $region21: #{network_forward.3} parent=5 // pred_check
      %p106 = pneg %p105
    $region22: #{network_forward.3} parent=5 // pred_check_branch
      %108 = sbr.rel (%p106) target = $region24
    $region23: #{network_forward.3} parent=5 // pred_region
      _
    $region24: #{network_forward.3} parent=5 // pred_fallthru
      _
    %p109 = scmp.le.s32.totalorder 1, %s16
    %p110 = scmp.lt.s32.totalorder %s16, 3
    %p111 = pnand %p109, %p110
    %p112 = pneg %p111
    // Predicated region
    $region25: #{network_forward.3} parent=5 // pred_check
      _
    $region26: #{network_forward.3} parent=5 // pred_check_branch
      %114 = sbr.rel (%p111) target = $region28
    $region27: #{network_forward.3} parent=5 // pred_region
      %s115 = ssub.s32 %s16, 1
      %p116 = pneg %p37
      %p117 = pneg %p34
      %p118 = pneg %p58
      %p119 = pneg %p55
      %p120 = pneg %p84
      %p121 = pneg %p81
      %s122 = smul.u32 2, %s21
      %p123 = scmp.lt.s32.totalorder %s122, 3
      %s124 = scalar_select %p123, %s122, 3
      %s125 = smul.addr %s124, 4
      %s126 = smul.addr %s125, 8
      %s127 = scalar_lea.vmem %s4, %s126
      %s128 = smul.u32 2, %s21
      %p129 = scmp.lt.s32.totalorder %s128, 3
      %s130 = scalar_select %p129, %s128, 3
      %s131 = smul.addr %s130, 4
      %s132 = smul.addr %s131, 8
      %s133 = scalar_lea.vmem %s4, %s132
      %s134 = smul.u32 2, %s21
      %s136 = smul.u32 %s21, 16
      %s137 = sld [smem:[#allocation5 + %s136]]
      %s138 = scalar_lea.vmem %s1, %s137
      %p140 = scmp.lt.u32.totalorder 1, 8
      %p141 = pneg %p140
      // Predicated region
      $region29: #{network_forward.3} parent=27 // pred_check
        _
      $region30: #{network_forward.3} parent=27 // pred_check_branch
        %143 = sbr.rel (%p140) target = $region32
      $region31: #{network_forward.3} parent=27 // pred_region
        %s159 = sand.u32 1, 7
        %p160 = scmp.eq.s32.totalorder %s159, 0
        %p161 = pneg %p160
        // Predicated region
        $region44: #{network_forward.3} parent=31 // pred_check
          _
        $region45: #{network_forward.3} parent=31 // pred_check_branch
          %163 = sbr.rel (%p160) target = $region47
        $region46: #{network_forward.3} parent=31 // pred_region
          %s164 = sand.u32 1, 7
          %s165 = ssub.s32 1, %s164
          %s166 = scalar_lea.vmem %s138, %s165
          %s167 = ssub.s32 1, %s164
          %s168 = scalar_lea.vmem [#allocation2], %s167
          %s169 = sshll.u32 1, %s164
          %s170 = ssub.s32 %s169, 1
          loop: start=0, step=1, limit=1
          $region48: #{network_forward.3} parent=46 // loop_pre_header
            _
          $region49: #{network_forward.3} parent=46 // loop_header
            %s172 = sphi 0, %s176
            %p173 = scmp.ge.s32.totalorder %s172, 1
            %s177 = sphi %s166, %s166
            %s178 = sphi %s168, %s168
          $region50: #{network_forward.3} parent=46 // loop_header_branch
            %175 = sbr.rel (%p173) target = $region54
          $region51: #{network_forward.3} parent=46 // loop_body
            %v179 = vld [vmem:[%s177] sm:%s170]
            %180 = vst [vmem:[%s178] sm:%s170] %v179
          $region52: #{network_forward.3} parent=46 // loop_footer
            %s176 = sadd.s32 1, %s172
          $region53: #{network_forward.3} parent=46 // loop_footer_branch
            %171 = sbr.rel target = $region49
          $region54: #{network_forward.3} parent=46 // loop_exit
            _
        $region47: #{network_forward.3} parent=31 // pred_fallthru
          _
      $region32: #{network_forward.3} parent=27 // pred_fallthru
        _
      // Predicated region
      $region33: #{network_forward.3} parent=27 // pred_check
        %p144 = pneg %p140
      $region34: #{network_forward.3} parent=27 // pred_check_branch
        %146 = sbr.rel (%p144) target = $region36
      $region35: #{network_forward.3} parent=27 // pred_region
        %s147 = sshll.u32 1, 1
        %s148 = ssub.s32 %s147, 1
        loop: start=0, step=1, limit=1
        $region37: #{network_forward.3} parent=35 // loop_pre_header
          _
        $region38: #{network_forward.3} parent=35 // loop_header
          %s150 = sphi 0, %s154
          %p151 = scmp.ge.s32.totalorder %s150, 1
          %s155 = sphi %s138, %s138
          %s156 = sphi [#allocation2], [#allocation2]
        $region39: #{network_forward.3} parent=35 // loop_header_branch
          %153 = sbr.rel (%p151) target = $region43
        $region40: #{network_forward.3} parent=35 // loop_body
          %v157 = vld [vmem:[%s155] sm:%s148]
          %158 = vst [vmem:[%s156] sm:%s148] %v157
        $region41: #{network_forward.3} parent=35 // loop_footer
          %s154 = sadd.s32 1, %s150
        $region42: #{network_forward.3} parent=35 // loop_footer_branch
          %149 = sbr.rel target = $region38
        $region43: #{network_forward.3} parent=35 // loop_exit
          _
      $region36: #{network_forward.3} parent=27 // pred_fallthru
        _
      // Predicated region
      $region55: #{network_forward.3} parent=27 // pred_check
        _
      $region56: #{network_forward.3} parent=27 // pred_check_branch
        %183 = sbr.rel (0) target = $region58
      $region57: #{network_forward.3} parent=27 // pred_region
        %184 = vsyncadd [#allocation3], 16
      $region58: #{network_forward.3} parent=27 // pred_fallthru
        _
      %s185 = sadd.s32 %s136, 1
      %s186 = sld [smem:[#allocation5 + %s185]]
      %s187 = scalar_lea.vmem %s1, %s186
      %s188 = scalar_lea.vmem [#allocation2], 1
      %s189 = scalar_lea.sflag [#allocation3], 1
      %p191 = scmp.lt.u32.totalorder 1, 8
      %p192 = pneg %p191
      // Predicated region
      $region59: #{network_forward.3} parent=27 // pred_check
        _
      $region60: #{network_forward.3} parent=27 // pred_check_branch
        %194 = sbr.rel (%p191) target = $region62
      $region61: #{network_forward.3} parent=27 // pred_region
        %s210 = sand.u32 1, 7
        %p211 = scmp.eq.s32.totalorder %s210, 0
        %p212 = pneg %p211
        // Predicated region
        $region74: #{network_forward.3} parent=61 // pred_check
          _
        $region75: #{network_forward.3} parent=61 // pred_check_branch
          %214 = sbr.rel (%p211) target = $region77
        $region76: #{network_forward.3} parent=61 // pred_region
          %s215 = sand.u32 1, 7
          %s216 = ssub.s32 1, %s215
          %s217 = scalar_lea.vmem %s187, %s216
          %s218 = ssub.s32 1, %s215
          %s219 = scalar_lea.vmem %s188, %s218 [#allocation2]
          %s220 = sshll.u32 1, %s215
          %s221 = ssub.s32 %s220, 1
          loop: start=0, step=1, limit=1
          $region78: #{network_forward.3} parent=76 // loop_pre_header
            _
          $region79: #{network_forward.3} parent=76 // loop_header
            %s223 = sphi 0, %s227
            %p224 = scmp.ge.s32.totalorder %s223, 1
            %s228 = sphi %s217, %s217
            %s229 = sphi %s219, %s219
          $region80: #{network_forward.3} parent=76 // loop_header_branch
            %226 = sbr.rel (%p224) target = $region84
          $region81: #{network_forward.3} parent=76 // loop_body
            %v230 = vld [vmem:[%s228] sm:%s221]
            %231 = vst [vmem:[%s229] sm:%s221] %v230
          $region82: #{network_forward.3} parent=76 // loop_footer
            %s227 = sadd.s32 1, %s223
          $region83: #{network_forward.3} parent=76 // loop_footer_branch
            %222 = sbr.rel target = $region79
          $region84: #{network_forward.3} parent=76 // loop_exit
            _
        $region77: #{network_forward.3} parent=61 // pred_fallthru
          _
      $region62: #{network_forward.3} parent=27 // pred_fallthru
        _
      // Predicated region
      $region63: #{network_forward.3} parent=27 // pred_check
        %p195 = pneg %p191
      $region64: #{network_forward.3} parent=27 // pred_check_branch
        %197 = sbr.rel (%p195) target = $region66
      $region65: #{network_forward.3} parent=27 // pred_region
        %s198 = sshll.u32 1, 1
        %s199 = ssub.s32 %s198, 1
        loop: start=0, step=1, limit=1
        $region67: #{network_forward.3} parent=65 // loop_pre_header
          _
        $region68: #{network_forward.3} parent=65 // loop_header
          %s201 = sphi 0, %s205
          %p202 = scmp.ge.s32.totalorder %s201, 1
          %s206 = sphi %s187, %s187
          %s207 = sphi %s188, %s188
        $region69: #{network_forward.3} parent=65 // loop_header_branch
          %204 = sbr.rel (%p202) target = $region73
        $region70: #{network_forward.3} parent=65 // loop_body
          %v208 = vld [vmem:[%s206] sm:%s199]
          %209 = vst [vmem:[%s207] sm:%s199] %v208
        $region71: #{network_forward.3} parent=65 // loop_footer
          %s205 = sadd.s32 1, %s201
        $region72: #{network_forward.3} parent=65 // loop_footer_branch
          %200 = sbr.rel target = $region68
        $region73: #{network_forward.3} parent=65 // loop_exit
          _
      $region66: #{network_forward.3} parent=27 // pred_fallthru
        _
      // Predicated region
      $region85: #{network_forward.3} parent=27 // pred_check
        _
      $region86: #{network_forward.3} parent=27 // pred_check_branch
        %234 = sbr.rel (0) target = $region88
      $region87: #{network_forward.3} parent=27 // pred_region
        %235 = vsyncadd %s189, 16
      $region88: #{network_forward.3} parent=27 // pred_fallthru
        _
      %s236 = sadd.s32 %s136, 2
      %s237 = sld [smem:[#allocation5 + %s236]]
      %s238 = scalar_lea.vmem %s1, %s237
      %s239 = scalar_lea.vmem [#allocation2], 2
      %s240 = scalar_lea.sflag [#allocation3], 2
      %p242 = scmp.lt.u32.totalorder 1, 8
      %p243 = pneg %p242
      // Predicated region
      $region89: #{network_forward.3} parent=27 // pred_check
        _
      $region90: #{network_forward.3} parent=27 // pred_check_branch
        %245 = sbr.rel (%p242) target = $region92
      $region91: #{network_forward.3} parent=27 // pred_region
        %s261 = sand.u32 1, 7
        %p262 = scmp.eq.s32.totalorder %s261, 0
        %p263 = pneg %p262
        // Predicated region
        $region104: #{network_forward.3} parent=91 // pred_check
          _
        $region105: #{network_forward.3} parent=91 // pred_check_branch
          %265 = sbr.rel (%p262) target = $region107
        $region106: #{network_forward.3} parent=91 // pred_region
          %s266 = sand.u32 1, 7
          %s267 = ssub.s32 1, %s266
          %s268 = scalar_lea.vmem %s238, %s267
          %s269 = ssub.s32 1, %s266
          %s270 = scalar_lea.vmem %s239, %s269 [#allocation2]
          %s271 = sshll.u32 1, %s266
          %s272 = ssub.s32 %s271, 1
          loop: start=0, step=1, limit=1
          $region108: #{network_forward.3} parent=106 // loop_pre_header
            _
          $region109: #{network_forward.3} parent=106 // loop_header
            %s274 = sphi 0, %s278
            %p275 = scmp.ge.s32.totalorder %s274, 1
            %s279 = sphi %s268, %s268
            %s280 = sphi %s270, %s270
          $region110: #{network_forward.3} parent=106 // loop_header_branch
            %277 = sbr.rel (%p275) target = $region114
          $region111: #{network_forward.3} parent=106 // loop_body
            %v281 = vld [vmem:[%s279] sm:%s272]
            %282 = vst [vmem:[%s280] sm:%s272] %v281
          $region112: #{network_forward.3} parent=106 // loop_footer
            %s278 = sadd.s32 1, %s274
          $region113: #{network_forward.3} parent=106 // loop_footer_branch
            %273 = sbr.rel target = $region109
          $region114: #{network_forward.3} parent=106 // loop_exit
            _
        $region107: #{network_forward.3} parent=91 // pred_fallthru
          _
      $region92: #{network_forward.3} parent=27 // pred_fallthru
        _
      // Predicated region
      $region93: #{network_forward.3} parent=27 // pred_check
        %p246 = pneg %p242
      $region94: #{network_forward.3} parent=27 // pred_check_branch
        %248 = sbr.rel (%p246) target = $region96
      $region95: #{network_forward.3} parent=27 // pred_region
        %s249 = sshll.u32 1, 1
        %s250 = ssub.s32 %s249, 1
        loop: start=0, step=1, limit=1
        $region97: #{network_forward.3} parent=95 // loop_pre_header
          _
        $region98: #{network_forward.3} parent=95 // loop_header
          %s252 = sphi 0, %s256
          %p253 = scmp.ge.s32.totalorder %s252, 1
          %s257 = sphi %s238, %s238
          %s258 = sphi %s239, %s239
        $region99: #{network_forward.3} parent=95 // loop_header_branch
          %255 = sbr.rel (%p253) target = $region103
        $region100: #{network_forward.3} parent=95 // loop_body
          %v259 = vld [vmem:[%s257] sm:%s250]
          %260 = vst [vmem:[%s258] sm:%s250] %v259
        $region101: #{network_forward.3} parent=95 // loop_footer
          %s256 = sadd.s32 1, %s252
        $region102: #{network_forward.3} parent=95 // loop_footer_branch
          %251 = sbr.rel target = $region98
        $region103: #{network_forward.3} parent=95 // loop_exit
          _
      $region96: #{network_forward.3} parent=27 // pred_fallthru
        _
      // Predicated region
      $region115: #{network_forward.3} parent=27 // pred_check
        _
      $region116: #{network_forward.3} parent=27 // pred_check_branch
        %285 = sbr.rel (0) target = $region118
      $region117: #{network_forward.3} parent=27 // pred_region
        %286 = vsyncadd %s240, 16
      $region118: #{network_forward.3} parent=27 // pred_fallthru
        _
      %s287 = sadd.s32 %s136, 3
      %s288 = sld [smem:[#allocation5 + %s287]]
      %s289 = scalar_lea.vmem %s1, %s288
      %s290 = scalar_lea.vmem [#allocation2], 3
      %s291 = scalar_lea.sflag [#allocation3], 3
      %p293 = scmp.lt.u32.totalorder 1, 8
      %p294 = pneg %p293
      // Predicated region
      $region119: #{network_forward.3} parent=27 // pred_check
        _
      $region120: #{network_forward.3} parent=27 // pred_check_branch
        %296 = sbr.rel (%p293) target = $region122
      $region121: #{network_forward.3} parent=27 // pred_region
        %s312 = sand.u32 1, 7
        %p313 = scmp.eq.s32.totalorder %s312, 0
        %p314 = pneg %p313
        // Predicated region
        $region134: #{network_forward.3} parent=121 // pred_check
          _
        $region135: #{network_forward.3} parent=121 // pred_check_branch
          %316 = sbr.rel (%p313) target = $region137
        $region136: #{network_forward.3} parent=121 // pred_region
          %s317 = sand.u32 1, 7
          %s318 = ssub.s32 1, %s317
          %s319 = scalar_lea.vmem %s289, %s318
          %s320 = ssub.s32 1, %s317
          %s321 = scalar_lea.vmem %s290, %s320 [#allocation2]
          %s322 = sshll.u32 1, %s317
          %s323 = ssub.s32 %s322, 1
          loop: start=0, step=1, limit=1
          $region138: #{network_forward.3} parent=136 // loop_pre_header
            _
          $region139: #{network_forward.3} parent=136 // loop_header
            %s325 = sphi 0, %s329
            %p326 = scmp.ge.s32.totalorder %s325, 1
            %s330 = sphi %s319, %s319
            %s331 = sphi %s321, %s321
          $region140: #{network_forward.3} parent=136 // loop_header_branch
            %328 = sbr.rel (%p326) target = $region144
          $region141: #{network_forward.3} parent=136 // loop_body
            %v332 = vld [vmem:[%s330] sm:%s323]
            %333 = vst [vmem:[%s331] sm:%s323] %v332
          $region142: #{network_forward.3} parent=136 // loop_footer
            %s329 = sadd.s32 1, %s325
          $region143: #{network_forward.3} parent=136 // loop_footer_branch
            %324 = sbr.rel target = $region139
          $region144: #{network_forward.3} parent=136 // loop_exit
            _
        $region137: #{network_forward.3} parent=121 // pred_fallthru
          _
      $region122: #{network_forward.3} parent=27 // pred_fallthru
        _
      // Predicated region
      $region123: #{network_forward.3} parent=27 // pred_check
        %p297 = pneg %p293
      $region124: #{network_forward.3} parent=27 // pred_check_branch
        %299 = sbr.rel (%p297) target = $region126
      $region125: #{network_forward.3} parent=27 // pred_region
        %s300 = sshll.u32 1, 1
        %s301 = ssub.s32 %s300, 1
        loop: start=0, step=1, limit=1
        $region127: #{network_forward.3} parent=125 // loop_pre_header
          _
        $region128: #{network_forward.3} parent=125 // loop_header
          %s303 = sphi 0, %s307
          %p304 = scmp.ge.s32.totalorder %s303, 1
          %s308 = sphi %s289, %s289
          %s309 = sphi %s290, %s290
        $region129: #{network_forward.3} parent=125 // loop_header_branch
          %306 = sbr.rel (%p304) target = $region133
        $region130: #{network_forward.3} parent=125 // loop_body
          %v310 = vld [vmem:[%s308] sm:%s301]
          %311 = vst [vmem:[%s309] sm:%s301] %v310
        $region131: #{network_forward.3} parent=125 // loop_footer
          %s307 = sadd.s32 1, %s303
        $region132: #{network_forward.3} parent=125 // loop_footer_branch
          %302 = sbr.rel target = $region128
        $region133: #{network_forward.3} parent=125 // loop_exit
          _
      $region126: #{network_forward.3} parent=27 // pred_fallthru
        _
      // Predicated region
      $region145: #{network_forward.3} parent=27 // pred_check
        _
      $region146: #{network_forward.3} parent=27 // pred_check_branch
        %336 = sbr.rel (0) target = $region148
      $region147: #{network_forward.3} parent=27 // pred_region
        %337 = vsyncadd %s291, 16
      $region148: #{network_forward.3} parent=27 // pred_fallthru
        _
      %s338 = sadd.s32 %s136, 4
      %s339 = sld [smem:[#allocation5 + %s338]]
      %s340 = scalar_lea.vmem %s1, %s339
      %s341 = scalar_lea.vmem [#allocation2], 4
      %s342 = scalar_lea.sflag [#allocation3], 4
      %p344 = scmp.lt.u32.totalorder 1, 8
      %p345 = pneg %p344
      // Predicated region
      $region149: #{network_forward.3} parent=27 // pred_check
        _
      $region150: #{network_forward.3} parent=27 // pred_check_branch
        %347 = sbr.rel (%p344) target = $region152
      $region151: #{network_forward.3} parent=27 // pred_region
        %s363 = sand.u32 1, 7
        %p364 = scmp.eq.s32.totalorder %s363, 0
        %p365 = pneg %p364
        // Predicated region
        $region164: #{network_forward.3} parent=151 // pred_check
          _
        $region165: #{network_forward.3} parent=151 // pred_check_branch
          %367 = sbr.rel (%p364) target = $region167
        $region166: #{network_forward.3} parent=151 // pred_region
          %s368 = sand.u32 1, 7
          %s369 = ssub.s32 1, %s368
          %s370 = scalar_lea.vmem %s340, %s369
          %s371 = ssub.s32 1, %s368
          %s372 = scalar_lea.vmem %s341, %s371 [#allocation2]
          %s373 = sshll.u32 1, %s368
          %s374 = ssub.s32 %s373, 1
          loop: start=0, step=1, limit=1
          $region168: #{network_forward.3} parent=166 // loop_pre_header
            _
          $region169: #{network_forward.3} parent=166 // loop_header
            %s376 = sphi 0, %s380
            %p377 = scmp.ge.s32.totalorder %s376, 1
            %s381 = sphi %s370, %s370
            %s382 = sphi %s372, %s372
          $region170: #{network_forward.3} parent=166 // loop_header_branch
            %379 = sbr.rel (%p377) target = $region174
          $region171: #{network_forward.3} parent=166 // loop_body
            %v383 = vld [vmem:[%s381] sm:%s374]
            %384 = vst [vmem:[%s382] sm:%s374] %v383
          $region172: #{network_forward.3} parent=166 // loop_footer
            %s380 = sadd.s32 1, %s376
          $region173: #{network_forward.3} parent=166 // loop_footer_branch
            %375 = sbr.rel target = $region169
          $region174: #{network_forward.3} parent=166 // loop_exit
            _
        $region167: #{network_forward.3} parent=151 // pred_fallthru
          _
      $region152: #{network_forward.3} parent=27 // pred_fallthru
        _
      // Predicated region
      $region153: #{network_forward.3} parent=27 // pred_check
        %p348 = pneg %p344
      $region154: #{network_forward.3} parent=27 // pred_check_branch
        %350 = sbr.rel (%p348) target = $region156
      $region155: #{network_forward.3} parent=27 // pred_region
        %s351 = sshll.u32 1, 1
        %s352 = ssub.s32 %s351, 1
        loop: start=0, step=1, limit=1
        $region157: #{network_forward.3} parent=155 // loop_pre_header
          _
        $region158: #{network_forward.3} parent=155 // loop_header
          %s354 = sphi 0, %s358
          %p355 = scmp.ge.s32.totalorder %s354, 1
          %s359 = sphi %s340, %s340
          %s360 = sphi %s341, %s341
        $region159: #{network_forward.3} parent=155 // loop_header_branch
          %357 = sbr.rel (%p355) target = $region163
        $region160: #{network_forward.3} parent=155 // loop_body
          %v361 = vld [vmem:[%s359] sm:%s352]
          %362 = vst [vmem:[%s360] sm:%s352] %v361
        $region161: #{network_forward.3} parent=155 // loop_footer
          %s358 = sadd.s32 1, %s354
        $region162: #{network_forward.3} parent=155 // loop_footer_branch
          %353 = sbr.rel target = $region158
        $region163: #{network_forward.3} parent=155 // loop_exit
          _
      $region156: #{network_forward.3} parent=27 // pred_fallthru
        _
      // Predicated region
      $region175: #{network_forward.3} parent=27 // pred_check
        _
      $region176: #{network_forward.3} parent=27 // pred_check_branch
        %387 = sbr.rel (0) target = $region178
      $region177: #{network_forward.3} parent=27 // pred_region
        %388 = vsyncadd %s342, 16
      $region178: #{network_forward.3} parent=27 // pred_fallthru
        _
      %s389 = sadd.s32 %s136, 5
      %s390 = sld [smem:[#allocation5 + %s389]]
      %s391 = scalar_lea.vmem %s1, %s390
      %s392 = scalar_lea.vmem [#allocation2], 5
      %s393 = scalar_lea.sflag [#allocation3], 5
      %p395 = scmp.lt.u32.totalorder 1, 8
      %p396 = pneg %p395
      // Predicated region
      $region179: #{network_forward.3} parent=27 // pred_check
        _
      $region180: #{network_forward.3} parent=27 // pred_check_branch
        %398 = sbr.rel (%p395) target = $region182
      $region181: #{network_forward.3} parent=27 // pred_region
        %s414 = sand.u32 1, 7
        %p415 = scmp.eq.s32.totalorder %s414, 0
        %p416 = pneg %p415
        // Predicated region
        $region194: #{network_forward.3} parent=181 // pred_check
          _
        $region195: #{network_forward.3} parent=181 // pred_check_branch
          %418 = sbr.rel (%p415) target = $region197
        $region196: #{network_forward.3} parent=181 // pred_region
          %s419 = sand.u32 1, 7
          %s420 = ssub.s32 1, %s419
          %s421 = scalar_lea.vmem %s391, %s420
          %s422 = ssub.s32 1, %s419
          %s423 = scalar_lea.vmem %s392, %s422 [#allocation2]
          %s424 = sshll.u32 1, %s419
          %s425 = ssub.s32 %s424, 1
          loop: start=0, step=1, limit=1
          $region198: #{network_forward.3} parent=196 // loop_pre_header
            _
          $region199: #{network_forward.3} parent=196 // loop_header
            %s427 = sphi 0, %s431
            %p428 = scmp.ge.s32.totalorder %s427, 1
            %s432 = sphi %s421, %s421
            %s433 = sphi %s423, %s423
          $region200: #{network_forward.3} parent=196 // loop_header_branch
            %430 = sbr.rel (%p428) target = $region204
          $region201: #{network_forward.3} parent=196 // loop_body
            %v434 = vld [vmem:[%s432] sm:%s425]
            %435 = vst [vmem:[%s433] sm:%s425] %v434
          $region202: #{network_forward.3} parent=196 // loop_footer
            %s431 = sadd.s32 1, %s427
          $region203: #{network_forward.3} parent=196 // loop_footer_branch
            %426 = sbr.rel target = $region199
          $region204: #{network_forward.3} parent=196 // loop_exit
            _
        $region197: #{network_forward.3} parent=181 // pred_fallthru
          _
      $region182: #{network_forward.3} parent=27 // pred_fallthru
        _
      // Predicated region
      $region183: #{network_forward.3} parent=27 // pred_check
        %p399 = pneg %p395
      $region184: #{network_forward.3} parent=27 // pred_check_branch
        %401 = sbr.rel (%p399) target = $region186
      $region185: #{network_forward.3} parent=27 // pred_region
        %s402 = sshll.u32 1, 1
        %s403 = ssub.s32 %s402, 1
        loop: start=0, step=1, limit=1
        $region187: #{network_forward.3} parent=185 // loop_pre_header
          _
        $region188: #{network_forward.3} parent=185 // loop_header
          %s405 = sphi 0, %s409
          %p406 = scmp.ge.s32.totalorder %s405, 1
          %s410 = sphi %s391, %s391
          %s411 = sphi %s392, %s392
        $region189: #{network_forward.3} parent=185 // loop_header_branch
          %408 = sbr.rel (%p406) target = $region193
        $region190: #{network_forward.3} parent=185 // loop_body
          %v412 = vld [vmem:[%s410] sm:%s403]
          %413 = vst [vmem:[%s411] sm:%s403] %v412
        $region191: #{network_forward.3} parent=185 // loop_footer
          %s409 = sadd.s32 1, %s405
        $region192: #{network_forward.3} parent=185 // loop_footer_branch
          %404 = sbr.rel target = $region188
        $region193: #{network_forward.3} parent=185 // loop_exit
          _
      $region186: #{network_forward.3} parent=27 // pred_fallthru
        _
      // Predicated region
      $region205: #{network_forward.3} parent=27 // pred_check
        _
      $region206: #{network_forward.3} parent=27 // pred_check_branch
        %438 = sbr.rel (0) target = $region208
      $region207: #{network_forward.3} parent=27 // pred_region
        %439 = vsyncadd %s393, 16
      $region208: #{network_forward.3} parent=27 // pred_fallthru
        _
      %s440 = sadd.s32 %s136, 6
      %s441 = sld [smem:[#allocation5 + %s440]]
      %s442 = scalar_lea.vmem %s1, %s441
      %s443 = scalar_lea.vmem [#allocation2], 6
      %s444 = scalar_lea.sflag [#allocation3], 6
      %p446 = scmp.lt.u32.totalorder 1, 8
      %p447 = pneg %p446
      // Predicated region
      $region209: #{network_forward.3} parent=27 // pred_check
        _
      $region210: #{network_forward.3} parent=27 // pred_check_branch
        %449 = sbr.rel (%p446) target = $region212
      $region211: #{network_forward.3} parent=27 // pred_region
        %s465 = sand.u32 1, 7
        %p466 = scmp.eq.s32.totalorder %s465, 0
        %p467 = pneg %p466
        // Predicated region
        $region224: #{network_forward.3} parent=211 // pred_check
          _
        $region225: #{network_forward.3} parent=211 // pred_check_branch
          %469 = sbr.rel (%p466) target = $region227
        $region226: #{network_forward.3} parent=211 // pred_region
          %s470 = sand.u32 1, 7
          %s471 = ssub.s32 1, %s470
          %s472 = scalar_lea.vmem %s442, %s471
          %s473 = ssub.s32 1, %s470
          %s474 = scalar_lea.vmem %s443, %s473 [#allocation2]
          %s475 = sshll.u32 1, %s470
          %s476 = ssub.s32 %s475, 1
          loop: start=0, step=1, limit=1
          $region228: #{network_forward.3} parent=226 // loop_pre_header
            _
          $region229: #{network_forward.3} parent=226 // loop_header
            %s478 = sphi 0, %s482
            %p479 = scmp.ge.s32.totalorder %s478, 1
            %s483 = sphi %s472, %s472
            %s484 = sphi %s474, %s474
          $region230: #{network_forward.3} parent=226 // loop_header_branch
            %481 = sbr.rel (%p479) target = $region234
          $region231: #{network_forward.3} parent=226 // loop_body
            %v485 = vld [vmem:[%s483] sm:%s476]
            %486 = vst [vmem:[%s484] sm:%s476] %v485
          $region232: #{network_forward.3} parent=226 // loop_footer
            %s482 = sadd.s32 1, %s478
          $region233: #{network_forward.3} parent=226 // loop_footer_branch
            %477 = sbr.rel target = $region229
          $region234: #{network_forward.3} parent=226 // loop_exit
            _
        $region227: #{network_forward.3} parent=211 // pred_fallthru
          _
      $region212: #{network_forward.3} parent=27 // pred_fallthru
        _
      // Predicated region
      $region213: #{network_forward.3} parent=27 // pred_check
        %p450 = pneg %p446
      $region214: #{network_forward.3} parent=27 // pred_check_branch
        %452 = sbr.rel (%p450) target = $region216
      $region215: #{network_forward.3} parent=27 // pred_region
        %s453 = sshll.u32 1, 1
        %s454 = ssub.s32 %s453, 1
        loop: start=0, step=1, limit=1
        $region217: #{network_forward.3} parent=215 // loop_pre_header
          _
        $region218: #{network_forward.3} parent=215 // loop_header
          %s456 = sphi 0, %s460
          %p457 = scmp.ge.s32.totalorder %s456, 1
          %s461 = sphi %s442, %s442
          %s462 = sphi %s443, %s443
        $region219: #{network_forward.3} parent=215 // loop_header_branch
          %459 = sbr.rel (%p457) target = $region223
        $region220: #{network_forward.3} parent=215 // loop_body
          %v463 = vld [vmem:[%s461] sm:%s454]
          %464 = vst [vmem:[%s462] sm:%s454] %v463
        $region221: #{network_forward.3} parent=215 // loop_footer
          %s460 = sadd.s32 1, %s456
        $region222: #{network_forward.3} parent=215 // loop_footer_branch
          %455 = sbr.rel target = $region218
        $region223: #{network_forward.3} parent=215 // loop_exit
          _
      $region216: #{network_forward.3} parent=27 // pred_fallthru
        _
      // Predicated region
      $region235: #{network_forward.3} parent=27 // pred_check
        _
      $region236: #{network_forward.3} parent=27 // pred_check_branch
        %489 = sbr.rel (0) target = $region238
      $region237: #{network_forward.3} parent=27 // pred_region
        %490 = vsyncadd %s444, 16
      $region238: #{network_forward.3} parent=27 // pred_fallthru
        _
      %s491 = sadd.s32 %s136, 7
      %s492 = sld [smem:[#allocation5 + %s491]]
      %s493 = scalar_lea.vmem %s1, %s492
      %s494 = scalar_lea.vmem [#allocation2], 7
      %s495 = scalar_lea.sflag [#allocation3], 7
      %p497 = scmp.lt.u32.totalorder 1, 8
      %p498 = pneg %p497
      // Predicated region
      $region239: #{network_forward.3} parent=27 // pred_check
        _
      $region240: #{network_forward.3} parent=27 // pred_check_branch
        %500 = sbr.rel (%p497) target = $region242
      $region241: #{network_forward.3} parent=27 // pred_region
        %s516 = sand.u32 1, 7
        %p517 = scmp.eq.s32.totalorder %s516, 0
        %p518 = pneg %p517
        // Predicated region
        $region254: #{network_forward.3} parent=241 // pred_check
          _
        $region255: #{network_forward.3} parent=241 // pred_check_branch
          %520 = sbr.rel (%p517) target = $region257
        $region256: #{network_forward.3} parent=241 // pred_region
          %s521 = sand.u32 1, 7
          %s522 = ssub.s32 1, %s521
          %s523 = scalar_lea.vmem %s493, %s522
          %s524 = ssub.s32 1, %s521
          %s525 = scalar_lea.vmem %s494, %s524 [#allocation2]
          %s526 = sshll.u32 1, %s521
          %s527 = ssub.s32 %s526, 1
          loop: start=0, step=1, limit=1
          $region258: #{network_forward.3} parent=256 // loop_pre_header
            _
          $region259: #{network_forward.3} parent=256 // loop_header
            %s529 = sphi 0, %s533
            %p530 = scmp.ge.s32.totalorder %s529, 1
            %s534 = sphi %s523, %s523
            %s535 = sphi %s525, %s525
          $region260: #{network_forward.3} parent=256 // loop_header_branch
            %532 = sbr.rel (%p530) target = $region264
          $region261: #{network_forward.3} parent=256 // loop_body
            %v536 = vld [vmem:[%s534] sm:%s527]
            %537 = vst [vmem:[%s535] sm:%s527] %v536
          $region262: #{network_forward.3} parent=256 // loop_footer
            %s533 = sadd.s32 1, %s529
          $region263: #{network_forward.3} parent=256 // loop_footer_branch
            %528 = sbr.rel target = $region259
          $region264: #{network_forward.3} parent=256 // loop_exit
            _
        $region257: #{network_forward.3} parent=241 // pred_fallthru
          _
      $region242: #{network_forward.3} parent=27 // pred_fallthru
        _
      // Predicated region
      $region243: #{network_forward.3} parent=27 // pred_check
        %p501 = pneg %p497
      $region244: #{network_forward.3} parent=27 // pred_check_branch
        %503 = sbr.rel (%p501) target = $region246
      $region245: #{network_forward.3} parent=27 // pred_region
        %s504 = sshll.u32 1, 1
        %s505 = ssub.s32 %s504, 1
        loop: start=0, step=1, limit=1
        $region247: #{network_forward.3} parent=245 // loop_pre_header
          _
        $region248: #{network_forward.3} parent=245 // loop_header
          %s507 = sphi 0, %s511
          %p508 = scmp.ge.s32.totalorder %s507, 1
          %s512 = sphi %s493, %s493
          %s513 = sphi %s494, %s494
        $region249: #{network_forward.3} parent=245 // loop_header_branch
          %510 = sbr.rel (%p508) target = $region253
        $region250: #{network_forward.3} parent=245 // loop_body
          %v514 = vld [vmem:[%s512] sm:%s505]
          %515 = vst [vmem:[%s513] sm:%s505] %v514
        $region251: #{network_forward.3} parent=245 // loop_footer
          %s511 = sadd.s32 1, %s507
        $region252: #{network_forward.3} parent=245 // loop_footer_branch
          %506 = sbr.rel target = $region248
        $region253: #{network_forward.3} parent=245 // loop_exit
          _
      $region246: #{network_forward.3} parent=27 // pred_fallthru
        _
      // Predicated region
      $region265: #{network_forward.3} parent=27 // pred_check
        _
      $region266: #{network_forward.3} parent=27 // pred_check_branch
        %540 = sbr.rel (0) target = $region268
      $region267: #{network_forward.3} parent=27 // pred_region
        %541 = vsyncadd %s495, 16
      $region268: #{network_forward.3} parent=27 // pred_fallthru
        _
      %s542 = sadd.s32 %s136, 8
      %s543 = sld [smem:[#allocation5 + %s542]]
      %s544 = scalar_lea.vmem %s1, %s543
      %s545 = scalar_lea.vmem [#allocation2], 8
      %s546 = scalar_lea.sflag [#allocation3], 8
      %p548 = scmp.lt.u32.totalorder 1, 8
      %p549 = pneg %p548
      // Predicated region
      $region269: #{network_forward.3} parent=27 // pred_check
        _
      $region270: #{network_forward.3} parent=27 // pred_check_branch
        %551 = sbr.rel (%p548) target = $region272
      $region271: #{network_forward.3} parent=27 // pred_region
        %s567 = sand.u32 1, 7
        %p568 = scmp.eq.s32.totalorder %s567, 0
        %p569 = pneg %p568
        // Predicated region
        $region284: #{network_forward.3} parent=271 // pred_check
          _
        $region285: #{network_forward.3} parent=271 // pred_check_branch
          %571 = sbr.rel (%p568) target = $region287
        $region286: #{network_forward.3} parent=271 // pred_region
          %s572 = sand.u32 1, 7
          %s573 = ssub.s32 1, %s572
          %s574 = scalar_lea.vmem %s544, %s573
          %s575 = ssub.s32 1, %s572
          %s576 = scalar_lea.vmem %s545, %s575 [#allocation2]
          %s577 = sshll.u32 1, %s572
          %s578 = ssub.s32 %s577, 1
          loop: start=0, step=1, limit=1
          $region288: #{network_forward.3} parent=286 // loop_pre_header
            _
          $region289: #{network_forward.3} parent=286 // loop_header
            %s580 = sphi 0, %s584
            %p581 = scmp.ge.s32.totalorder %s580, 1
            %s585 = sphi %s574, %s574
            %s586 = sphi %s576, %s576
          $region290: #{network_forward.3} parent=286 // loop_header_branch
            %583 = sbr.rel (%p581) target = $region294
          $region291: #{network_forward.3} parent=286 // loop_body
            %v587 = vld [vmem:[%s585] sm:%s578]
            %588 = vst [vmem:[%s586] sm:%s578] %v587
          $region292: #{network_forward.3} parent=286 // loop_footer
            %s584 = sadd.s32 1, %s580
          $region293: #{network_forward.3} parent=286 // loop_footer_branch
            %579 = sbr.rel target = $region289
          $region294: #{network_forward.3} parent=286 // loop_exit
            _
        $region287: #{network_forward.3} parent=271 // pred_fallthru
          _
      $region272: #{network_forward.3} parent=27 // pred_fallthru
        _
      // Predicated region
      $region273: #{network_forward.3} parent=27 // pred_check
        %p552 = pneg %p548
      $region274: #{network_forward.3} parent=27 // pred_check_branch
        %554 = sbr.rel (%p552) target = $region276
      $region275: #{network_forward.3} parent=27 // pred_region
        %s555 = sshll.u32 1, 1
        %s556 = ssub.s32 %s555, 1
        loop: start=0, step=1, limit=1
        $region277: #{network_forward.3} parent=275 // loop_pre_header
          _
        $region278: #{network_forward.3} parent=275 // loop_header
          %s558 = sphi 0, %s562
          %p559 = scmp.ge.s32.totalorder %s558, 1
          %s563 = sphi %s544, %s544
          %s564 = sphi %s545, %s545
        $region279: #{network_forward.3} parent=275 // loop_header_branch
          %561 = sbr.rel (%p559) target = $region283
        $region280: #{network_forward.3} parent=275 // loop_body
          %v565 = vld [vmem:[%s563] sm:%s556]
          %566 = vst [vmem:[%s564] sm:%s556] %v565
        $region281: #{network_forward.3} parent=275 // loop_footer
          %s562 = sadd.s32 1, %s558
        $region282: #{network_forward.3} parent=275 // loop_footer_branch
          %557 = sbr.rel target = $region278
        $region283: #{network_forward.3} parent=275 // loop_exit
          _
      $region276: #{network_forward.3} parent=27 // pred_fallthru
        _
      // Predicated region
      $region295: #{network_forward.3} parent=27 // pred_check
        _
      $region296: #{network_forward.3} parent=27 // pred_check_branch
        %591 = sbr.rel (0) target = $region298
      $region297: #{network_forward.3} parent=27 // pred_region
        %592 = vsyncadd %s546, 16
      $region298: #{network_forward.3} parent=27 // pred_fallthru
        _
      %s593 = sadd.s32 %s136, 9
      %s594 = sld [smem:[#allocation5 + %s593]]
      %s595 = scalar_lea.vmem %s1, %s594
      %s596 = scalar_lea.vmem [#allocation2], 9
      %s597 = scalar_lea.sflag [#allocation3], 9
      %p599 = scmp.lt.u32.totalorder 1, 8
      %p600 = pneg %p599
      // Predicated region
      $region299: #{network_forward.3} parent=27 // pred_check
        _
      $region300: #{network_forward.3} parent=27 // pred_check_branch
        %602 = sbr.rel (%p599) target = $region302
      $region301: #{network_forward.3} parent=27 // pred_region
        %s618 = sand.u32 1, 7
        %p619 = scmp.eq.s32.totalorder %s618, 0
        %p620 = pneg %p619
        // Predicated region
        $region314: #{network_forward.3} parent=301 // pred_check
          _
        $region315: #{network_forward.3} parent=301 // pred_check_branch
          %622 = sbr.rel (%p619) target = $region317
        $region316: #{network_forward.3} parent=301 // pred_region
          %s623 = sand.u32 1, 7
          %s624 = ssub.s32 1, %s623
          %s625 = scalar_lea.vmem %s595, %s624
          %s626 = ssub.s32 1, %s623
          %s627 = scalar_lea.vmem %s596, %s626 [#allocation2]
          %s628 = sshll.u32 1, %s623
          %s629 = ssub.s32 %s628, 1
          loop: start=0, step=1, limit=1
          $region318: #{network_forward.3} parent=316 // loop_pre_header
            _
          $region319: #{network_forward.3} parent=316 // loop_header
            %s631 = sphi 0, %s635
            %p632 = scmp.ge.s32.totalorder %s631, 1
            %s636 = sphi %s625, %s625
            %s637 = sphi %s627, %s627
          $region320: #{network_forward.3} parent=316 // loop_header_branch
            %634 = sbr.rel (%p632) target = $region324
          $region321: #{network_forward.3} parent=316 // loop_body
            %v638 = vld [vmem:[%s636] sm:%s629]
            %639 = vst [vmem:[%s637] sm:%s629] %v638
          $region322: #{network_forward.3} parent=316 // loop_footer
            %s635 = sadd.s32 1, %s631
          $region323: #{network_forward.3} parent=316 // loop_footer_branch
            %630 = sbr.rel target = $region319
          $region324: #{network_forward.3} parent=316 // loop_exit
            _
        $region317: #{network_forward.3} parent=301 // pred_fallthru
          _
      $region302: #{network_forward.3} parent=27 // pred_fallthru
        _
      // Predicated region
      $region303: #{network_forward.3} parent=27 // pred_check
        %p603 = pneg %p599
      $region304: #{network_forward.3} parent=27 // pred_check_branch
        %605 = sbr.rel (%p603) target = $region306
      $region305: #{network_forward.3} parent=27 // pred_region
        %s606 = sshll.u32 1, 1
        %s607 = ssub.s32 %s606, 1
        loop: start=0, step=1, limit=1
        $region307: #{network_forward.3} parent=305 // loop_pre_header
          _
        $region308: #{network_forward.3} parent=305 // loop_header
          %s609 = sphi 0, %s613
          %p610 = scmp.ge.s32.totalorder %s609, 1
          %s614 = sphi %s595, %s595
          %s615 = sphi %s596, %s596
        $region309: #{network_forward.3} parent=305 // loop_header_branch
          %612 = sbr.rel (%p610) target = $region313
        $region310: #{network_forward.3} parent=305 // loop_body
          %v616 = vld [vmem:[%s614] sm:%s607]
          %617 = vst [vmem:[%s615] sm:%s607] %v616
        $region311: #{network_forward.3} parent=305 // loop_footer
          %s613 = sadd.s32 1, %s609
        $region312: #{network_forward.3} parent=305 // loop_footer_branch
          %608 = sbr.rel target = $region308
        $region313: #{network_forward.3} parent=305 // loop_exit
          _
      $region306: #{network_forward.3} parent=27 // pred_fallthru
        _
      // Predicated region
      $region325: #{network_forward.3} parent=27 // pred_check
        _
      $region326: #{network_forward.3} parent=27 // pred_check_branch
        %642 = sbr.rel (0) target = $region328
      $region327: #{network_forward.3} parent=27 // pred_region
        %643 = vsyncadd %s597, 16
      $region328: #{network_forward.3} parent=27 // pred_fallthru
        _
      %s644 = sadd.s32 %s136, 10
      %s645 = sld [smem:[#allocation5 + %s644]]
      %s646 = scalar_lea.vmem %s1, %s645
      %s647 = scalar_lea.vmem [#allocation2], 10
      %s648 = scalar_lea.sflag [#allocation3], 10
      %p650 = scmp.lt.u32.totalorder 1, 8
      %p651 = pneg %p650
      // Predicated region
      $region329: #{network_forward.3} parent=27 // pred_check
        _
      $region330: #{network_forward.3} parent=27 // pred_check_branch
        %653 = sbr.rel (%p650) target = $region332
      $region331: #{network_forward.3} parent=27 // pred_region
        %s669 = sand.u32 1, 7
        %p670 = scmp.eq.s32.totalorder %s669, 0
        %p671 = pneg %p670
        // Predicated region
        $region344: #{network_forward.3} parent=331 // pred_check
          _
        $region345: #{network_forward.3} parent=331 // pred_check_branch
          %673 = sbr.rel (%p670) target = $region347
        $region346: #{network_forward.3} parent=331 // pred_region
          %s674 = sand.u32 1, 7
          %s675 = ssub.s32 1, %s674
          %s676 = scalar_lea.vmem %s646, %s675
          %s677 = ssub.s32 1, %s674
          %s678 = scalar_lea.vmem %s647, %s677 [#allocation2]
          %s679 = sshll.u32 1, %s674
          %s680 = ssub.s32 %s679, 1
          loop: start=0, step=1, limit=1
          $region348: #{network_forward.3} parent=346 // loop_pre_header
            _
          $region349: #{network_forward.3} parent=346 // loop_header
            %s682 = sphi 0, %s686
            %p683 = scmp.ge.s32.totalorder %s682, 1
            %s687 = sphi %s676, %s676
            %s688 = sphi %s678, %s678
          $region350: #{network_forward.3} parent=346 // loop_header_branch
            %685 = sbr.rel (%p683) target = $region354
          $region351: #{network_forward.3} parent=346 // loop_body
            %v689 = vld [vmem:[%s687] sm:%s680]
            %690 = vst [vmem:[%s688] sm:%s680] %v689
          $region352: #{network_forward.3} parent=346 // loop_footer
            %s686 = sadd.s32 1, %s682
          $region353: #{network_forward.3} parent=346 // loop_footer_branch
            %681 = sbr.rel target = $region349
          $region354: #{network_forward.3} parent=346 // loop_exit
            _
        $region347: #{network_forward.3} parent=331 // pred_fallthru
          _
      $region332: #{network_forward.3} parent=27 // pred_fallthru
        _
      // Predicated region
      $region333: #{network_forward.3} parent=27 // pred_check
        %p654 = pneg %p650
      $region334: #{network_forward.3} parent=27 // pred_check_branch
        %656 = sbr.rel (%p654) target = $region336
      $region335: #{network_forward.3} parent=27 // pred_region
        %s657 = sshll.u32 1, 1
        %s658 = ssub.s32 %s657, 1
        loop: start=0, step=1, limit=1
        $region337: #{network_forward.3} parent=335 // loop_pre_header
          _
        $region338: #{network_forward.3} parent=335 // loop_header
          %s660 = sphi 0, %s664
          %p661 = scmp.ge.s32.totalorder %s660, 1
          %s665 = sphi %s646, %s646
          %s666 = sphi %s647, %s647
        $region339: #{network_forward.3} parent=335 // loop_header_branch
          %663 = sbr.rel (%p661) target = $region343
        $region340: #{network_forward.3} parent=335 // loop_body
          %v667 = vld [vmem:[%s665] sm:%s658]
          %668 = vst [vmem:[%s666] sm:%s658] %v667
        $region341: #{network_forward.3} parent=335 // loop_footer
          %s664 = sadd.s32 1, %s660
        $region342: #{network_forward.3} parent=335 // loop_footer_branch
          %659 = sbr.rel target = $region338
        $region343: #{network_forward.3} parent=335 // loop_exit
          _
      $region336: #{network_forward.3} parent=27 // pred_fallthru
        _
      // Predicated region
      $region355: #{network_forward.3} parent=27 // pred_check
        _
      $region356: #{network_forward.3} parent=27 // pred_check_branch
        %693 = sbr.rel (0) target = $region358
      $region357: #{network_forward.3} parent=27 // pred_region
        %694 = vsyncadd %s648, 16
      $region358: #{network_forward.3} parent=27 // pred_fallthru
        _
      %s695 = sadd.s32 %s136, 11
      %s696 = sld [smem:[#allocation5 + %s695]]
      %s697 = scalar_lea.vmem %s1, %s696
      %s698 = scalar_lea.vmem [#allocation2], 11
      %s699 = scalar_lea.sflag [#allocation3], 11
      %p701 = scmp.lt.u32.totalorder 1, 8
      %p702 = pneg %p701
      // Predicated region
      $region359: #{network_forward.3} parent=27 // pred_check
        _
      $region360: #{network_forward.3} parent=27 // pred_check_branch
        %704 = sbr.rel (%p701) target = $region362
      $region361: #{network_forward.3} parent=27 // pred_region
        %s720 = sand.u32 1, 7
        %p721 = scmp.eq.s32.totalorder %s720, 0
        %p722 = pneg %p721
        // Predicated region
        $region374: #{network_forward.3} parent=361 // pred_check
          _
        $region375: #{network_forward.3} parent=361 // pred_check_branch
          %724 = sbr.rel (%p721) target = $region377
        $region376: #{network_forward.3} parent=361 // pred_region
          %s725 = sand.u32 1, 7
          %s726 = ssub.s32 1, %s725
          %s727 = scalar_lea.vmem %s697, %s726
          %s728 = ssub.s32 1, %s725
          %s729 = scalar_lea.vmem %s698, %s728 [#allocation2]
          %s730 = sshll.u32 1, %s725
          %s731 = ssub.s32 %s730, 1
          loop: start=0, step=1, limit=1
          $region378: #{network_forward.3} parent=376 // loop_pre_header
            _
          $region379: #{network_forward.3} parent=376 // loop_header
            %s733 = sphi 0, %s737
            %p734 = scmp.ge.s32.totalorder %s733, 1
            %s738 = sphi %s727, %s727
            %s739 = sphi %s729, %s729
          $region380: #{network_forward.3} parent=376 // loop_header_branch
            %736 = sbr.rel (%p734) target = $region384
          $region381: #{network_forward.3} parent=376 // loop_body
            %v740 = vld [vmem:[%s738] sm:%s731]
            %741 = vst [vmem:[%s739] sm:%s731] %v740
          $region382: #{network_forward.3} parent=376 // loop_footer
            %s737 = sadd.s32 1, %s733
          $region383: #{network_forward.3} parent=376 // loop_footer_branch
            %732 = sbr.rel target = $region379
          $region384: #{network_forward.3} parent=376 // loop_exit
            _
        $region377: #{network_forward.3} parent=361 // pred_fallthru
          _
      $region362: #{network_forward.3} parent=27 // pred_fallthru
        _
      // Predicated region
      $region363: #{network_forward.3} parent=27 // pred_check
        %p705 = pneg %p701
      $region364: #{network_forward.3} parent=27 // pred_check_branch
        %707 = sbr.rel (%p705) target = $region366
      $region365: #{network_forward.3} parent=27 // pred_region
        %s708 = sshll.u32 1, 1
        %s709 = ssub.s32 %s708, 1
        loop: start=0, step=1, limit=1
        $region367: #{network_forward.3} parent=365 // loop_pre_header
          _
        $region368: #{network_forward.3} parent=365 // loop_header
          %s711 = sphi 0, %s715
          %p712 = scmp.ge.s32.totalorder %s711, 1
          %s716 = sphi %s697, %s697
          %s717 = sphi %s698, %s698
        $region369: #{network_forward.3} parent=365 // loop_header_branch
          %714 = sbr.rel (%p712) target = $region373
        $region370: #{network_forward.3} parent=365 // loop_body
          %v718 = vld [vmem:[%s716] sm:%s709]
          %719 = vst [vmem:[%s717] sm:%s709] %v718
        $region371: #{network_forward.3} parent=365 // loop_footer
          %s715 = sadd.s32 1, %s711
        $region372: #{network_forward.3} parent=365 // loop_footer_branch
          %710 = sbr.rel target = $region368
        $region373: #{network_forward.3} parent=365 // loop_exit
          _
      $region366: #{network_forward.3} parent=27 // pred_fallthru
        _
      // Predicated region
      $region385: #{network_forward.3} parent=27 // pred_check
        _
      $region386: #{network_forward.3} parent=27 // pred_check_branch
        %744 = sbr.rel (0) target = $region388
      $region387: #{network_forward.3} parent=27 // pred_region
        %745 = vsyncadd %s699, 16
      $region388: #{network_forward.3} parent=27 // pred_fallthru
        _
      %s746 = sadd.s32 %s136, 12
      %s747 = sld [smem:[#allocation5 + %s746]]
      %s748 = scalar_lea.vmem %s1, %s747
      %s749 = scalar_lea.vmem [#allocation2], 12
      %s750 = scalar_lea.sflag [#allocation3], 12
      %p752 = scmp.lt.u32.totalorder 1, 8
      %p753 = pneg %p752
      // Predicated region
      $region389: #{network_forward.3} parent=27 // pred_check
        _
      $region390: #{network_forward.3} parent=27 // pred_check_branch
        %755 = sbr.rel (%p752) target = $region392
      $region391: #{network_forward.3} parent=27 // pred_region
        %s771 = sand.u32 1, 7
        %p772 = scmp.eq.s32.totalorder %s771, 0
        %p773 = pneg %p772
        // Predicated region
        $region404: #{network_forward.3} parent=391 // pred_check
          _
        $region405: #{network_forward.3} parent=391 // pred_check_branch
          %775 = sbr.rel (%p772) target = $region407
        $region406: #{network_forward.3} parent=391 // pred_region
          %s776 = sand.u32 1, 7
          %s777 = ssub.s32 1, %s776
          %s778 = scalar_lea.vmem %s748, %s777
          %s779 = ssub.s32 1, %s776
          %s780 = scalar_lea.vmem %s749, %s779 [#allocation2]
          %s781 = sshll.u32 1, %s776
          %s782 = ssub.s32 %s781, 1
          loop: start=0, step=1, limit=1
          $region408: #{network_forward.3} parent=406 // loop_pre_header
            _
          $region409: #{network_forward.3} parent=406 // loop_header
            %s784 = sphi 0, %s788
            %p785 = scmp.ge.s32.totalorder %s784, 1
            %s789 = sphi %s778, %s778
            %s790 = sphi %s780, %s780
          $region410: #{network_forward.3} parent=406 // loop_header_branch
            %787 = sbr.rel (%p785) target = $region414
          $region411: #{network_forward.3} parent=406 // loop_body
            %v791 = vld [vmem:[%s789] sm:%s782]
            %792 = vst [vmem:[%s790] sm:%s782] %v791
          $region412: #{network_forward.3} parent=406 // loop_footer
            %s788 = sadd.s32 1, %s784
          $region413: #{network_forward.3} parent=406 // loop_footer_branch
            %783 = sbr.rel target = $region409
          $region414: #{network_forward.3} parent=406 // loop_exit
            _
        $region407: #{network_forward.3} parent=391 // pred_fallthru
          _
      $region392: #{network_forward.3} parent=27 // pred_fallthru
        _
      // Predicated region
      $region393: #{network_forward.3} parent=27 // pred_check
        %p756 = pneg %p752
      $region394: #{network_forward.3} parent=27 // pred_check_branch
        %758 = sbr.rel (%p756) target = $region396
      $region395: #{network_forward.3} parent=27 // pred_region
        %s759 = sshll.u32 1, 1
        %s760 = ssub.s32 %s759, 1
        loop: start=0, step=1, limit=1
        $region397: #{network_forward.3} parent=395 // loop_pre_header
          _
        $region398: #{network_forward.3} parent=395 // loop_header
          %s762 = sphi 0, %s766
          %p763 = scmp.ge.s32.totalorder %s762, 1
          %s767 = sphi %s748, %s748
          %s768 = sphi %s749, %s749
        $region399: #{network_forward.3} parent=395 // loop_header_branch
          %765 = sbr.rel (%p763) target = $region403
        $region400: #{network_forward.3} parent=395 // loop_body
          %v769 = vld [vmem:[%s767] sm:%s760]
          %770 = vst [vmem:[%s768] sm:%s760] %v769
        $region401: #{network_forward.3} parent=395 // loop_footer
          %s766 = sadd.s32 1, %s762
        $region402: #{network_forward.3} parent=395 // loop_footer_branch
          %761 = sbr.rel target = $region398
        $region403: #{network_forward.3} parent=395 // loop_exit
          _
      $region396: #{network_forward.3} parent=27 // pred_fallthru
        _
      // Predicated region
      $region415: #{network_forward.3} parent=27 // pred_check
        _
      $region416: #{network_forward.3} parent=27 // pred_check_branch
        %795 = sbr.rel (0) target = $region418
      $region417: #{network_forward.3} parent=27 // pred_region
        %796 = vsyncadd %s750, 16
      $region418: #{network_forward.3} parent=27 // pred_fallthru
        _
      %s797 = sadd.s32 %s136, 13
      %s798 = sld [smem:[#allocation5 + %s797]]
      %s799 = scalar_lea.vmem %s1, %s798
      %s800 = scalar_lea.vmem [#allocation2], 13
      %s801 = scalar_lea.sflag [#allocation3], 13
      %p803 = scmp.lt.u32.totalorder 1, 8
      %p804 = pneg %p803
      // Predicated region
      $region419: #{network_forward.3} parent=27 // pred_check
        _
      $region420: #{network_forward.3} parent=27 // pred_check_branch
        %806 = sbr.rel (%p803) target = $region422
      $region421: #{network_forward.3} parent=27 // pred_region
        %s822 = sand.u32 1, 7
        %p823 = scmp.eq.s32.totalorder %s822, 0
        %p824 = pneg %p823
        // Predicated region
        $region434: #{network_forward.3} parent=421 // pred_check
          _
        $region435: #{network_forward.3} parent=421 // pred_check_branch
          %826 = sbr.rel (%p823) target = $region437
        $region436: #{network_forward.3} parent=421 // pred_region
          %s827 = sand.u32 1, 7
          %s828 = ssub.s32 1, %s827
          %s829 = scalar_lea.vmem %s799, %s828
          %s830 = ssub.s32 1, %s827
          %s831 = scalar_lea.vmem %s800, %s830 [#allocation2]
          %s832 = sshll.u32 1, %s827
          %s833 = ssub.s32 %s832, 1
          loop: start=0, step=1, limit=1
          $region438: #{network_forward.3} parent=436 // loop_pre_header
            _
          $region439: #{network_forward.3} parent=436 // loop_header
            %s835 = sphi 0, %s839
            %p836 = scmp.ge.s32.totalorder %s835, 1
            %s840 = sphi %s829, %s829
            %s841 = sphi %s831, %s831
          $region440: #{network_forward.3} parent=436 // loop_header_branch
            %838 = sbr.rel (%p836) target = $region444
          $region441: #{network_forward.3} parent=436 // loop_body
            %v842 = vld [vmem:[%s840] sm:%s833]
            %843 = vst [vmem:[%s841] sm:%s833] %v842
          $region442: #{network_forward.3} parent=436 // loop_footer
            %s839 = sadd.s32 1, %s835
          $region443: #{network_forward.3} parent=436 // loop_footer_branch
            %834 = sbr.rel target = $region439
          $region444: #{network_forward.3} parent=436 // loop_exit
            _
        $region437: #{network_forward.3} parent=421 // pred_fallthru
          _
      $region422: #{network_forward.3} parent=27 // pred_fallthru
        _
      // Predicated region
      $region423: #{network_forward.3} parent=27 // pred_check
        %p807 = pneg %p803
      $region424: #{network_forward.3} parent=27 // pred_check_branch
        %809 = sbr.rel (%p807) target = $region426
      $region425: #{network_forward.3} parent=27 // pred_region
        %s810 = sshll.u32 1, 1
        %s811 = ssub.s32 %s810, 1
        loop: start=0, step=1, limit=1
        $region427: #{network_forward.3} parent=425 // loop_pre_header
          _
        $region428: #{network_forward.3} parent=425 // loop_header
          %s813 = sphi 0, %s817
          %p814 = scmp.ge.s32.totalorder %s813, 1
          %s818 = sphi %s799, %s799
          %s819 = sphi %s800, %s800
        $region429: #{network_forward.3} parent=425 // loop_header_branch
          %816 = sbr.rel (%p814) target = $region433
        $region430: #{network_forward.3} parent=425 // loop_body
          %v820 = vld [vmem:[%s818] sm:%s811]
          %821 = vst [vmem:[%s819] sm:%s811] %v820
        $region431: #{network_forward.3} parent=425 // loop_footer
          %s817 = sadd.s32 1, %s813
        $region432: #{network_forward.3} parent=425 // loop_footer_branch
          %812 = sbr.rel target = $region428
        $region433: #{network_forward.3} parent=425 // loop_exit
          _
      $region426: #{network_forward.3} parent=27 // pred_fallthru
        _
      // Predicated region
      $region445: #{network_forward.3} parent=27 // pred_check
        _
      $region446: #{network_forward.3} parent=27 // pred_check_branch
        %846 = sbr.rel (0) target = $region448
      $region447: #{network_forward.3} parent=27 // pred_region
        %847 = vsyncadd %s801, 16
      $region448: #{network_forward.3} parent=27 // pred_fallthru
        _
      %s848 = sadd.s32 %s136, 14
      %s849 = sld [smem:[#allocation5 + %s848]]
      %s850 = scalar_lea.vmem %s1, %s849
      %s851 = scalar_lea.vmem [#allocation2], 14
      %s852 = scalar_lea.sflag [#allocation3], 14
      %p854 = scmp.lt.u32.totalorder 1, 8
      %p855 = pneg %p854
      // Predicated region
      $region449: #{network_forward.3} parent=27 // pred_check
        _
      $region450: #{network_forward.3} parent=27 // pred_check_branch
        %857 = sbr.rel (%p854) target = $region452
      $region451: #{network_forward.3} parent=27 // pred_region
        %s873 = sand.u32 1, 7
        %p874 = scmp.eq.s32.totalorder %s873, 0
        %p875 = pneg %p874
        // Predicated region
        $region464: #{network_forward.3} parent=451 // pred_check
          _
        $region465: #{network_forward.3} parent=451 // pred_check_branch
          %877 = sbr.rel (%p874) target = $region467
        $region466: #{network_forward.3} parent=451 // pred_region
          %s878 = sand.u32 1, 7
          %s879 = ssub.s32 1, %s878
          %s880 = scalar_lea.vmem %s850, %s879
          %s881 = ssub.s32 1, %s878
          %s882 = scalar_lea.vmem %s851, %s881 [#allocation2]
          %s883 = sshll.u32 1, %s878
          %s884 = ssub.s32 %s883, 1
          loop: start=0, step=1, limit=1
          $region468: #{network_forward.3} parent=466 // loop_pre_header
            _
          $region469: #{network_forward.3} parent=466 // loop_header
            %s886 = sphi 0, %s890
            %p887 = scmp.ge.s32.totalorder %s886, 1
            %s891 = sphi %s880, %s880
            %s892 = sphi %s882, %s882
          $region470: #{network_forward.3} parent=466 // loop_header_branch
            %889 = sbr.rel (%p887) target = $region474
          $region471: #{network_forward.3} parent=466 // loop_body
            %v893 = vld [vmem:[%s891] sm:%s884]
            %894 = vst [vmem:[%s892] sm:%s884] %v893
          $region472: #{network_forward.3} parent=466 // loop_footer
            %s890 = sadd.s32 1, %s886
          $region473: #{network_forward.3} parent=466 // loop_footer_branch
            %885 = sbr.rel target = $region469
          $region474: #{network_forward.3} parent=466 // loop_exit
            _
        $region467: #{network_forward.3} parent=451 // pred_fallthru
          _
      $region452: #{network_forward.3} parent=27 // pred_fallthru
        _
      // Predicated region
      $region453: #{network_forward.3} parent=27 // pred_check
        %p858 = pneg %p854
      $region454: #{network_forward.3} parent=27 // pred_check_branch
        %860 = sbr.rel (%p858) target = $region456
      $region455: #{network_forward.3} parent=27 // pred_region
        %s861 = sshll.u32 1, 1
        %s862 = ssub.s32 %s861, 1
        loop: start=0, step=1, limit=1
        $region457: #{network_forward.3} parent=455 // loop_pre_header
          _
        $region458: #{network_forward.3} parent=455 // loop_header
          %s864 = sphi 0, %s868
          %p865 = scmp.ge.s32.totalorder %s864, 1
          %s869 = sphi %s850, %s850
          %s870 = sphi %s851, %s851
        $region459: #{network_forward.3} parent=455 // loop_header_branch
          %867 = sbr.rel (%p865) target = $region463
        $region460: #{network_forward.3} parent=455 // loop_body
          %v871 = vld [vmem:[%s869] sm:%s862]
          %872 = vst [vmem:[%s870] sm:%s862] %v871
        $region461: #{network_forward.3} parent=455 // loop_footer
          %s868 = sadd.s32 1, %s864
        $region462: #{network_forward.3} parent=455 // loop_footer_branch
          %863 = sbr.rel target = $region458
        $region463: #{network_forward.3} parent=455 // loop_exit
          _
      $region456: #{network_forward.3} parent=27 // pred_fallthru
        _
      // Predicated region
      $region475: #{network_forward.3} parent=27 // pred_check
        _
      $region476: #{network_forward.3} parent=27 // pred_check_branch
        %897 = sbr.rel (0) target = $region478
      $region477: #{network_forward.3} parent=27 // pred_region
        %898 = vsyncadd %s852, 16
      $region478: #{network_forward.3} parent=27 // pred_fallthru
        _
      %s899 = sadd.s32 %s136, 15
      %s900 = sld [smem:[#allocation5 + %s899]]
      %s901 = scalar_lea.vmem %s1, %s900
      %s902 = scalar_lea.vmem [#allocation2], 15
      %s903 = scalar_lea.sflag [#allocation3], 15
      %p905 = scmp.lt.u32.totalorder 1, 8
      %p906 = pneg %p905
      // Predicated region
      $region479: #{network_forward.3} parent=27 // pred_check
        _
      $region480: #{network_forward.3} parent=27 // pred_check_branch
        %908 = sbr.rel (%p905) target = $region482
      $region481: #{network_forward.3} parent=27 // pred_region
        %s924 = sand.u32 1, 7
        %p925 = scmp.eq.s32.totalorder %s924, 0
        %p926 = pneg %p925
        // Predicated region
        $region494: #{network_forward.3} parent=481 // pred_check
          _
        $region495: #{network_forward.3} parent=481 // pred_check_branch
          %928 = sbr.rel (%p925) target = $region497
        $region496: #{network_forward.3} parent=481 // pred_region
          %s929 = sand.u32 1, 7
          %s930 = ssub.s32 1, %s929
          %s931 = scalar_lea.vmem %s901, %s930
          %s932 = ssub.s32 1, %s929
          %s933 = scalar_lea.vmem %s902, %s932 [#allocation2]
          %s934 = sshll.u32 1, %s929
          %s935 = ssub.s32 %s934, 1
          loop: start=0, step=1, limit=1
          $region498: #{network_forward.3} parent=496 // loop_pre_header
            _
          $region499: #{network_forward.3} parent=496 // loop_header
            %s937 = sphi 0, %s941
            %p938 = scmp.ge.s32.totalorder %s937, 1
            %s942 = sphi %s931, %s931
            %s943 = sphi %s933, %s933
          $region500: #{network_forward.3} parent=496 // loop_header_branch
            %940 = sbr.rel (%p938) target = $region504
          $region501: #{network_forward.3} parent=496 // loop_body
            %v944 = vld [vmem:[%s942] sm:%s935]
            %945 = vst [vmem:[%s943] sm:%s935] %v944
          $region502: #{network_forward.3} parent=496 // loop_footer
            %s941 = sadd.s32 1, %s937
          $region503: #{network_forward.3} parent=496 // loop_footer_branch
            %936 = sbr.rel target = $region499
          $region504: #{network_forward.3} parent=496 // loop_exit
            _
        $region497: #{network_forward.3} parent=481 // pred_fallthru
          _
      $region482: #{network_forward.3} parent=27 // pred_fallthru
        _
      // Predicated region
      $region483: #{network_forward.3} parent=27 // pred_check
        %p909 = pneg %p905
      $region484: #{network_forward.3} parent=27 // pred_check_branch
        %911 = sbr.rel (%p909) target = $region486
      $region485: #{network_forward.3} parent=27 // pred_region
        %s912 = sshll.u32 1, 1
        %s913 = ssub.s32 %s912, 1
        loop: start=0, step=1, limit=1
        $region487: #{network_forward.3} parent=485 // loop_pre_header
          _
        $region488: #{network_forward.3} parent=485 // loop_header
          %s915 = sphi 0, %s919
          %p916 = scmp.ge.s32.totalorder %s915, 1
          %s920 = sphi %s901, %s901
          %s921 = sphi %s902, %s902
        $region489: #{network_forward.3} parent=485 // loop_header_branch
          %918 = sbr.rel (%p916) target = $region493
        $region490: #{network_forward.3} parent=485 // loop_body
          %v922 = vld [vmem:[%s920] sm:%s913]
          %923 = vst [vmem:[%s921] sm:%s913] %v922
        $region491: #{network_forward.3} parent=485 // loop_footer
          %s919 = sadd.s32 1, %s915
        $region492: #{network_forward.3} parent=485 // loop_footer_branch
          %914 = sbr.rel target = $region488
        $region493: #{network_forward.3} parent=485 // loop_exit
          _
      $region486: #{network_forward.3} parent=27 // pred_fallthru
        _
      // Predicated region
      $region505: #{network_forward.3} parent=27 // pred_check
        _
      $region506: #{network_forward.3} parent=27 // pred_check_branch
        %948 = sbr.rel (0) target = $region508
      $region507: #{network_forward.3} parent=27 // pred_region
        %949 = vsyncadd %s903, 16
      $region508: #{network_forward.3} parent=27 // pred_fallthru
        _
      %951 = dma.done [#allocation3], 16
      %953 = dma.done %s189, 16
      %955 = dma.done %s240, 16
      %957 = dma.done %s291, 16
      %959 = dma.done %s342, 16
      %961 = dma.done %s393, 16
      %963 = dma.done %s444, 16
      %965 = dma.done %s495, 16
      %967 = dma.done %s546, 16
      %969 = dma.done %s597, 16
      %971 = dma.done %s648, 16
      %973 = dma.done %s699, 16
      %975 = dma.done %s750, 16
      %977 = dma.done %s801, 16
      %979 = dma.done %s852, 16
      %981 = dma.done %s903, 16
      %v982 = vld [vmem:[#allocation2] sm:$0xff]
      %v983 = vld [vmem:[#allocation2 + $0x8] sm:$0xff]
      %v984 = vpack.c.bf16 %v983, %v982
      %v985 = vld [vmem:[%s2] sm:$0xff]
      %v986 = vld [vmem:[%s2 + $0x8] sm:$0xff]
      %v987 = vld [vmem:[%s2 + $0x10] sm:$0xff]
      %v988 = vld [vmem:[%s2 + $0x18] sm:$0xff]
      %v989 = vld [vmem:[%s3] sm:$0xf]
      %v991 = vlaneseq
      %v992 = vshrl.u32 %v991, 7
      %v993 = vsub.s32 0, %v992
      %v994 = vrot.slane %v989, %v993
      %v995 = vlaneseq
      %v996 = vshrl.u32 %v995, 7
      %v997 = vsub.s32 1, %v996
      %v998 = vrot.slane %v989, %v997
      %v999 = vlaneseq
      %v1000 = vshrl.u32 %v999, 7
      %v1001 = vsub.s32 2, %v1000
      %v1002 = vrot.slane %v989, %v1001
      %v1003 = vlaneseq
      %v1004 = vshrl.u32 %v1003, 7
      %v1005 = vsub.s32 3, %v1004
      %v1006 = vrot.slane %v989, %v1005
      %v1015 = vunpack.c.l.b16 %v985
      %v1016 = vunpack.c.h.b16 %v985
      %v1017 = vunpack.c.l.b16 %v986
      %v1018 = vunpack.c.h.b16 %v986
      %v1019 = vunpack.c.l.b16 %v987
      %v1020 = vunpack.c.h.b16 %v987
      %v1021 = vunpack.c.l.b16 %v988
      %v1022 = vunpack.c.h.b16 %v988
      %v1023 = vpack.c.b16 %v1019, %v1015
      %v1024 = vpack.c.b16 %v1020, %v1016
      %v1025 = vpack.c.b16 %v1021, %v1017
      %v1026 = vpack.c.b16 %v1022, %v1018
      %vm1031 = vcmask 130048
      %v1033 = vsel %vm1031, %v984, 0
      %1035 = vmatprep.subr.bf16.mxu0 0
      %1036 = vmatpush1.bf16.msra.mxu0 0
      %1037 = vmatprep.subr.bf16.mxu0 0
      %1038 = vmatpush1.bf16.msra.mxu0 0
      %1039 = vmatprep.subr.bf16.mxu0 0
      %1040 = vmatpush1.bf16.msra.mxu0 0
      %1041 = vmatprep.subr.bf16.mxu0 0
      %1042 = vmatpush1.bf16.msra.mxu0 0
      %1043 = vmatprep.subr.bf16.mxu0 0
      %1044 = vmatpush1.bf16.msra.mxu0 0
      %1045 = vmatprep.subr.bf16.mxu0 0
      %1046 = vmatpush1.bf16.msra.mxu0 0
      %1047 = vmatprep.subr.bf16.mxu0 0
      %1048 = vmatpush1.bf16.msra.mxu0 0
      %1049 = vmatprep.subr.bf16.mxu0 %v1024
      %1050 = vmatpush1.bf16.msra.mxu0 %v1023
      %1051 = vmatprep.subr.bf16.mxu0 0
      %1052 = vmatpush2.bf16.msra.mxu0 0
      %1053 = vmatprep.subr.bf16.mxu0 0
      %1054 = vmatpush2.bf16.msra.mxu0 0
      %1055 = vmatprep.subr.bf16.mxu0 0
      %1056 = vmatpush2.bf16.msra.mxu0 0
      %1057 = vmatprep.subr.bf16.mxu0 0
      %1058 = vmatpush2.bf16.msra.mxu0 0
      %1059 = vmatprep.subr.bf16.mxu0 0
      %1060 = vmatpush2.bf16.msra.mxu0 0
      %1061 = vmatprep.subr.bf16.mxu0 0
      %1062 = vmatpush2.bf16.msra.mxu0 0
      %1063 = vmatprep.subr.bf16.mxu0 0
      %1064 = vmatpush2.bf16.msra.mxu0 0
      %1065 = vmatprep.subr.bf16.mxu0 0
      %1066 = vmatpush2.bf16.msra.mxu0 0
      %1067 = vmatprep.mubr.bf16.mxu0 0
      %1068 = vmatmul.mubr.bf16.gmra.mxu0 %v1033
      %v1069 = vpop.f32.mrf.mxu0
      %v1070 = vadd.f32 %v994, %v1069
      %v1071 = vpop.f32.mrf.mxu0
      %v1072 = vadd.f32 %v998, %v1071
      %v1073 = vpop.f32.mrf.mxu0
      %v1074 = vadd.f32 %v994, %v1073
      %v1075 = vpop.f32.mrf.mxu0
      %v1076 = vadd.f32 %v998, %v1075
      %1077 = vdwg.mxu0
      %1078 = vmatprep.subr.bf16.mxu0 0
      %1079 = vmatpush1.bf16.msra.mxu0 0
      %1080 = vmatprep.subr.bf16.mxu0 0
      %1081 = vmatpush1.bf16.msra.mxu0 0
      %1082 = vmatprep.subr.bf16.mxu0 0
      %1083 = vmatpush1.bf16.msra.mxu0 0
      %1084 = vmatprep.subr.bf16.mxu0 0
      %1085 = vmatpush1.bf16.msra.mxu0 0
      %1086 = vmatprep.subr.bf16.mxu0 0
      %1087 = vmatpush1.bf16.msra.mxu0 0
      %1088 = vmatprep.subr.bf16.mxu0 0
      %1089 = vmatpush1.bf16.msra.mxu0 0
      %1090 = vmatprep.subr.bf16.mxu0 0
      %1091 = vmatpush1.bf16.msra.mxu0 0
      %1092 = vmatprep.subr.bf16.mxu0 %v1026
      %1093 = vmatpush1.bf16.msra.mxu0 %v1025
      %1094 = vmatprep.subr.bf16.mxu0 0
      %1095 = vmatpush2.bf16.msra.mxu0 0
      %1096 = vmatprep.subr.bf16.mxu0 0
      %1097 = vmatpush2.bf16.msra.mxu0 0
      %1098 = vmatprep.subr.bf16.mxu0 0
      %1099 = vmatpush2.bf16.msra.mxu0 0
      %1100 = vmatprep.subr.bf16.mxu0 0
      %1101 = vmatpush2.bf16.msra.mxu0 0
      %1102 = vmatprep.subr.bf16.mxu0 0
      %1103 = vmatpush2.bf16.msra.mxu0 0
      %1104 = vmatprep.subr.bf16.mxu0 0
      %1105 = vmatpush2.bf16.msra.mxu0 0
      %1106 = vmatprep.subr.bf16.mxu0 0
      %1107 = vmatpush2.bf16.msra.mxu0 0
      %1108 = vmatprep.subr.bf16.mxu0 0
      %1109 = vmatpush2.bf16.msra.mxu0 0
      %1110 = vmatprep.mubr.bf16.mxu0 0
      %1111 = vmatmul.mubr.bf16.gmra.mxu0 %v1033
      %v1112 = vpop.f32.mrf.mxu0
      %v1113 = vadd.f32 %v1002, %v1112
      %v1114 = vpop.f32.mrf.mxu0
      %v1115 = vadd.f32 %v1006, %v1114
      %v1116 = vpop.f32.mrf.mxu0
      %v1117 = vadd.f32 %v1002, %v1116
      %v1118 = vpop.f32.mrf.mxu0
      %v1119 = vadd.f32 %v1006, %v1118
      %1120 = vdwg.mxu0
      %1121 = vst [vmem:[%s133] sm:$0xff] %v1070
      %1122 = vst [vmem:[%s133 + $0x8] sm:$0xff] %v1072
      %1123 = vst [vmem:[%s133 + $0x10] sm:$0xff] %v1113
      %1124 = vst [vmem:[%s133 + $0x18] sm:$0xff] %v1115
      %1125 = vst [vmem:[%s133 + $0x20] sm:$0xff] %v1074
      %1126 = vst [vmem:[%s133 + $0x28] sm:$0xff] %v1076
      %1127 = vst [vmem:[%s133 + $0x30] sm:$0xff] %v1117
      %1128 = vst [vmem:[%s133 + $0x38] sm:$0xff] %v1119
      %s1129 = smul.u32 2, %s21
      %p1130 = scmp.lt.s32.totalorder %s1129, 3
      %s1131 = scalar_select %p1130, %s1129, 3
      %s1132 = smul.addr %s1131, 4
      %s1133 = smul.addr %s1132, 8
      %s1134 = scalar_lea.vmem %s4, %s1133
      // Predicated region
      $region509: #{network_forward.3} parent=27 // pred_check
        %p1135 = pneg %p81
      $region510: #{network_forward.3} parent=27 // pred_check_branch
        %1137 = sbr.rel (%p1135) target = $region512
      $region511: #{network_forward.3} parent=27 // pred_region
        %s1138 = smul.u32 2, %s21
      $region512: #{network_forward.3} parent=27 // pred_fallthru
        _
    $region28: #{network_forward.3} parent=5 // pred_fallthru
      _
    %p1139 = scmp.le.s32.totalorder 2, %s16
    // Predicated region
    $region513: #{network_forward.3} parent=5 // pred_check
      %p1140 = pneg %p1139
    $region514: #{network_forward.3} parent=5 // pred_check_branch
      %1142 = sbr.rel (%p1140) target = $region516
    $region515: #{network_forward.3} parent=5 // pred_region
      %s1143 = ssub.s32 %s16, 2
      // Predicated region
      $region517: #{network_forward.3} parent=515 // pred_check
        %p1144 = pneg %p87
      $region518: #{network_forward.3} parent=515 // pred_check_branch
        %1146 = sbr.rel (%p1144) target = $region520
      $region519: #{network_forward.3} parent=515 // pred_region
        %s1147 = smul.u32 2, %s22
        %p1148 = scmp.lt.s32.totalorder %s1147, 3
        %s1149 = scalar_select %p1148, %s1147, 3
        %s1150 = smul.addr %s1149, 4
        %s1151 = smul.addr %s1150, 8
        %s1152 = scalar_lea.vmem %s4, %s1151
      $region520: #{network_forward.3} parent=515 // pred_fallthru
        _
    $region516: #{network_forward.3} parent=5 // pred_fallthru
      _
  $region6: #{network_forward.3} parent=0 // loop_footer
    %s20 = sadd.s32 1, %s16
  $region7: #{network_forward.3} parent=0 // loop_footer_branch
    %15 = sbr.rel target = $region3
  $region8: #{network_forward.3} parent=0 // loop_exit
    _
  %1153 = vsyncmov [#allocation3]
  %s1154 = vpop.sfrf %1153
  %p1155 = scmp.eq.s32.totalorder %s1154, 0
  %p1156 = pneg %p1155
  %1158 = shalt.err (%p1156)
  %s1159 = scalar_lea.sflag [#allocation3], 1
  %1160 = vsyncmov %s1159
  %s1161 = vpop.sfrf %1160
  %p1162 = scmp.eq.s32.totalorder %s1161, 0
  %p1163 = pneg %p1162
  %1165 = shalt.err (%p1163)
  %s1166 = scalar_lea.sflag [#allocation3], 2
  %1167 = vsyncmov %s1166
  %s1168 = vpop.sfrf %1167
  %p1169 = scmp.eq.s32.totalorder %s1168, 0
  %p1170 = pneg %p1169
  %1172 = shalt.err (%p1170)
  %s1173 = scalar_lea.sflag [#allocation3], 3
  %1174 = vsyncmov %s1173
  %s1175 = vpop.sfrf %1174
  %p1176 = scmp.eq.s32.totalorder %s1175, 0
  %p1177 = pneg %p1176
  %1179 = shalt.err (%p1177)
  %s1180 = scalar_lea.sflag [#allocation3], 4
  %1181 = vsyncmov %s1180
  %s1182 = vpop.sfrf %1181
  %p1183 = scmp.eq.s32.totalorder %s1182, 0
  %p1184 = pneg %p1183
  %1186 = shalt.err (%p1184)
  %s1187 = scalar_lea.sflag [#allocation3], 5
  %1188 = vsyncmov %s1187
  %s1189 = vpop.sfrf %1188
  %p1190 = scmp.eq.s32.totalorder %s1189, 0
  %p1191 = pneg %p1190
  %1193 = shalt.err (%p1191)
  %s1194 = scalar_lea.sflag [#allocation3], 6
  %1195 = vsyncmov %s1194
  %s1196 = vpop.sfrf %1195
  %p1197 = scmp.eq.s32.totalorder %s1196, 0
  %p1198 = pneg %p1197
  %1200 = shalt.err (%p1198)
  %s1201 = scalar_lea.sflag [#allocation3], 7
  %1202 = vsyncmov %s1201
  %s1203 = vpop.sfrf %1202
  %p1204 = scmp.eq.s32.totalorder %s1203, 0
  %p1205 = pneg %p1204
  %1207 = shalt.err (%p1205)
  %s1208 = scalar_lea.sflag [#allocation3], 8
  %1209 = vsyncmov %s1208
  %s1210 = vpop.sfrf %1209
  %p1211 = scmp.eq.s32.totalorder %s1210, 0
  %p1212 = pneg %p1211
  %1214 = shalt.err (%p1212)
  %s1215 = scalar_lea.sflag [#allocation3], 9
  %1216 = vsyncmov %s1215
  %s1217 = vpop.sfrf %1216
  %p1218 = scmp.eq.s32.totalorder %s1217, 0
  %p1219 = pneg %p1218
  %1221 = shalt.err (%p1219)
  %s1222 = scalar_lea.sflag [#allocation3], 10
  %1223 = vsyncmov %s1222
  %s1224 = vpop.sfrf %1223
  %p1225 = scmp.eq.s32.totalorder %s1224, 0
  %p1226 = pneg %p1225
  %1228 = shalt.err (%p1226)
  %s1229 = scalar_lea.sflag [#allocation3], 11
  %1230 = vsyncmov %s1229
  %s1231 = vpop.sfrf %1230
  %p1232 = scmp.eq.s32.totalorder %s1231, 0
  %p1233 = pneg %p1232
  %1235 = shalt.err (%p1233)
  %s1236 = scalar_lea.sflag [#allocation3], 12
  %1237 = vsyncmov %s1236
  %s1238 = vpop.sfrf %1237
  %p1239 = scmp.eq.s32.totalorder %s1238, 0
  %p1240 = pneg %p1239
  %1242 = shalt.err (%p1240)
  %s1243 = scalar_lea.sflag [#allocation3], 13
  %1244 = vsyncmov %s1243
  %s1245 = vpop.sfrf %1244
  %p1246 = scmp.eq.s32.totalorder %s1245, 0
  %p1247 = pneg %p1246
  %1249 = shalt.err (%p1247)
  %s1250 = scalar_lea.sflag [#allocation3], 14
  %1251 = vsyncmov %s1250
  %s1252 = vpop.sfrf %1251
  %p1253 = scmp.eq.s32.totalorder %s1252, 0
  %p1254 = pneg %p1253
  %1256 = shalt.err (%p1254)
  %s1257 = scalar_lea.sflag [#allocation3], 15
  %1258 = vsyncmov %s1257
  %s1259 = vpop.sfrf %1258
  %p1260 = scmp.eq.s32.totalorder %s1259, 0
  %p1261 = pneg %p1260
  %1263 = shalt.err (%p1261)

// kernel: network_forward.5
$region0: #{network_forward.5}
  #allocation0 [shape = 'u32[]', space=smem, size = 0x4, offset = 0x4, fixed_abs, tag = 'smem constant byte address 0x4 - core index']
  #allocation1 [shape = 'u32[144,128]{1,0:T(1,128)}', space=vmem, size = 0x12000, scoped, tag = 'internal scratch']
  %s0 = inlined_call_operand.vmem [shape: bf16[4,1024], index: 0, kind: input, shape index: {}]
  %s1 = inlined_call_operand.vmem [shape: bf16[1024,128], index: 1, kind: input, shape index: {}]
  %s2 = inlined_call_operand.vmem [shape: f32[1,128], index: 2, kind: input, shape index: {}]
  %s3 = inlined_call_operand.hbm [shape: f32[4,128], index: 3, kind: output, shape index: {}]
  %s4 = sld [smem:[#allocation0]]
  $region22: #{network_forward.5} parent=0
    _
  %s6 = ssub.s32 1, %s4
  %s7 = scalar_select 0, %s6, %s4
  $region1: #{network_forward.5} parent=0
    #allocation2 [shape = 'u8[2048]{0}', space=vmem, size = 0x800, scoped, tag = 'output window, operand 0, single buffered']
    #allocation3 [shape = 's32[1]{0}', space=sflag, size = 0x4, scoped, tag = 'scoped memory for network_forward.5']
    %8 = vsyncpa [#allocation3], 0
    // Predicated region
    $region2: #{network_forward.5} parent=1 // pred_check
      _
    $region3: #{network_forward.5} parent=1 // pred_check_branch
      %10 = sbr.rel (0) target = $region5
    $region4: #{network_forward.5} parent=1 // pred_region
      _
    $region5: #{network_forward.5} parent=1 // pred_fallthru
      _
    // Predicated region
    $region6: #{network_forward.5} parent=1 // pred_check
      _
    $region7: #{network_forward.5} parent=1 // pred_check_branch
      %12 = sbr.rel (0) target = $region9
    $region8: #{network_forward.5} parent=1 // pred_region
      _
    $region9: #{network_forward.5} parent=1 // pred_fallthru
      _
    // Predicated region
    $region10: #{network_forward.5} parent=1 // pred_check
      _
    $region11: #{network_forward.5} parent=1 // pred_check_branch
      %14 = sbr.rel (0) target = $region13
    $region12: #{network_forward.5} parent=1 // pred_region
      _
    $region13: #{network_forward.5} parent=1 // pred_fallthru
      _
    %v16 = vld [vmem:[%s0] sm:$0xff]
    %v17 = vld [vmem:[%s0 + $0x8] sm:$0xff]
    %v18 = vld [vmem:[%s1] sm:$0xf]
    %v19 = vld [vmem:[%s1 + $0x4] sm:$0xf]
    %v20 = vld [vmem:[%s1 + $0x8] sm:$0xf]
    %v21 = vld [vmem:[%s1 + $0xc] sm:$0xf]
    %v22 = vld [vmem:[%s1 + $0x10] sm:$0xf]
    %v23 = vld [vmem:[%s1 + $0x14] sm:$0xf]
    %v24 = vld [vmem:[%s1 + $0x18] sm:$0xf]
    %v25 = vld [vmem:[%s1 + $0x1c] sm:$0xf]
    %v26 = vld [vmem:[%s1 + $0x20] sm:$0xf]
    %v27 = vld [vmem:[%s1 + $0x24] sm:$0xf]
    %v28 = vld [vmem:[%s1 + $0x28] sm:$0xf]
    %v29 = vld [vmem:[%s1 + $0x2c] sm:$0xf]
    %v30 = vld [vmem:[%s1 + $0x30] sm:$0xf]
    %v31 = vld [vmem:[%s1 + $0x34] sm:$0xf]
    %v32 = vld [vmem:[%s1 + $0x38] sm:$0xf]
    %v33 = vld [vmem:[%s1 + $0x3c] sm:$0xf]
    %v34 = vld [vmem:[%s1 + $0x40] sm:$0xf]
    %v35 = vld [vmem:[%s1 + $0x44] sm:$0xf]
    %v36 = vld [vmem:[%s1 + $0x48] sm:$0xf]
    %v37 = vld [vmem:[%s1 + $0x4c] sm:$0xf]
    %v38 = vld [vmem:[%s1 + $0x50] sm:$0xf]
    %v39 = vld [vmem:[%s1 + $0x54] sm:$0xf]
    %v40 = vld [vmem:[%s1 + $0x58] sm:$0xf]
    %v41 = vld [vmem:[%s1 + $0x5c] sm:$0xf]
    %v42 = vld [vmem:[%s1 + $0x60] sm:$0xf]
    %v43 = vld [vmem:[%s1 + $0x64] sm:$0xf]
    %v44 = vld [vmem:[%s1 + $0x68] sm:$0xf]
    %v45 = vld [vmem:[%s1 + $0x6c] sm:$0xf]
    %v46 = vld [vmem:[%s1 + $0x70] sm:$0xf]
    %v47 = vld [vmem:[%s1 + $0x74] sm:$0xf]
    %v48 = vld [vmem:[%s1 + $0x78] sm:$0xf]
    %v49 = vld [vmem:[%s1 + $0x7c] sm:$0xf]
    %v50 = vld [vmem:[%s1 + $0x80] sm:$0xf]
    %v51 = vld [vmem:[%s1 + $0x84] sm:$0xf]
    %v52 = vld [vmem:[%s1 + $0x88] sm:$0xf]
    %v53 = vld [vmem:[%s1 + $0x8c] sm:$0xf]
    %v54 = vld [vmem:[%s1 + $0x90] sm:$0xf]
    %v55 = vld [vmem:[%s1 + $0x94] sm:$0xf]
    %v56 = vld [vmem:[%s1 + $0x98] sm:$0xf]
    %v57 = vld [vmem:[%s1 + $0x9c] sm:$0xf]
    %v58 = vld [vmem:[%s1 + $0xa0] sm:$0xf]
    %v59 = vld [vmem:[%s1 + $0xa4] sm:$0xf]
    %v60 = vld [vmem:[%s1 + $0xa8] sm:$0xf]
    %v61 = vld [vmem:[%s1 + $0xac] sm:$0xf]
    %v62 = vld [vmem:[%s1 + $0xb0] sm:$0xf]
    %v63 = vld [vmem:[%s1 + $0xb4] sm:$0xf]
    %v64 = vld [vmem:[%s1 + $0xb8] sm:$0xf]
    %v65 = vld [vmem:[%s1 + $0xbc] sm:$0xf]
    %v66 = vld [vmem:[%s1 + $0xc0] sm:$0xf]
    %v67 = vld [vmem:[%s1 + $0xc4] sm:$0xf]
    %v68 = vld [vmem:[%s1 + $0xc8] sm:$0xf]
    %v69 = vld [vmem:[%s1 + $0xcc] sm:$0xf]
    %v70 = vld [vmem:[%s1 + $0xd0] sm:$0xf]
    %v71 = vld [vmem:[%s1 + $0xd4] sm:$0xf]
    %v72 = vld [vmem:[%s1 + $0xd8] sm:$0xf]
    %v73 = vld [vmem:[%s1 + $0xdc] sm:$0xf]
    %v74 = vld [vmem:[%s1 + $0xe0] sm:$0xf]
    %v75 = vld [vmem:[%s1 + $0xe4] sm:$0xf]
    %v76 = vld [vmem:[%s1 + $0xe8] sm:$0xf]
    %v77 = vld [vmem:[%s1 + $0xec] sm:$0xf]
    %v78 = vld [vmem:[%s1 + $0xf0] sm:$0xf]
    %v79 = vld [vmem:[%s1 + $0xf4] sm:$0xf]
    %v80 = vld [vmem:[%s1 + $0xf8] sm:$0xf]
    %v81 = vld [vmem:[%s1 + $0xfc] sm:$0xf]
    %v82 = vld [vmem:[%s1 + $0x100] sm:$0xf]
    %v83 = vld [vmem:[%s1 + $0x104] sm:$0xf]
    %v84 = vld [vmem:[%s1 + $0x108] sm:$0xf]
    %v85 = vld [vmem:[%s1 + $0x10c] sm:$0xf]
    %v86 = vld [vmem:[%s1 + $0x110] sm:$0xf]
    %v87 = vld [vmem:[%s1 + $0x114] sm:$0xf]
    %v88 = vld [vmem:[%s1 + $0x118] sm:$0xf]
    %v89 = vld [vmem:[%s1 + $0x11c] sm:$0xf]
    %v90 = vld [vmem:[%s1 + $0x120] sm:$0xf]
    %v91 = vld [vmem:[%s1 + $0x124] sm:$0xf]
    %v92 = vld [vmem:[%s1 + $0x128] sm:$0xf]
    %v93 = vld [vmem:[%s1 + $0x12c] sm:$0xf]
    %v94 = vld [vmem:[%s1 + $0x130] sm:$0xf]
    %v95 = vld [vmem:[%s1 + $0x134] sm:$0xf]
    %v96 = vld [vmem:[%s1 + $0x138] sm:$0xf]
    %v97 = vld [vmem:[%s1 + $0x13c] sm:$0xf]
    %v98 = vld [vmem:[%s1 + $0x140] sm:$0xf]
    %v99 = vld [vmem:[%s1 + $0x144] sm:$0xf]
    %v100 = vld [vmem:[%s1 + $0x148] sm:$0xf]
    %v101 = vld [vmem:[%s1 + $0x14c] sm:$0xf]
    %v102 = vld [vmem:[%s1 + $0x150] sm:$0xf]
    %v103 = vld [vmem:[%s1 + $0x154] sm:$0xf]
    %v104 = vld [vmem:[%s1 + $0x158] sm:$0xf]
    %v105 = vld [vmem:[%s1 + $0x15c] sm:$0xf]
    %v106 = vld [vmem:[%s1 + $0x160] sm:$0xf]
    %v107 = vld [vmem:[%s1 + $0x164] sm:$0xf]
    %v108 = vld [vmem:[%s1 + $0x168] sm:$0xf]
    %v109 = vld [vmem:[%s1 + $0x16c] sm:$0xf]
    %v110 = vld [vmem:[%s1 + $0x170] sm:$0xf]
    %v111 = vld [vmem:[%s1 + $0x174] sm:$0xf]
    %v112 = vld [vmem:[%s1 + $0x178] sm:$0xf]
    %v113 = vld [vmem:[%s1 + $0x17c] sm:$0xf]
    %v114 = vld [vmem:[%s1 + $0x180] sm:$0xf]
    %v115 = vld [vmem:[%s1 + $0x184] sm:$0xf]
    %v116 = vld [vmem:[%s1 + $0x188] sm:$0xf]
    %v117 = vld [vmem:[%s1 + $0x18c] sm:$0xf]
    %v118 = vld [vmem:[%s1 + $0x190] sm:$0xf]
    %v119 = vld [vmem:[%s1 + $0x194] sm:$0xf]
    %v120 = vld [vmem:[%s1 + $0x198] sm:$0xf]
    %v121 = vld [vmem:[%s1 + $0x19c] sm:$0xf]
    %v122 = vld [vmem:[%s1 + $0x1a0] sm:$0xf]
    %v123 = vld [vmem:[%s1 + $0x1a4] sm:$0xf]
    %v124 = vld [vmem:[%s1 + $0x1a8] sm:$0xf]
    %v125 = vld [vmem:[%s1 + $0x1ac] sm:$0xf]
    %v126 = vld [vmem:[%s1 + $0x1b0] sm:$0xf]
    %v127 = vld [vmem:[%s1 + $0x1b4] sm:$0xf]
    %v128 = vld [vmem:[%s1 + $0x1b8] sm:$0xf]
    %v129 = vld [vmem:[%s1 + $0x1bc] sm:$0xf]
    %v130 = vld [vmem:[%s1 + $0x1c0] sm:$0xf]
    %v131 = vld [vmem:[%s1 + $0x1c4] sm:$0xf]
    %v132 = vld [vmem:[%s1 + $0x1c8] sm:$0xf]
    %v133 = vld [vmem:[%s1 + $0x1cc] sm:$0xf]
    %v134 = vld [vmem:[%s1 + $0x1d0] sm:$0xf]
    %v135 = vld [vmem:[%s1 + $0x1d4] sm:$0xf]
    %v136 = vld [vmem:[%s1 + $0x1d8] sm:$0xf]
    %v137 = vld [vmem:[%s1 + $0x1dc] sm:$0xf]
    %v138 = vld [vmem:[%s1 + $0x1e0] sm:$0xf]
    %v139 = vld [vmem:[%s1 + $0x1e4] sm:$0xf]
    %v140 = vld [vmem:[%s1 + $0x1e8] sm:$0xf]
    %v141 = vld [vmem:[%s1 + $0x1ec] sm:$0xf]
    %v142 = vld [vmem:[%s1 + $0x1f0] sm:$0xf]
    %v143 = vld [vmem:[%s1 + $0x1f4] sm:$0xf]
    %v144 = vld [vmem:[%s1 + $0x1f8] sm:$0xf]
    %v145 = vld [vmem:[%s1 + $0x1fc] sm:$0xf]
    %v146 = vld [vmem:[%s2] sm:$0x1]
    %v148 = vlaneseq
    %v149 = vshrl.u32 %v148, 7
    %v150 = vsub.s32 0, %v149
    %v151 = vrot.slane %v146, %v150
    %v155 = vcombine.high %v16, %v16
    %v157 = vunpack.c.l.s4 1983009808
    %v158 = vunpack.c.0.s8 %v157
    %v159 = vlaneseq
    %v160 = vshrl.u32 %v159, 7
    %v161 = vsub.s32 %v158, %v160
    %v162 = vrot.slane %v16, %v161
    %v164 = vunpack.c.l.s4 1983009808
    %v165 = vunpack.c.0.s8 %v164
    %v166 = vlaneseq
    %v167 = vshrl.u32 %v166, 7
    %v168 = vsub.s32 %v165, %v167
    %v169 = vrot.slane %v155, %v168
    %v170 = vcombine.high %v162, %v162
    %v171 = vcombine.high %v169, %v169
    %v172 = vcombine.high %v17, %v17
    %v174 = vunpack.c.l.s4 1983009808
    %v175 = vunpack.c.0.s8 %v174
    %v176 = vlaneseq
    %v177 = vshrl.u32 %v176, 7
    %v178 = vsub.s32 %v175, %v177
    %v179 = vrot.slane %v17, %v178
    %v181 = vunpack.c.l.s4 1983009808
    %v182 = vunpack.c.0.s8 %v181
    %v183 = vlaneseq
    %v184 = vshrl.u32 %v183, 7
    %v185 = vsub.s32 %v182, %v184
    %v186 = vrot.slane %v172, %v185
    %v187 = vcombine.high %v179, %v179
    %v188 = vcombine.high %v186, %v186
    %v325 = vunpack.c.l.b16 %v18
    %v326 = vunpack.c.l.b16 %v19
    %v327 = vunpack.c.l.b16 %v20
    %v328 = vunpack.c.l.b16 %v21
    %v329 = vunpack.c.l.b16 %v22
    %v330 = vunpack.c.l.b16 %v23
    %v331 = vunpack.c.l.b16 %v24
    %v332 = vunpack.c.l.b16 %v25
    %v333 = vunpack.c.l.b16 %v26
    %v334 = vunpack.c.l.b16 %v27
    %v335 = vunpack.c.l.b16 %v28
    %v336 = vunpack.c.l.b16 %v29
    %v337 = vunpack.c.l.b16 %v30
    %v338 = vunpack.c.l.b16 %v31
    %v339 = vunpack.c.l.b16 %v32
    %v340 = vunpack.c.l.b16 %v33
    %v341 = vunpack.c.l.b16 %v34
    %v342 = vunpack.c.l.b16 %v35
    %v343 = vunpack.c.l.b16 %v36
    %v344 = vunpack.c.l.b16 %v37
    %v345 = vunpack.c.l.b16 %v38
    %v346 = vunpack.c.l.b16 %v39
    %v347 = vunpack.c.l.b16 %v40
    %v348 = vunpack.c.l.b16 %v41
    %v349 = vunpack.c.l.b16 %v42
    %v350 = vunpack.c.l.b16 %v43
    %v351 = vunpack.c.l.b16 %v44
    %v352 = vunpack.c.l.b16 %v45
    %v353 = vunpack.c.l.b16 %v46
    %v354 = vunpack.c.l.b16 %v47
    %v355 = vunpack.c.l.b16 %v48
    %v356 = vunpack.c.l.b16 %v49
    %v357 = vunpack.c.l.b16 %v50
    %v358 = vunpack.c.l.b16 %v51
    %v359 = vunpack.c.l.b16 %v52
    %v360 = vunpack.c.l.b16 %v53
    %v361 = vunpack.c.l.b16 %v54
    %v362 = vunpack.c.l.b16 %v55
    %v363 = vunpack.c.l.b16 %v56
    %v364 = vunpack.c.l.b16 %v57
    %v365 = vunpack.c.l.b16 %v58
    %v366 = vunpack.c.l.b16 %v59
    %v367 = vunpack.c.l.b16 %v60
    %v368 = vunpack.c.l.b16 %v61
    %v369 = vunpack.c.l.b16 %v62
    %v370 = vunpack.c.l.b16 %v63
    %v371 = vunpack.c.l.b16 %v64
    %v372 = vunpack.c.l.b16 %v65
    %v373 = vunpack.c.l.b16 %v66
    %v374 = vunpack.c.l.b16 %v67
    %v375 = vunpack.c.l.b16 %v68
    %v376 = vunpack.c.l.b16 %v69
    %v377 = vunpack.c.l.b16 %v70
    %v378 = vunpack.c.l.b16 %v71
    %v379 = vunpack.c.l.b16 %v72
    %v380 = vunpack.c.l.b16 %v73
    %v381 = vunpack.c.l.b16 %v74
    %v382 = vunpack.c.l.b16 %v75
    %v383 = vunpack.c.l.b16 %v76
    %v384 = vunpack.c.l.b16 %v77
    %v385 = vunpack.c.l.b16 %v78
    %v386 = vunpack.c.l.b16 %v79
    %v387 = vunpack.c.l.b16 %v80
    %v388 = vunpack.c.l.b16 %v81
    %v389 = vunpack.c.l.b16 %v82
    %v390 = vunpack.c.l.b16 %v83
    %v391 = vunpack.c.l.b16 %v84
    %v392 = vunpack.c.l.b16 %v85
    %v393 = vunpack.c.l.b16 %v86
    %v394 = vunpack.c.l.b16 %v87
    %v395 = vunpack.c.l.b16 %v88
    %v396 = vunpack.c.l.b16 %v89
    %v397 = vunpack.c.l.b16 %v90
    %v398 = vunpack.c.l.b16 %v91
    %v399 = vunpack.c.l.b16 %v92
    %v400 = vunpack.c.l.b16 %v93
    %v401 = vunpack.c.l.b16 %v94
    %v402 = vunpack.c.l.b16 %v95
    %v403 = vunpack.c.l.b16 %v96
    %v404 = vunpack.c.l.b16 %v97
    %v405 = vunpack.c.l.b16 %v98
    %v406 = vunpack.c.l.b16 %v99
    %v407 = vunpack.c.l.b16 %v100
    %v408 = vunpack.c.l.b16 %v101
    %v409 = vunpack.c.l.b16 %v102
    %v410 = vunpack.c.l.b16 %v103
    %v411 = vunpack.c.l.b16 %v104
    %v412 = vunpack.c.l.b16 %v105
    %v413 = vunpack.c.l.b16 %v106
    %v414 = vunpack.c.l.b16 %v107
    %v415 = vunpack.c.l.b16 %v108
    %v416 = vunpack.c.l.b16 %v109
    %v417 = vunpack.c.l.b16 %v110
    %v418 = vunpack.c.l.b16 %v111
    %v419 = vunpack.c.l.b16 %v112
    %v420 = vunpack.c.l.b16 %v113
    %v421 = vunpack.c.l.b16 %v114
    %v422 = vunpack.c.l.b16 %v115
    %v423 = vunpack.c.l.b16 %v116
    %v424 = vunpack.c.l.b16 %v117
    %v425 = vunpack.c.l.b16 %v118
    %v426 = vunpack.c.l.b16 %v119
    %v427 = vunpack.c.l.b16 %v120
    %v428 = vunpack.c.l.b16 %v121
    %v429 = vunpack.c.l.b16 %v122
    %v430 = vunpack.c.l.b16 %v123
    %v431 = vunpack.c.l.b16 %v124
    %v432 = vunpack.c.l.b16 %v125
    %v433 = vunpack.c.l.b16 %v126
    %v434 = vunpack.c.l.b16 %v127
    %v435 = vunpack.c.l.b16 %v128
    %v436 = vunpack.c.l.b16 %v129
    %v437 = vunpack.c.l.b16 %v130
    %v438 = vunpack.c.l.b16 %v131
    %v439 = vunpack.c.l.b16 %v132
    %v440 = vunpack.c.l.b16 %v133
    %v441 = vunpack.c.l.b16 %v134
    %v442 = vunpack.c.l.b16 %v135
    %v443 = vunpack.c.l.b16 %v136
    %v444 = vunpack.c.l.b16 %v137
    %v445 = vunpack.c.l.b16 %v138
    %v446 = vunpack.c.l.b16 %v139
    %v447 = vunpack.c.l.b16 %v140
    %v448 = vunpack.c.l.b16 %v141
    %v449 = vunpack.c.l.b16 %v142
    %v450 = vunpack.c.l.b16 %v143
    %v451 = vunpack.c.l.b16 %v144
    %v452 = vunpack.c.l.b16 %v145
    %v453 = vpack.c.b16 %v326, %v325
    %v454 = vpack.c.b16 %v328, %v327
    %v455 = vpack.c.b16 %v330, %v329
    %v456 = vpack.c.b16 %v332, %v331
    %v457 = vpack.c.b16 %v334, %v333
    %v458 = vpack.c.b16 %v336, %v335
    %v459 = vpack.c.b16 %v338, %v337
    %v460 = vpack.c.b16 %v340, %v339
    %v461 = vpack.c.b16 %v342, %v341
    %v462 = vpack.c.b16 %v344, %v343
    %v463 = vpack.c.b16 %v346, %v345
    %v464 = vpack.c.b16 %v348, %v347
    %v465 = vpack.c.b16 %v350, %v349
    %v466 = vpack.c.b16 %v352, %v351
    %v467 = vpack.c.b16 %v354, %v353
    %v468 = vpack.c.b16 %v356, %v355
    %v469 = vpack.c.b16 %v358, %v357
    %v470 = vpack.c.b16 %v360, %v359
    %v471 = vpack.c.b16 %v362, %v361
    %v472 = vpack.c.b16 %v364, %v363
    %v473 = vpack.c.b16 %v366, %v365
    %v474 = vpack.c.b16 %v368, %v367
    %v475 = vpack.c.b16 %v370, %v369
    %v476 = vpack.c.b16 %v372, %v371
    %v477 = vpack.c.b16 %v374, %v373
    %v478 = vpack.c.b16 %v376, %v375
    %v479 = vpack.c.b16 %v378, %v377
    %v480 = vpack.c.b16 %v380, %v379
    %v481 = vpack.c.b16 %v382, %v381
    %v482 = vpack.c.b16 %v384, %v383
    %v483 = vpack.c.b16 %v386, %v385
    %v484 = vpack.c.b16 %v388, %v387
    %v485 = vpack.c.b16 %v390, %v389
    %v486 = vpack.c.b16 %v392, %v391
    %v487 = vpack.c.b16 %v394, %v393
    %v488 = vpack.c.b16 %v396, %v395
    %v489 = vpack.c.b16 %v398, %v397
    %v490 = vpack.c.b16 %v400, %v399
    %v491 = vpack.c.b16 %v402, %v401
    %v492 = vpack.c.b16 %v404, %v403
    %v493 = vpack.c.b16 %v406, %v405
    %v494 = vpack.c.b16 %v408, %v407
    %v495 = vpack.c.b16 %v410, %v409
    %v496 = vpack.c.b16 %v412, %v411
    %v497 = vpack.c.b16 %v414, %v413
    %v498 = vpack.c.b16 %v416, %v415
    %v499 = vpack.c.b16 %v418, %v417
    %v500 = vpack.c.b16 %v420, %v419
    %v501 = vpack.c.b16 %v422, %v421
    %v502 = vpack.c.b16 %v424, %v423
    %v503 = vpack.c.b16 %v426, %v425
    %v504 = vpack.c.b16 %v428, %v427
    %v505 = vpack.c.b16 %v430, %v429
    %v506 = vpack.c.b16 %v432, %v431
    %v507 = vpack.c.b16 %v434, %v433
    %v508 = vpack.c.b16 %v436, %v435
    %v509 = vpack.c.b16 %v438, %v437
    %v510 = vpack.c.b16 %v440, %v439
    %v511 = vpack.c.b16 %v442, %v441
    %v512 = vpack.c.b16 %v444, %v443
    %v513 = vpack.c.b16 %v446, %v445
    %v514 = vpack.c.b16 %v448, %v447
    %v515 = vpack.c.b16 %v450, %v449
    %v516 = vpack.c.b16 %v452, %v451
    %581 = vmatprep.subr.bf16.mxu0 0
    %582 = vmatpush1.bf16.msra.mxu0 %v460
    %583 = vmatprep.subr.bf16.mxu0 0
    %584 = vmatpush1.bf16.msra.mxu0 %v459
    %585 = vmatprep.subr.bf16.mxu0 0
    %586 = vmatpush1.bf16.msra.mxu0 %v458
    %587 = vmatprep.subr.bf16.mxu0 0
    %588 = vmatpush1.bf16.msra.mxu0 %v457
    %589 = vmatprep.subr.bf16.mxu0 0
    %590 = vmatpush1.bf16.msra.mxu0 %v456
    %591 = vmatprep.subr.bf16.mxu0 0
    %592 = vmatpush1.bf16.msra.mxu0 %v455
    %593 = vmatprep.subr.bf16.mxu0 0
    %594 = vmatpush1.bf16.msra.mxu0 %v454
    %595 = vmatprep.subr.bf16.mxu0 0
    %596 = vmatpush1.bf16.msra.mxu0 %v453
    %597 = vmatprep.subr.bf16.mxu0 0
    %598 = vmatpush2.bf16.msra.mxu0 %v468
    %599 = vmatprep.subr.bf16.mxu0 0
    %600 = vmatpush2.bf16.msra.mxu0 %v467
    %601 = vmatprep.subr.bf16.mxu0 0
    %602 = vmatpush2.bf16.msra.mxu0 %v466
    %603 = vmatprep.subr.bf16.mxu0 0
    %604 = vmatpush2.bf16.msra.mxu0 %v465
    %605 = vmatprep.subr.bf16.mxu0 0
    %606 = vmatpush2.bf16.msra.mxu0 %v464
    %607 = vmatprep.subr.bf16.mxu0 0
    %608 = vmatpush2.bf16.msra.mxu0 %v463
    %609 = vmatprep.subr.bf16.mxu0 0
    %610 = vmatpush2.bf16.msra.mxu0 %v462
    %611 = vmatprep.subr.bf16.mxu0 0
    %612 = vmatpush2.bf16.msra.mxu0 %v461
    %613 = vmatprep.mubr.bf16.mxu0 %v170
    %614 = vmatmul.mubr.bf16.gmra.mxu0 %v162
    %v615 = vpop.f32.mrf.mxu0
    %v616 = vadd.f32 %v151, %v615
    %v617 = vpop.f32.mrf.mxu0
    %v618 = vpop.f32.mrf.mxu0
    %v619 = vpop.f32.mrf.mxu0
    %620 = vdwg.mxu0
    %621 = vmatprep.subr.bf16.mxu0 0
    %622 = vmatpush1.bf16.msra.mxu0 %v476
    %623 = vmatprep.subr.bf16.mxu0 0
    %624 = vmatpush1.bf16.msra.mxu0 %v475
    %625 = vmatprep.subr.bf16.mxu0 0
    %626 = vmatpush1.bf16.msra.mxu0 %v474
    %627 = vmatprep.subr.bf16.mxu0 0
    %628 = vmatpush1.bf16.msra.mxu0 %v473
    %629 = vmatprep.subr.bf16.mxu0 0
    %630 = vmatpush1.bf16.msra.mxu0 %v472
    %631 = vmatprep.subr.bf16.mxu0 0
    %632 = vmatpush1.bf16.msra.mxu0 %v471
    %633 = vmatprep.subr.bf16.mxu0 0
    %634 = vmatpush1.bf16.msra.mxu0 %v470
    %635 = vmatprep.subr.bf16.mxu0 0
    %636 = vmatpush1.bf16.msra.mxu0 %v469
    %637 = vmatprep.subr.bf16.mxu0 0
    %638 = vmatpush2.bf16.msra.mxu0 %v484
    %639 = vmatprep.subr.bf16.mxu0 0
    %640 = vmatpush2.bf16.msra.mxu0 %v483
    %641 = vmatprep.subr.bf16.mxu0 0
    %642 = vmatpush2.bf16.msra.mxu0 %v482
    %643 = vmatprep.subr.bf16.mxu0 0
    %644 = vmatpush2.bf16.msra.mxu0 %v481
    %645 = vmatprep.subr.bf16.mxu0 0
    %646 = vmatpush2.bf16.msra.mxu0 %v480
    %647 = vmatprep.subr.bf16.mxu0 0
    %648 = vmatpush2.bf16.msra.mxu0 %v479
    %649 = vmatprep.subr.bf16.mxu0 0
    %650 = vmatpush2.bf16.msra.mxu0 %v478
    %651 = vmatprep.subr.bf16.mxu0 0
    %652 = vmatpush2.bf16.msra.mxu0 %v477
    %653 = vmatprep.mubr.bf16.mxu0 %v171
    %654 = vmatmul.mubr.bf16.gmra.mxu0 %v169
    %v655 = vpop.f32.mrf.mxu0
    %v656 = vadd.f32 %v616, %v655
    %v657 = vpop.f32.mrf.mxu0
    %v658 = vpop.f32.mrf.mxu0
    %v659 = vpop.f32.mrf.mxu0
    %660 = vdwg.mxu0
    %661 = vmatprep.subr.bf16.mxu0 0
    %662 = vmatpush1.bf16.msra.mxu0 %v492
    %663 = vmatprep.subr.bf16.mxu0 0
    %664 = vmatpush1.bf16.msra.mxu0 %v491
    %665 = vmatprep.subr.bf16.mxu0 0
    %666 = vmatpush1.bf16.msra.mxu0 %v490
    %667 = vmatprep.subr.bf16.mxu0 0
    %668 = vmatpush1.bf16.msra.mxu0 %v489
    %669 = vmatprep.subr.bf16.mxu0 0
    %670 = vmatpush1.bf16.msra.mxu0 %v488
    %671 = vmatprep.subr.bf16.mxu0 0
    %672 = vmatpush1.bf16.msra.mxu0 %v487
    %673 = vmatprep.subr.bf16.mxu0 0
    %674 = vmatpush1.bf16.msra.mxu0 %v486
    %675 = vmatprep.subr.bf16.mxu0 0
    %676 = vmatpush1.bf16.msra.mxu0 %v485
    %677 = vmatprep.subr.bf16.mxu0 0
    %678 = vmatpush2.bf16.msra.mxu0 %v500
    %679 = vmatprep.subr.bf16.mxu0 0
    %680 = vmatpush2.bf16.msra.mxu0 %v499
    %681 = vmatprep.subr.bf16.mxu0 0
    %682 = vmatpush2.bf16.msra.mxu0 %v498
    %683 = vmatprep.subr.bf16.mxu0 0
    %684 = vmatpush2.bf16.msra.mxu0 %v497
    %685 = vmatprep.subr.bf16.mxu0 0
    %686 = vmatpush2.bf16.msra.mxu0 %v496
    %687 = vmatprep.subr.bf16.mxu0 0
    %688 = vmatpush2.bf16.msra.mxu0 %v495
    %689 = vmatprep.subr.bf16.mxu0 0
    %690 = vmatpush2.bf16.msra.mxu0 %v494
    %691 = vmatprep.subr.bf16.mxu0 0
    %692 = vmatpush2.bf16.msra.mxu0 %v493
    %693 = vmatprep.mubr.bf16.mxu0 %v187
    %694 = vmatmul.mubr.bf16.gmra.mxu0 %v179
    %v695 = vpop.f32.mrf.mxu0
    %v696 = vadd.f32 %v656, %v695
    %v697 = vpop.f32.mrf.mxu0
    %v698 = vpop.f32.mrf.mxu0
    %v699 = vpop.f32.mrf.mxu0
    %700 = vdwg.mxu0
    %701 = vmatprep.subr.bf16.mxu0 0
    %702 = vmatpush1.bf16.msra.mxu0 %v508
    %703 = vmatprep.subr.bf16.mxu0 0
    %704 = vmatpush1.bf16.msra.mxu0 %v507
    %705 = vmatprep.subr.bf16.mxu0 0
    %706 = vmatpush1.bf16.msra.mxu0 %v506
    %707 = vmatprep.subr.bf16.mxu0 0
    %708 = vmatpush1.bf16.msra.mxu0 %v505
    %709 = vmatprep.subr.bf16.mxu0 0
    %710 = vmatpush1.bf16.msra.mxu0 %v504
    %711 = vmatprep.subr.bf16.mxu0 0
    %712 = vmatpush1.bf16.msra.mxu0 %v503
    %713 = vmatprep.subr.bf16.mxu0 0
    %714 = vmatpush1.bf16.msra.mxu0 %v502
    %715 = vmatprep.subr.bf16.mxu0 0
    %716 = vmatpush1.bf16.msra.mxu0 %v501
    %717 = vmatprep.subr.bf16.mxu0 0
    %718 = vmatpush2.bf16.msra.mxu0 %v516
    %719 = vmatprep.subr.bf16.mxu0 0
    %720 = vmatpush2.bf16.msra.mxu0 %v515
    %721 = vmatprep.subr.bf16.mxu0 0
    %722 = vmatpush2.bf16.msra.mxu0 %v514
    %723 = vmatprep.subr.bf16.mxu0 0
    %724 = vmatpush2.bf16.msra.mxu0 %v513
    %725 = vmatprep.subr.bf16.mxu0 0
    %726 = vmatpush2.bf16.msra.mxu0 %v512
    %727 = vmatprep.subr.bf16.mxu0 0
    %728 = vmatpush2.bf16.msra.mxu0 %v511
    %729 = vmatprep.subr.bf16.mxu0 0
    %730 = vmatpush2.bf16.msra.mxu0 %v510
    %731 = vmatprep.subr.bf16.mxu0 0
    %732 = vmatpush2.bf16.msra.mxu0 %v509
    %733 = vmatprep.mubr.bf16.mxu0 %v188
    %734 = vmatmul.mubr.bf16.gmra.mxu0 %v186
    %v735 = vpop.f32.mrf.mxu0
    %v736 = vadd.f32 %v696, %v735
    %v737 = vpop.f32.mrf.mxu0
    %v738 = vpop.f32.mrf.mxu0
    %v739 = vpop.f32.mrf.mxu0
    %740 = vdwg.mxu0
    %741 = vst [vmem:[#allocation2] sm:$0xf] %v736
    // Predicated region
    $region14: #{network_forward.5} parent=1 // pred_check
      _
    $region15: #{network_forward.5} parent=1 // pred_check_branch
      %743 = sbr.rel (0) target = $region17
    $region16: #{network_forward.5} parent=1 // pred_region
      %s745 = ssub.s32 64, 64
      %746 = vsyncadd [#allocation3], %s745
      %s748 = sshll.u32 [#allocation2], 4
      %s749 = int_to_ptr.vmem [resolvable:$true] %s748
      %751 = dma.vmem_to_hbm [thread:$0]  %s749, 64, %s3, [#allocation3]
    $region17: #{network_forward.5} parent=1 // pred_fallthru
      _
    // Predicated region
    $region18: #{network_forward.5} parent=1 // pred_check
      _
    $region19: #{network_forward.5} parent=1 // pred_check_branch
      %753 = sbr.rel (0) target = $region21
    $region20: #{network_forward.5} parent=1 // pred_region
      %754 = dma.done [#allocation3], 64
    $region21: #{network_forward.5} parent=1 // pred_fallthru
      _
    %755 = vsyncpa [#allocation3], 1

// kernel: network_forward.4
$region0: #{network_forward.4}
  #allocation0 [shape = 'u32[]', space=smem, size = 0x4, offset = 0x4, fixed_abs, tag = 'smem constant byte address 0x4 - core index']
  #allocation1 [shape = 'u32[144,128]{1,0:T(1,128)}', space=vmem, size = 0x12000, scoped, tag = 'internal scratch']
  #allocation2 [shape = 'f32[8,128]{1,0:T(8,128)}', space=vmem, size = 0x1000, scoped, tag = 'scratch operand']
  #allocation3 [shape = 'f32[8,128]{1,0:T(8,128)}', space=vmem, size = 0x1000, scoped, tag = 'scratch operand']
  %s0 = inlined_call_operand.vmem [shape: f32[32,512], index: 0, kind: input, shape index: {}]
  %s1 = inlined_call_operand.vmem [shape: bf16[128,512], index: 1, kind: input, shape index: {}]
  %s2 = inlined_call_operand.vmem [shape: bf16[32,128], index: 2, kind: output, shape index: {}]
  %s3 = sld [smem:[#allocation0]]
  $region18: #{network_forward.4} parent=0
    _
  %s5 = ssub.s32 1, %s3
  %s6 = scalar_select 0, %s5, %s3
  // Predicated region
  $region2: #{network_forward.4} parent=0 // pred_check
    _
  $region3: #{network_forward.4} parent=0 // pred_check_branch
    %8 = sbr.rel (0) target = $region5
  $region4: #{network_forward.4} parent=0 // pred_region
    _
  $region5: #{network_forward.4} parent=0 // pred_fallthru
    _
  // Predicated region
  $region6: #{network_forward.4} parent=0 // pred_check
    _
  $region7: #{network_forward.4} parent=0 // pred_check_branch
    %10 = sbr.rel (0) target = $region9
  $region8: #{network_forward.4} parent=0 // pred_region
    _
  $region9: #{network_forward.4} parent=0 // pred_fallthru
    _
  %12 = vst [vmem:[#allocation2] sm:$0xff] 0.0
  %13 = vst [vmem:[#allocation3] sm:$0xff] 0.0
  %v14 = vld [vmem:[%s0] sm:$0xff]
  %v15 = vld [vmem:[%s0 + $0x8] sm:$0xff]
  %v16 = vld [vmem:[%s0 + $0x10] sm:$0xff]
  %v17 = vld [vmem:[%s0 + $0x18] sm:$0xff]
  %v18 = vld [vmem:[#allocation2] sm:$0xff]
  %v19 = vpack.c.bf16 %v18, %v18
  %v20 = vld [vmem:[%s1] sm:$0xff]
  %v21 = vld [vmem:[%s1 + $0x8] sm:$0xff]
  %v22 = vld [vmem:[%s1 + $0x10] sm:$0xff]
  %v23 = vld [vmem:[%s1 + $0x18] sm:$0xff]
  %v24 = vld [vmem:[%s1 + $0x20] sm:$0xff]
  %v25 = vld [vmem:[%s1 + $0x28] sm:$0xff]
  %v26 = vld [vmem:[%s1 + $0x30] sm:$0xff]
  %v27 = vld [vmem:[%s1 + $0x38] sm:$0xff]
  %v28 = vld [vmem:[%s1 + $0x40] sm:$0xff]
  %v29 = vld [vmem:[%s1 + $0x48] sm:$0xff]
  %v30 = vld [vmem:[%s1 + $0x50] sm:$0xff]
  %v31 = vld [vmem:[%s1 + $0x58] sm:$0xff]
  %v32 = vld [vmem:[%s1 + $0x60] sm:$0xff]
  %v33 = vld [vmem:[%s1 + $0x68] sm:$0xff]
  %v34 = vld [vmem:[%s1 + $0x70] sm:$0xff]
  %v35 = vld [vmem:[%s1 + $0x78] sm:$0xff]
  %v36 = vld [vmem:[%s1 + $0x80] sm:$0xff]
  %v37 = vld [vmem:[%s1 + $0x88] sm:$0xff]
  %v38 = vld [vmem:[%s1 + $0x90] sm:$0xff]
  %v39 = vld [vmem:[%s1 + $0x98] sm:$0xff]
  %v40 = vld [vmem:[%s1 + $0xa0] sm:$0xff]
  %v41 = vld [vmem:[%s1 + $0xa8] sm:$0xff]
  %v42 = vld [vmem:[%s1 + $0xb0] sm:$0xff]
  %v43 = vld [vmem:[%s1 + $0xb8] sm:$0xff]
  %v44 = vld [vmem:[%s1 + $0xc0] sm:$0xff]
  %v45 = vld [vmem:[%s1 + $0xc8] sm:$0xff]
  %v46 = vld [vmem:[%s1 + $0xd0] sm:$0xff]
  %v47 = vld [vmem:[%s1 + $0xd8] sm:$0xff]
  %v48 = vld [vmem:[%s1 + $0xe0] sm:$0xff]
  %v49 = vld [vmem:[%s1 + $0xe8] sm:$0xff]
  %v50 = vld [vmem:[%s1 + $0xf0] sm:$0xff]
  %v51 = vld [vmem:[%s1 + $0xf8] sm:$0xff]
  %v84 = vunpack.c.l.b16 %v20
  %v85 = vunpack.c.h.b16 %v20
  %v86 = vunpack.c.l.b16 %v21
  %v87 = vunpack.c.h.b16 %v21
  %v88 = vunpack.c.l.b16 %v22
  %v89 = vunpack.c.h.b16 %v22
  %v90 = vunpack.c.l.b16 %v23
  %v91 = vunpack.c.h.b16 %v23
  %v92 = vunpack.c.l.b16 %v24
  %v93 = vunpack.c.h.b16 %v24
  %v94 = vunpack.c.l.b16 %v25
  %v95 = vunpack.c.h.b16 %v25
  %v96 = vunpack.c.l.b16 %v26
  %v97 = vunpack.c.h.b16 %v26
  %v98 = vunpack.c.l.b16 %v27
  %v99 = vunpack.c.h.b16 %v27
  %v100 = vunpack.c.l.b16 %v28
  %v101 = vunpack.c.h.b16 %v28
  %v102 = vunpack.c.l.b16 %v29
  %v103 = vunpack.c.h.b16 %v29
  %v104 = vunpack.c.l.b16 %v30
  %v105 = vunpack.c.h.b16 %v30
  %v106 = vunpack.c.l.b16 %v31
  %v107 = vunpack.c.h.b16 %v31
  %v108 = vunpack.c.l.b16 %v32
  %v109 = vunpack.c.h.b16 %v32
  %v110 = vunpack.c.l.b16 %v33
  %v111 = vunpack.c.h.b16 %v33
  %v112 = vunpack.c.l.b16 %v34
  %v113 = vunpack.c.h.b16 %v34
  %v114 = vunpack.c.l.b16 %v35
  %v115 = vunpack.c.h.b16 %v35
  %v116 = vunpack.c.l.b16 %v36
  %v117 = vunpack.c.h.b16 %v36
  %v118 = vunpack.c.l.b16 %v37
  %v119 = vunpack.c.h.b16 %v37
  %v120 = vunpack.c.l.b16 %v38
  %v121 = vunpack.c.h.b16 %v38
  %v122 = vunpack.c.l.b16 %v39
  %v123 = vunpack.c.h.b16 %v39
  %v124 = vunpack.c.l.b16 %v40
  %v125 = vunpack.c.h.b16 %v40
  %v126 = vunpack.c.l.b16 %v41
  %v127 = vunpack.c.h.b16 %v41
  %v128 = vunpack.c.l.b16 %v42
  %v129 = vunpack.c.h.b16 %v42
  %v130 = vunpack.c.l.b16 %v43
  %v131 = vunpack.c.h.b16 %v43
  %v132 = vunpack.c.l.b16 %v44
  %v133 = vunpack.c.h.b16 %v44
  %v134 = vunpack.c.l.b16 %v45
  %v135 = vunpack.c.h.b16 %v45
  %v136 = vunpack.c.l.b16 %v46
  %v137 = vunpack.c.h.b16 %v46
  %v138 = vunpack.c.l.b16 %v47
  %v139 = vunpack.c.h.b16 %v47
  %v140 = vunpack.c.l.b16 %v48
  %v141 = vunpack.c.h.b16 %v48
  %v142 = vunpack.c.l.b16 %v49
  %v143 = vunpack.c.h.b16 %v49
  %v144 = vunpack.c.l.b16 %v50
  %v145 = vunpack.c.h.b16 %v50
  %v146 = vunpack.c.l.b16 %v51
  %v147 = vunpack.c.h.b16 %v51
  %v148 = vpack.c.b16 %v88, %v84
  %v149 = vpack.c.b16 %v89, %v85
  %v150 = vpack.c.b16 %v90, %v86
  %v151 = vpack.c.b16 %v91, %v87
  %v152 = vpack.c.b16 %v96, %v92
  %v153 = vpack.c.b16 %v97, %v93
  %v154 = vpack.c.b16 %v98, %v94
  %v155 = vpack.c.b16 %v99, %v95
  %v156 = vpack.c.b16 %v104, %v100
  %v157 = vpack.c.b16 %v105, %v101
  %v158 = vpack.c.b16 %v106, %v102
  %v159 = vpack.c.b16 %v107, %v103
  %v160 = vpack.c.b16 %v112, %v108
  %v161 = vpack.c.b16 %v113, %v109
  %v162 = vpack.c.b16 %v114, %v110
  %v163 = vpack.c.b16 %v115, %v111
  %v164 = vpack.c.b16 %v120, %v116
  %v165 = vpack.c.b16 %v121, %v117
  %v166 = vpack.c.b16 %v122, %v118
  %v167 = vpack.c.b16 %v123, %v119
  %v168 = vpack.c.b16 %v128, %v124
  %v169 = vpack.c.b16 %v129, %v125
  %v170 = vpack.c.b16 %v130, %v126
  %v171 = vpack.c.b16 %v131, %v127
  %v172 = vpack.c.b16 %v136, %v132
  %v173 = vpack.c.b16 %v137, %v133
  %v174 = vpack.c.b16 %v138, %v134
  %v175 = vpack.c.b16 %v139, %v135
  %v176 = vpack.c.b16 %v144, %v140
  %v177 = vpack.c.b16 %v145, %v141
  %v178 = vpack.c.b16 %v146, %v142
  %v179 = vpack.c.b16 %v147, %v143
  %212 = vmatprep.subr.bf16.mxu0 %v177
  %213 = vmatpush1.bf16.msra.mxu0 %v176
  %214 = vmatprep.subr.bf16.mxu0 %v173
  %215 = vmatpush1.bf16.msra.mxu0 %v172
  %216 = vmatprep.subr.bf16.mxu0 %v169
  %217 = vmatpush1.bf16.msra.mxu0 %v168
  %218 = vmatprep.subr.bf16.mxu0 %v165
  %219 = vmatpush1.bf16.msra.mxu0 %v164
  %220 = vmatprep.subr.bf16.mxu0 %v161
  %221 = vmatpush1.bf16.msra.mxu0 %v160
  %222 = vmatprep.subr.bf16.mxu0 %v157
  %223 = vmatpush1.bf16.msra.mxu0 %v156
  %224 = vmatprep.subr.bf16.mxu0 %v153
  %225 = vmatpush1.bf16.msra.mxu0 %v152
  %226 = vmatprep.subr.bf16.mxu0 %v149
  %227 = vmatpush1.bf16.msra.mxu0 %v148
  %228 = vmatprep.subr.bf16.mxu0 0
  %229 = vmatpush2.bf16.msra.mxu0 0
  %230 = vmatprep.subr.bf16.mxu0 0
  %231 = vmatpush2.bf16.msra.mxu0 0
  %232 = vmatprep.subr.bf16.mxu0 0
  %233 = vmatpush2.bf16.msra.mxu0 0
  %234 = vmatprep.subr.bf16.mxu0 0
  %235 = vmatpush2.bf16.msra.mxu0 0
  %236 = vmatprep.subr.bf16.mxu0 0
  %237 = vmatpush2.bf16.msra.mxu0 0
  %238 = vmatprep.subr.bf16.mxu0 0
  %239 = vmatpush2.bf16.msra.mxu0 0
  %240 = vmatprep.subr.bf16.mxu0 0
  %241 = vmatpush2.bf16.msra.mxu0 0
  %242 = vmatprep.subr.bf16.mxu0 0
  %243 = vmatpush2.bf16.msra.mxu0 0
  %244 = vmatprep.mubr.bf16.mxu0 0
  %245 = vmatmul.mubr.bf16.gmra.mxu0 %v19
  %v246 = vpop.f32.mrf.mxu0
  %v247 = vadd.f32 0.0, %v246
  %v248 = vpop.f32.mrf.mxu0
  %v249 = vadd.f32 0.0, %v248
  %v250 = vpop.f32.mrf.mxu0
  %v251 = vpop.f32.mrf.mxu0
  %252 = vdwg.mxu0
  %253 = vmatprep.subr.bf16.mxu0 %v179
  %254 = vmatpush1.bf16.msra.mxu0 %v178
  %255 = vmatprep.subr.bf16.mxu0 %v175
  %256 = vmatpush1.bf16.msra.mxu0 %v174
  %257 = vmatprep.subr.bf16.mxu0 %v171
  %258 = vmatpush1.bf16.msra.mxu0 %v170
  %259 = vmatprep.subr.bf16.mxu0 %v167
  %260 = vmatpush1.bf16.msra.mxu0 %v166
  %261 = vmatprep.subr.bf16.mxu0 %v163
  %262 = vmatpush1.bf16.msra.mxu0 %v162
  %263 = vmatprep.subr.bf16.mxu0 %v159
  %264 = vmatpush1.bf16.msra.mxu0 %v158
  %265 = vmatprep.subr.bf16.mxu0 %v155
  %266 = vmatpush1.bf16.msra.mxu0 %v154
  %267 = vmatprep.subr.bf16.mxu0 %v151
  %268 = vmatpush1.bf16.msra.mxu0 %v150
  %269 = vmatprep.subr.bf16.mxu0 0
  %270 = vmatpush2.bf16.msra.mxu0 0
  %271 = vmatprep.subr.bf16.mxu0 0
  %272 = vmatpush2.bf16.msra.mxu0 0
  %273 = vmatprep.subr.bf16.mxu0 0
  %274 = vmatpush2.bf16.msra.mxu0 0
  %275 = vmatprep.subr.bf16.mxu0 0
  %276 = vmatpush2.bf16.msra.mxu0 0
  %277 = vmatprep.subr.bf16.mxu0 0
  %278 = vmatpush2.bf16.msra.mxu0 0
  %279 = vmatprep.subr.bf16.mxu0 0
  %280 = vmatpush2.bf16.msra.mxu0 0
  %281 = vmatprep.subr.bf16.mxu0 0
  %282 = vmatpush2.bf16.msra.mxu0 0
  %283 = vmatprep.subr.bf16.mxu0 0
  %284 = vmatpush2.bf16.msra.mxu0 0
  %285 = vmatprep.mubr.bf16.mxu0 0
  %286 = vmatmul.mubr.bf16.gmra.mxu0 %v19
  %v287 = vpop.f32.mrf.mxu0
  %v288 = vadd.f32 0.0, %v287
  %v289 = vpop.f32.mrf.mxu0
  %v290 = vadd.f32 0.0, %v289
  %v291 = vpop.f32.mrf.mxu0
  %v292 = vpop.f32.mrf.mxu0
  %293 = vdwg.mxu0
  %v294 = vadd.f32 %v14, %v247
  %v295 = vadd.f32 %v15, %v249
  %v296 = vadd.f32 %v16, %v288
  %v297 = vadd.f32 %v17, %v290
  %v298 = vxor.u32 %v294, 2147483648
  %v299 = vmul.f32 %v298, 1.442695
  %v300 = vpow.pop %v299
  %v301 = vadd.f32 %v300, 1.0
  %v302 = vrcp.pop %v301
  %v303 = vmul.f32 1.0, %v302
  %v304 = vxor.u32 %v295, 2147483648
  %v305 = vmul.f32 %v304, 1.442695
  %v306 = vpow.pop %v305
  %v307 = vadd.f32 %v306, 1.0
  %v308 = vrcp.pop %v307
  %v309 = vmul.f32 1.0, %v308
  %v310 = vtanh.pop %v296
  %v311 = vxor.u32 %v297, 2147483648
  %v312 = vmul.f32 %v311, 1.442695
  %v313 = vpow.pop %v312
  %v314 = vadd.f32 %v313, 1.0
  %v315 = vrcp.pop %v314
  %v316 = vmul.f32 1.0, %v315
  %v317 = vld [vmem:[#allocation3] sm:$0xff]
  %v318 = vmul.f32 %v309, %v317
  %v319 = vmul.f32 %v303, %v310
  %v320 = vadd.f32 %v318, %v319
  %v321 = vtanh.pop %v320
  %v322 = vmul.f32 %v316, %v321
  %323 = vst [vmem:[#allocation3] sm:$0xff] %v320
  %324 = vst [vmem:[#allocation2] sm:$0xff] %v322
  %v325 = vpack.c.bf16 %v322, %v322
  %326 = vst [vmem:[%s2] sm:$0xf] %v325
  %v327 = vld [vmem:[%s0 + $0x20] sm:$0xff]
  %v328 = vld [vmem:[%s0 + $0x28] sm:$0xff]
  %v329 = vld [vmem:[%s0 + $0x30] sm:$0xff]
  %v330 = vld [vmem:[%s0 + $0x38] sm:$0xff]
  %v331 = vld [vmem:[#allocation2] sm:$0xff]
  %v332 = vpack.c.bf16 %v331, %v331
  %v333 = vld [vmem:[%s1] sm:$0xff]
  %v334 = vld [vmem:[%s1 + $0x8] sm:$0xff]
  %v335 = vld [vmem:[%s1 + $0x10] sm:$0xff]
  %v336 = vld [vmem:[%s1 + $0x18] sm:$0xff]
  %v337 = vld [vmem:[%s1 + $0x20] sm:$0xff]
  %v338 = vld [vmem:[%s1 + $0x28] sm:$0xff]
  %v339 = vld [vmem:[%s1 + $0x30] sm:$0xff]
  %v340 = vld [vmem:[%s1 + $0x38] sm:$0xff]
  %v341 = vld [vmem:[%s1 + $0x40] sm:$0xff]
  %v342 = vld [vmem:[%s1 + $0x48] sm:$0xff]
  %v343 = vld [vmem:[%s1 + $0x50] sm:$0xff]
  %v344 = vld [vmem:[%s1 + $0x58] sm:$0xff]
  %v345 = vld [vmem:[%s1 + $0x60] sm:$0xff]
  %v346 = vld [vmem:[%s1 + $0x68] sm:$0xff]
  %v347 = vld [vmem:[%s1 + $0x70] sm:$0xff]
  %v348 = vld [vmem:[%s1 + $0x78] sm:$0xff]
  %v349 = vld [vmem:[%s1 + $0x80] sm:$0xff]
  %v350 = vld [vmem:[%s1 + $0x88] sm:$0xff]
  %v351 = vld [vmem:[%s1 + $0x90] sm:$0xff]
  %v352 = vld [vmem:[%s1 + $0x98] sm:$0xff]
  %v353 = vld [vmem:[%s1 + $0xa0] sm:$0xff]
  %v354 = vld [vmem:[%s1 + $0xa8] sm:$0xff]
  %v355 = vld [vmem:[%s1 + $0xb0] sm:$0xff]
  %v356 = vld [vmem:[%s1 + $0xb8] sm:$0xff]
  %v357 = vld [vmem:[%s1 + $0xc0] sm:$0xff]
  %v358 = vld [vmem:[%s1 + $0xc8] sm:$0xff]
  %v359 = vld [vmem:[%s1 + $0xd0] sm:$0xff]
  %v360 = vld [vmem:[%s1 + $0xd8] sm:$0xff]
  %v361 = vld [vmem:[%s1 + $0xe0] sm:$0xff]
  %v362 = vld [vmem:[%s1 + $0xe8] sm:$0xff]
  %v363 = vld [vmem:[%s1 + $0xf0] sm:$0xff]
  %v364 = vld [vmem:[%s1 + $0xf8] sm:$0xff]
  %v397 = vunpack.c.l.b16 %v333
  %v398 = vunpack.c.h.b16 %v333
  %v399 = vunpack.c.l.b16 %v334
  %v400 = vunpack.c.h.b16 %v334
  %v401 = vunpack.c.l.b16 %v335
  %v402 = vunpack.c.h.b16 %v335
  %v403 = vunpack.c.l.b16 %v336
  %v404 = vunpack.c.h.b16 %v336
  %v405 = vunpack.c.l.b16 %v337
  %v406 = vunpack.c.h.b16 %v337
  %v407 = vunpack.c.l.b16 %v338
  %v408 = vunpack.c.h.b16 %v338
  %v409 = vunpack.c.l.b16 %v339
  %v410 = vunpack.c.h.b16 %v339
  %v411 = vunpack.c.l.b16 %v340
  %v412 = vunpack.c.h.b16 %v340
  %v413 = vunpack.c.l.b16 %v341
  %v414 = vunpack.c.h.b16 %v341
  %v415 = vunpack.c.l.b16 %v342
  %v416 = vunpack.c.h.b16 %v342
  %v417 = vunpack.c.l.b16 %v343
  %v418 = vunpack.c.h.b16 %v343
  %v419 = vunpack.c.l.b16 %v344
  %v420 = vunpack.c.h.b16 %v344
  %v421 = vunpack.c.l.b16 %v345
  %v422 = vunpack.c.h.b16 %v345
  %v423 = vunpack.c.l.b16 %v346
  %v424 = vunpack.c.h.b16 %v346
  %v425 = vunpack.c.l.b16 %v347
  %v426 = vunpack.c.h.b16 %v347
  %v427 = vunpack.c.l.b16 %v348
  %v428 = vunpack.c.h.b16 %v348
  %v429 = vunpack.c.l.b16 %v349
  %v430 = vunpack.c.h.b16 %v349
  %v431 = vunpack.c.l.b16 %v350
  %v432 = vunpack.c.h.b16 %v350
  %v433 = vunpack.c.l.b16 %v351
  %v434 = vunpack.c.h.b16 %v351
  %v435 = vunpack.c.l.b16 %v352
  %v436 = vunpack.c.h.b16 %v352
  %v437 = vunpack.c.l.b16 %v353
  %v438 = vunpack.c.h.b16 %v353
  %v439 = vunpack.c.l.b16 %v354
  %v440 = vunpack.c.h.b16 %v354
  %v441 = vunpack.c.l.b16 %v355
  %v442 = vunpack.c.h.b16 %v355
  %v443 = vunpack.c.l.b16 %v356
  %v444 = vunpack.c.h.b16 %v356
  %v445 = vunpack.c.l.b16 %v357
  %v446 = vunpack.c.h.b16 %v357
  %v447 = vunpack.c.l.b16 %v358
  %v448 = vunpack.c.h.b16 %v358
  %v449 = vunpack.c.l.b16 %v359
  %v450 = vunpack.c.h.b16 %v359
  %v451 = vunpack.c.l.b16 %v360
  %v452 = vunpack.c.h.b16 %v360
  %v453 = vunpack.c.l.b16 %v361
  %v454 = vunpack.c.h.b16 %v361
  %v455 = vunpack.c.l.b16 %v362
  %v456 = vunpack.c.h.b16 %v362
  %v457 = vunpack.c.l.b16 %v363
  %v458 = vunpack.c.h.b16 %v363
  %v459 = vunpack.c.l.b16 %v364
  %v460 = vunpack.c.h.b16 %v364
  %v461 = vpack.c.b16 %v401, %v397
  %v462 = vpack.c.b16 %v402, %v398
  %v463 = vpack.c.b16 %v403, %v399
  %v464 = vpack.c.b16 %v404, %v400
  %v465 = vpack.c.b16 %v409, %v405
  %v466 = vpack.c.b16 %v410, %v406
  %v467 = vpack.c.b16 %v411, %v407
  %v468 = vpack.c.b16 %v412, %v408
  %v469 = vpack.c.b16 %v417, %v413
  %v470 = vpack.c.b16 %v418, %v414
  %v471 = vpack.c.b16 %v419, %v415
  %v472 = vpack.c.b16 %v420, %v416
  %v473 = vpack.c.b16 %v425, %v421
  %v474 = vpack.c.b16 %v426, %v422
  %v475 = vpack.c.b16 %v427, %v423
  %v476 = vpack.c.b16 %v428, %v424
  %v477 = vpack.c.b16 %v433, %v429
  %v478 = vpack.c.b16 %v434, %v430
  %v479 = vpack.c.b16 %v435, %v431
  %v480 = vpack.c.b16 %v436, %v432
  %v481 = vpack.c.b16 %v441, %v437
  %v482 = vpack.c.b16 %v442, %v438
  %v483 = vpack.c.b16 %v443, %v439
  %v484 = vpack.c.b16 %v444, %v440
  %v485 = vpack.c.b16 %v449, %v445
  %v486 = vpack.c.b16 %v450, %v446
  %v487 = vpack.c.b16 %v451, %v447
  %v488 = vpack.c.b16 %v452, %v448
  %v489 = vpack.c.b16 %v457, %v453
  %v490 = vpack.c.b16 %v458, %v454
  %v491 = vpack.c.b16 %v459, %v455
  %v492 = vpack.c.b16 %v460, %v456
  %525 = vmatprep.subr.bf16.mxu0 %v490
  %526 = vmatpush1.bf16.msra.mxu0 %v489
  %527 = vmatprep.subr.bf16.mxu0 %v486
  %528 = vmatpush1.bf16.msra.mxu0 %v485
  %529 = vmatprep.subr.bf16.mxu0 %v482
  %530 = vmatpush1.bf16.msra.mxu0 %v481
  %531 = vmatprep.subr.bf16.mxu0 %v478
  %532 = vmatpush1.bf16.msra.mxu0 %v477
  %533 = vmatprep.subr.bf16.mxu0 %v474
  %534 = vmatpush1.bf16.msra.mxu0 %v473
  %535 = vmatprep.subr.bf16.mxu0 %v470
  %536 = vmatpush1.bf16.msra.mxu0 %v469
  %537 = vmatprep.subr.bf16.mxu0 %v466
  %538 = vmatpush1.bf16.msra.mxu0 %v465
  %539 = vmatprep.subr.bf16.mxu0 %v462
  %540 = vmatpush1.bf16.msra.mxu0 %v461
  %541 = vmatprep.subr.bf16.mxu0 0
  %542 = vmatpush2.bf16.msra.mxu0 0
  %543 = vmatprep.subr.bf16.mxu0 0
  %544 = vmatpush2.bf16.msra.mxu0 0
  %545 = vmatprep.subr.bf16.mxu0 0
  %546 = vmatpush2.bf16.msra.mxu0 0
  %547 = vmatprep.subr.bf16.mxu0 0
  %548 = vmatpush2.bf16.msra.mxu0 0
  %549 = vmatprep.subr.bf16.mxu0 0
  %550 = vmatpush2.bf16.msra.mxu0 0
  %551 = vmatprep.subr.bf16.mxu0 0
  %552 = vmatpush2.bf16.msra.mxu0 0
  %553 = vmatprep.subr.bf16.mxu0 0
  %554 = vmatpush2.bf16.msra.mxu0 0
  %555 = vmatprep.subr.bf16.mxu0 0
  %556 = vmatpush2.bf16.msra.mxu0 0
  %557 = vmatprep.mubr.bf16.mxu0 0
  %558 = vmatmul.mubr.bf16.gmra.mxu0 %v332
  %v559 = vpop.f32.mrf.mxu0
  %v560 = vadd.f32 0.0, %v559
  %v561 = vpop.f32.mrf.mxu0
  %v562 = vadd.f32 0.0, %v561
  %v563 = vpop.f32.mrf.mxu0
  %v564 = vpop.f32.mrf.mxu0
  %565 = vdwg.mxu0
  %566 = vmatprep.subr.bf16.mxu0 %v492
  %567 = vmatpush1.bf16.msra.mxu0 %v491
  %568 = vmatprep.subr.bf16.mxu0 %v488
  %569 = vmatpush1.bf16.msra.mxu0 %v487
  %570 = vmatprep.subr.bf16.mxu0 %v484
  %571 = vmatpush1.bf16.msra.mxu0 %v483
  %572 = vmatprep.subr.bf16.mxu0 %v480
  %573 = vmatpush1.bf16.msra.mxu0 %v479
  %574 = vmatprep.subr.bf16.mxu0 %v476
  %575 = vmatpush1.bf16.msra.mxu0 %v475
  %576 = vmatprep.subr.bf16.mxu0 %v472
  %577 = vmatpush1.bf16.msra.mxu0 %v471
  %578 = vmatprep.subr.bf16.mxu0 %v468
  %579 = vmatpush1.bf16.msra.mxu0 %v467
  %580 = vmatprep.subr.bf16.mxu0 %v464
  %581 = vmatpush1.bf16.msra.mxu0 %v463
  %582 = vmatprep.subr.bf16.mxu0 0
  %583 = vmatpush2.bf16.msra.mxu0 0
  %584 = vmatprep.subr.bf16.mxu0 0
  %585 = vmatpush2.bf16.msra.mxu0 0
  %586 = vmatprep.subr.bf16.mxu0 0
  %587 = vmatpush2.bf16.msra.mxu0 0
  %588 = vmatprep.subr.bf16.mxu0 0
  %589 = vmatpush2.bf16.msra.mxu0 0
  %590 = vmatprep.subr.bf16.mxu0 0
  %591 = vmatpush2.bf16.msra.mxu0 0
  %592 = vmatprep.subr.bf16.mxu0 0
  %593 = vmatpush2.bf16.msra.mxu0 0
  %594 = vmatprep.subr.bf16.mxu0 0
  %595 = vmatpush2.bf16.msra.mxu0 0
  %596 = vmatprep.subr.bf16.mxu0 0
  %597 = vmatpush2.bf16.msra.mxu0 0
  %598 = vmatprep.mubr.bf16.mxu0 0
  %599 = vmatmul.mubr.bf16.gmra.mxu0 %v332
  %v600 = vpop.f32.mrf.mxu0
  %v601 = vadd.f32 0.0, %v600
  %v602 = vpop.f32.mrf.mxu0
  %v603 = vadd.f32 0.0, %v602
  %v604 = vpop.f32.mrf.mxu0
  %v605 = vpop.f32.mrf.mxu0
  %606 = vdwg.mxu0
  %v607 = vadd.f32 %v327, %v560
  %v608 = vadd.f32 %v328, %v562
  %v609 = vadd.f32 %v329, %v601
  %v610 = vadd.f32 %v330, %v603
  %v611 = vxor.u32 %v607, 2147483648
  %v612 = vmul.f32 %v611, 1.442695
  %v613 = vpow.pop %v612
  %v614 = vadd.f32 %v613, 1.0
  %v615 = vrcp.pop %v614
  %v616 = vmul.f32 1.0, %v615
  %v617 = vxor.u32 %v608, 2147483648
  %v618 = vmul.f32 %v617, 1.442695
  %v619 = vpow.pop %v618
  %v620 = vadd.f32 %v619, 1.0
  %v621 = vrcp.pop %v620
  %v622 = vmul.f32 1.0, %v621
  %v623 = vtanh.pop %v609
  %v624 = vxor.u32 %v610, 2147483648
  %v625 = vmul.f32 %v624, 1.442695
  %v626 = vpow.pop %v625
  %v627 = vadd.f32 %v626, 1.0
  %v628 = vrcp.pop %v627
  %v629 = vmul.f32 1.0, %v628
  %v630 = vld [vmem:[#allocation3] sm:$0xff]
  %v631 = vmul.f32 %v622, %v630
  %v632 = vmul.f32 %v616, %v623
  %v633 = vadd.f32 %v631, %v632
  %v634 = vtanh.pop %v633
  %v635 = vmul.f32 %v629, %v634
  %636 = vst [vmem:[#allocation3] sm:$0xff] %v633
  %637 = vst [vmem:[#allocation2] sm:$0xff] %v635
  %v638 = vpack.c.bf16 %v635, %v635
  %639 = vst [vmem:[%s2 + $0x4] sm:$0xf] %v638
  %v640 = vld [vmem:[%s0 + $0x40] sm:$0xff]
  %v641 = vld [vmem:[%s0 + $0x48] sm:$0xff]
  %v642 = vld [vmem:[%s0 + $0x50] sm:$0xff]
  %v643 = vld [vmem:[%s0 + $0x58] sm:$0xff]
  %v644 = vld [vmem:[#allocation2] sm:$0xff]
  %v645 = vpack.c.bf16 %v644, %v644
  %v646 = vld [vmem:[%s1] sm:$0xff]
  %v647 = vld [vmem:[%s1 + $0x8] sm:$0xff]
  %v648 = vld [vmem:[%s1 + $0x10] sm:$0xff]
  %v649 = vld [vmem:[%s1 + $0x18] sm:$0xff]
  %v650 = vld [vmem:[%s1 + $0x20] sm:$0xff]
  %v651 = vld [vmem:[%s1 + $0x28] sm:$0xff]
  %v652 = vld [vmem:[%s1 + $0x30] sm:$0xff]
  %v653 = vld [vmem:[%s1 + $0x38] sm:$0xff]
  %v654 = vld [vmem:[%s1 + $0x40] sm:$0xff]
  %v655 = vld [vmem:[%s1 + $0x48] sm:$0xff]
  %v656 = vld [vmem:[%s1 + $0x50] sm:$0xff]
  %v657 = vld [vmem:[%s1 + $0x58] sm:$0xff]
  %v658 = vld [vmem:[%s1 + $0x60] sm:$0xff]
  %v659 = vld [vmem:[%s1 + $0x68] sm:$0xff]
  %v660 = vld [vmem:[%s1 + $0x70] sm:$0xff]
  %v661 = vld [vmem:[%s1 + $0x78] sm:$0xff]
  %v662 = vld [vmem:[%s1 + $0x80] sm:$0xff]
  %v663 = vld [vmem:[%s1 + $0x88] sm:$0xff]
  %v664 = vld [vmem:[%s1 + $0x90] sm:$0xff]
  %v665 = vld [vmem:[%s1 + $0x98] sm:$0xff]
  %v666 = vld [vmem:[%s1 + $0xa0] sm:$0xff]
  %v667 = vld [vmem:[%s1 + $0xa8] sm:$0xff]
  %v668 = vld [vmem:[%s1 + $0xb0] sm:$0xff]
  %v669 = vld [vmem:[%s1 + $0xb8] sm:$0xff]
  %v670 = vld [vmem:[%s1 + $0xc0] sm:$0xff]
  %v671 = vld [vmem:[%s1 + $0xc8] sm:$0xff]
  %v672 = vld [vmem:[%s1 + $0xd0] sm:$0xff]
  %v673 = vld [vmem:[%s1 + $0xd8] sm:$0xff]
  %v674 = vld [vmem:[%s1 + $0xe0] sm:$0xff]
  %v675 = vld [vmem:[%s1 + $0xe8] sm:$0xff]
  %v676 = vld [vmem:[%s1 + $0xf0] sm:$0xff]
  %v677 = vld [vmem:[%s1 + $0xf8] sm:$0xff]
  %v710 = vunpack.c.l.b16 %v646
  %v711 = vunpack.c.h.b16 %v646
  %v712 = vunpack.c.l.b16 %v647
  %v713 = vunpack.c.h.b16 %v647
  %v714 = vunpack.c.l.b16 %v648
  %v715 = vunpack.c.h.b16 %v648
  %v716 = vunpack.c.l.b16 %v649
  %v717 = vunpack.c.h.b16 %v649
  %v718 = vunpack.c.l.b16 %v650
  %v719 = vunpack.c.h.b16 %v650
  %v720 = vunpack.c.l.b16 %v651
  %v721 = vunpack.c.h.b16 %v651
  %v722 = vunpack.c.l.b16 %v652
  %v723 = vunpack.c.h.b16 %v652
  %v724 = vunpack.c.l.b16 %v653
  %v725 = vunpack.c.h.b16 %v653
  %v726 = vunpack.c.l.b16 %v654
  %v727 = vunpack.c.h.b16 %v654
  %v728 = vunpack.c.l.b16 %v655
  %v729 = vunpack.c.h.b16 %v655
  %v730 = vunpack.c.l.b16 %v656
  %v731 = vunpack.c.h.b16 %v656
  %v732 = vunpack.c.l.b16 %v657
  %v733 = vunpack.c.h.b16 %v657
  %v734 = vunpack.c.l.b16 %v658
  %v735 = vunpack.c.h.b16 %v658
  %v736 = vunpack.c.l.b16 %v659
  %v737 = vunpack.c.h.b16 %v659
  %v738 = vunpack.c.l.b16 %v660
  %v739 = vunpack.c.h.b16 %v660
  %v740 = vunpack.c.l.b16 %v661
  %v741 = vunpack.c.h.b16 %v661
  %v742 = vunpack.c.l.b16 %v662
  %v743 = vunpack.c.h.b16 %v662
  %v744 = vunpack.c.l.b16 %v663
  %v745 = vunpack.c.h.b16 %v663
  %v746 = vunpack.c.l.b16 %v664
  %v747 = vunpack.c.h.b16 %v664
  %v748 = vunpack.c.l.b16 %v665
  %v749 = vunpack.c.h.b16 %v665
  %v750 = vunpack.c.l.b16 %v666
  %v751 = vunpack.c.h.b16 %v666
  %v752 = vunpack.c.l.b16 %v667
  %v753 = vunpack.c.h.b16 %v667
  %v754 = vunpack.c.l.b16 %v668
  %v755 = vunpack.c.h.b16 %v668
  %v756 = vunpack.c.l.b16 %v669
  %v757 = vunpack.c.h.b16 %v669
  %v758 = vunpack.c.l.b16 %v670
  %v759 = vunpack.c.h.b16 %v670
  %v760 = vunpack.c.l.b16 %v671
  %v761 = vunpack.c.h.b16 %v671
  %v762 = vunpack.c.l.b16 %v672
  %v763 = vunpack.c.h.b16 %v672
  %v764 = vunpack.c.l.b16 %v673
  %v765 = vunpack.c.h.b16 %v673
  %v766 = vunpack.c.l.b16 %v674
  %v767 = vunpack.c.h.b16 %v674
  %v768 = vunpack.c.l.b16 %v675
  %v769 = vunpack.c.h.b16 %v675
  %v770 = vunpack.c.l.b16 %v676
  %v771 = vunpack.c.h.b16 %v676
  %v772 = vunpack.c.l.b16 %v677
  %v773 = vunpack.c.h.b16 %v677
  %v774 = vpack.c.b16 %v714, %v710
  %v775 = vpack.c.b16 %v715, %v711
  %v776 = vpack.c.b16 %v716, %v712
  %v777 = vpack.c.b16 %v717, %v713
  %v778 = vpack.c.b16 %v722, %v718
  %v779 = vpack.c.b16 %v723, %v719
  %v780 = vpack.c.b16 %v724, %v720
  %v781 = vpack.c.b16 %v725, %v721
  %v782 = vpack.c.b16 %v730, %v726
  %v783 = vpack.c.b16 %v731, %v727
  %v784 = vpack.c.b16 %v732, %v728
  %v785 = vpack.c.b16 %v733, %v729
  %v786 = vpack.c.b16 %v738, %v734
  %v787 = vpack.c.b16 %v739, %v735
  %v788 = vpack.c.b16 %v740, %v736
  %v789 = vpack.c.b16 %v741, %v737
  %v790 = vpack.c.b16 %v746, %v742
  %v791 = vpack.c.b16 %v747, %v743
  %v792 = vpack.c.b16 %v748, %v744
  %v793 = vpack.c.b16 %v749, %v745
  %v794 = vpack.c.b16 %v754, %v750
  %v795 = vpack.c.b16 %v755, %v751
  %v796 = vpack.c.b16 %v756, %v752
  %v797 = vpack.c.b16 %v757, %v753
  %v798 = vpack.c.b16 %v762, %v758
  %v799 = vpack.c.b16 %v763, %v759
  %v800 = vpack.c.b16 %v764, %v760
  %v801 = vpack.c.b16 %v765, %v761
  %v802 = vpack.c.b16 %v770, %v766
  %v803 = vpack.c.b16 %v771, %v767
  %v804 = vpack.c.b16 %v772, %v768
  %v805 = vpack.c.b16 %v773, %v769
  %838 = vmatprep.subr.bf16.mxu0 %v803
  %839 = vmatpush1.bf16.msra.mxu0 %v802
  %840 = vmatprep.subr.bf16.mxu0 %v799
  %841 = vmatpush1.bf16.msra.mxu0 %v798
  %842 = vmatprep.subr.bf16.mxu0 %v795
  %843 = vmatpush1.bf16.msra.mxu0 %v794
  %844 = vmatprep.subr.bf16.mxu0 %v791
  %845 = vmatpush1.bf16.msra.mxu0 %v790
  %846 = vmatprep.subr.bf16.mxu0 %v787
  %847 = vmatpush1.bf16.msra.mxu0 %v786
  %848 = vmatprep.subr.bf16.mxu0 %v783
  %849 = vmatpush1.bf16.msra.mxu0 %v782
  %850 = vmatprep.subr.bf16.mxu0 %v779
  %851 = vmatpush1.bf16.msra.mxu0 %v778
  %852 = vmatprep.subr.bf16.mxu0 %v775
  %853 = vmatpush1.bf16.msra.mxu0 %v774
  %854 = vmatprep.subr.bf16.mxu0 0
  %855 = vmatpush2.bf16.msra.mxu0 0
  %856 = vmatprep.subr.bf16.mxu0 0
  %857 = vmatpush2.bf16.msra.mxu0 0
  %858 = vmatprep.subr.bf16.mxu0 0
  %859 = vmatpush2.bf16.msra.mxu0 0
  %860 = vmatprep.subr.bf16.mxu0 0
  %861 = vmatpush2.bf16.msra.mxu0 0
  %862 = vmatprep.subr.bf16.mxu0 0
  %863 = vmatpush2.bf16.msra.mxu0 0
  %864 = vmatprep.subr.bf16.mxu0 0
  %865 = vmatpush2.bf16.msra.mxu0 0
  %866 = vmatprep.subr.bf16.mxu0 0
  %867 = vmatpush2.bf16.msra.mxu0 0
  %868 = vmatprep.subr.bf16.mxu0 0
  %869 = vmatpush2.bf16.msra.mxu0 0
  %870 = vmatprep.mubr.bf16.mxu0 0
  %871 = vmatmul.mubr.bf16.gmra.mxu0 %v645
  %v872 = vpop.f32.mrf.mxu0
  %v873 = vadd.f32 0.0, %v872
  %v874 = vpop.f32.mrf.mxu0
  %v875 = vadd.f32 0.0, %v874
  %v876 = vpop.f32.mrf.mxu0
  %v877 = vpop.f32.mrf.mxu0
  %878 = vdwg.mxu0
  %879 = vmatprep.subr.bf16.mxu0 %v805
  %880 = vmatpush1.bf16.msra.mxu0 %v804
  %881 = vmatprep.subr.bf16.mxu0 %v801
  %882 = vmatpush1.bf16.msra.mxu0 %v800
  %883 = vmatprep.subr.bf16.mxu0 %v797
  %884 = vmatpush1.bf16.msra.mxu0 %v796
  %885 = vmatprep.subr.bf16.mxu0 %v793
  %886 = vmatpush1.bf16.msra.mxu0 %v792
  %887 = vmatprep.subr.bf16.mxu0 %v789
  %888 = vmatpush1.bf16.msra.mxu0 %v788
  %889 = vmatprep.subr.bf16.mxu0 %v785
  %890 = vmatpush1.bf16.msra.mxu0 %v784
  %891 = vmatprep.subr.bf16.mxu0 %v781
  %892 = vmatpush1.bf16.msra.mxu0 %v780
  %893 = vmatprep.subr.bf16.mxu0 %v777
  %894 = vmatpush1.bf16.msra.mxu0 %v776
  %895 = vmatprep.subr.bf16.mxu0 0
  %896 = vmatpush2.bf16.msra.mxu0 0
  %897 = vmatprep.subr.bf16.mxu0 0
  %898 = vmatpush2.bf16.msra.mxu0 0
  %899 = vmatprep.subr.bf16.mxu0 0
  %900 = vmatpush2.bf16.msra.mxu0 0
  %901 = vmatprep.subr.bf16.mxu0 0
  %902 = vmatpush2.bf16.msra.mxu0 0
  %903 = vmatprep.subr.bf16.mxu0 0
  %904 = vmatpush2.bf16.msra.mxu0 0
  %905 = vmatprep.subr.bf16.mxu0 0
  %906 = vmatpush2.bf16.msra.mxu0 0
  %907 = vmatprep.subr.bf16.mxu0 0
  %908 = vmatpush2.bf16.msra.mxu0 0
  %909 = vmatprep.subr.bf16.mxu0 0
  %910 = vmatpush2.bf16.msra.mxu0 0
  %911 = vmatprep.mubr.bf16.mxu0 0
  %912 = vmatmul.mubr.bf16.gmra.mxu0 %v645
  %v913 = vpop.f32.mrf.mxu0
  %v914 = vadd.f32 0.0, %v913
  %v915 = vpop.f32.mrf.mxu0
  %v916 = vadd.f32 0.0, %v915
  %v917 = vpop.f32.mrf.mxu0
  %v918 = vpop.f32.mrf.mxu0
  %919 = vdwg.mxu0
  %v920 = vadd.f32 %v640, %v873
  %v921 = vadd.f32 %v641, %v875
  %v922 = vadd.f32 %v642, %v914
  %v923 = vadd.f32 %v643, %v916
  %v924 = vxor.u32 %v920, 2147483648
  %v925 = vmul.f32 %v924, 1.442695
  %v926 = vpow.pop %v925
  %v927 = vadd.f32 %v926, 1.0
  %v928 = vrcp.pop %v927
  %v929 = vmul.f32 1.0, %v928
  %v930 = vxor.u32 %v921, 2147483648
  %v931 = vmul.f32 %v930, 1.442695
  %v932 = vpow.pop %v931
  %v933 = vadd.f32 %v932, 1.0
  %v934 = vrcp.pop %v933
  %v935 = vmul.f32 1.0, %v934
  %v936 = vtanh.pop %v922
  %v937 = vxor.u32 %v923, 2147483648
  %v938 = vmul.f32 %v937, 1.442695
  %v939 = vpow.pop %v938
  %v940 = vadd.f32 %v939, 1.0
  %v941 = vrcp.pop %v940
  %v942 = vmul.f32 1.0, %v941
  %v943 = vld [vmem:[#allocation3] sm:$0xff]
  %v944 = vmul.f32 %v935, %v943
  %v945 = vmul.f32 %v929, %v936
  %v946 = vadd.f32 %v944, %v945
  %v947 = vtanh.pop %v946
  %v948 = vmul.f32 %v942, %v947
  %949 = vst [vmem:[#allocation3] sm:$0xff] %v946
  %950 = vst [vmem:[#allocation2] sm:$0xff] %v948
  %v951 = vpack.c.bf16 %v948, %v948
  %952 = vst [vmem:[%s2 + $0x8] sm:$0xf] %v951
  %v953 = vld [vmem:[%s0 + $0x60] sm:$0xff]
  %v954 = vld [vmem:[%s0 + $0x68] sm:$0xff]
  %v955 = vld [vmem:[%s0 + $0x70] sm:$0xff]
  %v956 = vld [vmem:[%s0 + $0x78] sm:$0xff]
  %v957 = vld [vmem:[#allocation2] sm:$0xff]
  %v958 = vpack.c.bf16 %v957, %v957
  %v959 = vld [vmem:[%s1] sm:$0xff]
  %v960 = vld [vmem:[%s1 + $0x8] sm:$0xff]
  %v961 = vld [vmem:[%s1 + $0x10] sm:$0xff]
  %v962 = vld [vmem:[%s1 + $0x18] sm:$0xff]
  %v963 = vld [vmem:[%s1 + $0x20] sm:$0xff]
  %v964 = vld [vmem:[%s1 + $0x28] sm:$0xff]
  %v965 = vld [vmem:[%s1 + $0x30] sm:$0xff]
  %v966 = vld [vmem:[%s1 + $0x38] sm:$0xff]
  %v967 = vld [vmem:[%s1 + $0x40] sm:$0xff]
  %v968 = vld [vmem:[%s1 + $0x48] sm:$0xff]
  %v969 = vld [vmem:[%s1 + $0x50] sm:$0xff]
  %v970 = vld [vmem:[%s1 + $0x58] sm:$0xff]
  %v971 = vld [vmem:[%s1 + $0x60] sm:$0xff]
  %v972 = vld [vmem:[%s1 + $0x68] sm:$0xff]
  %v973 = vld [vmem:[%s1 + $0x70] sm:$0xff]
  %v974 = vld [vmem:[%s1 + $0x78] sm:$0xff]
  %v975 = vld [vmem:[%s1 + $0x80] sm:$0xff]
  %v976 = vld [vmem:[%s1 + $0x88] sm:$0xff]
  %v977 = vld [vmem:[%s1 + $0x90] sm:$0xff]
  %v978 = vld [vmem:[%s1 + $0x98] sm:$0xff]
  %v979 = vld [vmem:[%s1 + $0xa0] sm:$0xff]
  %v980 = vld [vmem:[%s1 + $0xa8] sm:$0xff]
  %v981 = vld [vmem:[%s1 + $0xb0] sm:$0xff]
  %v982 = vld [vmem:[%s1 + $0xb8] sm:$0xff]
  %v983 = vld [vmem:[%s1 + $0xc0] sm:$0xff]
  %v984 = vld [vmem:[%s1 + $0xc8] sm:$0xff]
  %v985 = vld [vmem:[%s1 + $0xd0] sm:$0xff]
  %v986 = vld [vmem:[%s1 + $0xd8] sm:$0xff]
  %v987 = vld [vmem:[%s1 + $0xe0] sm:$0xff]
  %v988 = vld [vmem:[%s1 + $0xe8] sm:$0xff]
  %v989 = vld [vmem:[%s1 + $0xf0] sm:$0xff]
  %v990 = vld [vmem:[%s1 + $0xf8] sm:$0xff]
  %v1023 = vunpack.c.l.b16 %v959
  %v1024 = vunpack.c.h.b16 %v959
  %v1025 = vunpack.c.l.b16 %v960
  %v1026 = vunpack.c.h.b16 %v960
  %v1027 = vunpack.c.l.b16 %v961
  %v1028 = vunpack.c.h.b16 %v961
  %v1029 = vunpack.c.l.b16 %v962
  %v1030 = vunpack.c.h.b16 %v962
  %v1031 = vunpack.c.l.b16 %v963
  %v1032 = vunpack.c.h.b16 %v963
  %v1033 = vunpack.c.l.b16 %v964
  %v1034 = vunpack.c.h.b16 %v964
  %v1035 = vunpack.c.l.b16 %v965
  %v1036 = vunpack.c.h.b16 %v965
  %v1037 = vunpack.c.l.b16 %v966
  %v1038 = vunpack.c.h.b16 %v966
  %v1039 = vunpack.c.l.b16 %v967
  %v1040 = vunpack.c.h.b16 %v967
  %v1041 = vunpack.c.l.b16 %v968
  %v1042 = vunpack.c.h.b16 %v968
  %v1043 = vunpack.c.l.b16 %v969
  %v1044 = vunpack.c.h.b16 %v969
  %v1045 = vunpack.c.l.b16 %v970
  %v1046 = vunpack.c.h.b16 %v970
  %v1047 = vunpack.c.l.b16 %v971
  %v1048 = vunpack.c.h.b16 %v971
  %v1049 = vunpack.c.l.b16 %v972
  %v1050 = vunpack.c.h.b16 %v972
  %v1051 = vunpack.c.l.b16 %v973
  %v1052 = vunpack.c.h.b16 %v973
  %v1053 = vunpack.c.l.b16 %v974
  %v1054 = vunpack.c.h.b16 %v974
  %v1055 = vunpack.c.l.b16 %v975
  %v1056 = vunpack.c.h.b16 %v975
  %v1057 = vunpack.c.l.b16 %v976
  %v1058 = vunpack.c.h.b16 %v976
  %v1059 = vunpack.c.l.b16 %v977
  %v1060 = vunpack.c.h.b16 %v977
  %v1061 = vunpack.c.l.b16 %v978
  %v1062 = vunpack.c.h.b16 %v978
  %v1063 = vunpack.c.l.b16 %v979
  %v1064 = vunpack.c.h.b16 %v979
  %v1065 = vunpack.c.l.b16 %v980
  %v1066 = vunpack.c.h.b16 %v980
  %v1067 = vunpack.c.l.b16 %v981
  %v1068 = vunpack.c.h.b16 %v981
  %v1069 = vunpack.c.l.b16 %v982
  %v1070 = vunpack.c.h.b16 %v982
  %v1071 = vunpack.c.l.b16 %v983
  %v1072 = vunpack.c.h.b16 %v983
  %v1073 = vunpack.c.l.b16 %v984
  %v1074 = vunpack.c.h.b16 %v984
  %v1075 = vunpack.c.l.b16 %v985
  %v1076 = vunpack.c.h.b16 %v985
  %v1077 = vunpack.c.l.b16 %v986
  %v1078 = vunpack.c.h.b16 %v986
  %v1079 = vunpack.c.l.b16 %v987
  %v1080 = vunpack.c.h.b16 %v987
  %v1081 = vunpack.c.l.b16 %v988
  %v1082 = vunpack.c.h.b16 %v988
  %v1083 = vunpack.c.l.b16 %v989
  %v1084 = vunpack.c.h.b16 %v989
  %v1085 = vunpack.c.l.b16 %v990
  %v1086 = vunpack.c.h.b16 %v990
  %v1087 = vpack.c.b16 %v1027, %v1023
  %v1088 = vpack.c.b16 %v1028, %v1024
  %v1089 = vpack.c.b16 %v1029, %v1025
  %v1090 = vpack.c.b16 %v1030, %v1026
  %v1091 = vpack.c.b16 %v1035, %v1031
  %v1092 = vpack.c.b16 %v1036, %v1032
  %v1093 = vpack.c.b16 %v1037, %v1033
  %v1094 = vpack.c.b16 %v1038, %v1034
  %v1095 = vpack.c.b16 %v1043, %v1039
  %v1096 = vpack.c.b16 %v1044, %v1040
  %v1097 = vpack.c.b16 %v1045, %v1041
  %v1098 = vpack.c.b16 %v1046, %v1042
  %v1099 = vpack.c.b16 %v1051, %v1047
  %v1100 = vpack.c.b16 %v1052, %v1048
  %v1101 = vpack.c.b16 %v1053, %v1049
  %v1102 = vpack.c.b16 %v1054, %v1050
  %v1103 = vpack.c.b16 %v1059, %v1055
  %v1104 = vpack.c.b16 %v1060, %v1056
  %v1105 = vpack.c.b16 %v1061, %v1057
  %v1106 = vpack.c.b16 %v1062, %v1058
  %v1107 = vpack.c.b16 %v1067, %v1063
  %v1108 = vpack.c.b16 %v1068, %v1064
  %v1109 = vpack.c.b16 %v1069, %v1065
  %v1110 = vpack.c.b16 %v1070, %v1066
  %v1111 = vpack.c.b16 %v1075, %v1071
  %v1112 = vpack.c.b16 %v1076, %v1072
  %v1113 = vpack.c.b16 %v1077, %v1073
  %v1114 = vpack.c.b16 %v1078, %v1074
  %v1115 = vpack.c.b16 %v1083, %v1079
  %v1116 = vpack.c.b16 %v1084, %v1080
  %v1117 = vpack.c.b16 %v1085, %v1081
  %v1118 = vpack.c.b16 %v1086, %v1082
  %1151 = vmatprep.subr.bf16.mxu0 %v1116
  %1152 = vmatpush1.bf16.msra.mxu0 %v1115
  %1153 = vmatprep.subr.bf16.mxu0 %v1112
  %1154 = vmatpush1.bf16.msra.mxu0 %v1111
  %1155 = vmatprep.subr.bf16.mxu0 %v1108
  %1156 = vmatpush1.bf16.msra.mxu0 %v1107
  %1157 = vmatprep.subr.bf16.mxu0 %v1104
  %1158 = vmatpush1.bf16.msra.mxu0 %v1103
  %1159 = vmatprep.subr.bf16.mxu0 %v1100
  %1160 = vmatpush1.bf16.msra.mxu0 %v1099
  %1161 = vmatprep.subr.bf16.mxu0 %v1096
  %1162 = vmatpush1.bf16.msra.mxu0 %v1095
  %1163 = vmatprep.subr.bf16.mxu0 %v1092
  %1164 = vmatpush1.bf16.msra.mxu0 %v1091
  %1165 = vmatprep.subr.bf16.mxu0 %v1088
  %1166 = vmatpush1.bf16.msra.mxu0 %v1087
  %1167 = vmatprep.subr.bf16.mxu0 0
  %1168 = vmatpush2.bf16.msra.mxu0 0
  %1169 = vmatprep.subr.bf16.mxu0 0
  %1170 = vmatpush2.bf16.msra.mxu0 0
  %1171 = vmatprep.subr.bf16.mxu0 0
  %1172 = vmatpush2.bf16.msra.mxu0 0
  %1173 = vmatprep.subr.bf16.mxu0 0
  %1174 = vmatpush2.bf16.msra.mxu0 0
  %1175 = vmatprep.subr.bf16.mxu0 0
  %1176 = vmatpush2.bf16.msra.mxu0 0
  %1177 = vmatprep.subr.bf16.mxu0 0
  %1178 = vmatpush2.bf16.msra.mxu0 0
  %1179 = vmatprep.subr.bf16.mxu0 0
  %1180 = vmatpush2.bf16.msra.mxu0 0
  %1181 = vmatprep.subr.bf16.mxu0 0
  %1182 = vmatpush2.bf16.msra.mxu0 0
  %1183 = vmatprep.mubr.bf16.mxu0 0
  %1184 = vmatmul.mubr.bf16.gmra.mxu0 %v958
  %v1185 = vpop.f32.mrf.mxu0
  %v1186 = vadd.f32 0.0, %v1185
  %v1187 = vpop.f32.mrf.mxu0
  %v1188 = vadd.f32 0.0, %v1187
  %v1189 = vpop.f32.mrf.mxu0
  %v1190 = vpop.f32.mrf.mxu0
  %1191 = vdwg.mxu0
  %1192 = vmatprep.subr.bf16.mxu0 %v1118
  %1193 = vmatpush1.bf16.msra.mxu0 %v1117
  %1194 = vmatprep.subr.bf16.mxu0 %v1114
  %1195 = vmatpush1.bf16.msra.mxu0 %v1113
  %1196 = vmatprep.subr.bf16.mxu0 %v1110
  %1197 = vmatpush1.bf16.msra.mxu0 %v1109
  %1198 = vmatprep.subr.bf16.mxu0 %v1106
  %1199 = vmatpush1.bf16.msra.mxu0 %v1105
  %1200 = vmatprep.subr.bf16.mxu0 %v1102
  %1201 = vmatpush1.bf16.msra.mxu0 %v1101
  %1202 = vmatprep.subr.bf16.mxu0 %v1098
  %1203 = vmatpush1.bf16.msra.mxu0 %v1097
  %1204 = vmatprep.subr.bf16.mxu0 %v1094
  %1205 = vmatpush1.bf16.msra.mxu0 %v1093
  %1206 = vmatprep.subr.bf16.mxu0 %v1090
  %1207 = vmatpush1.bf16.msra.mxu0 %v1089
  %1208 = vmatprep.subr.bf16.mxu0 0
  %1209 = vmatpush2.bf16.msra.mxu0 0
  %1210 = vmatprep.subr.bf16.mxu0 0
  %1211 = vmatpush2.bf16.msra.mxu0 0
  %1212 = vmatprep.subr.bf16.mxu0 0
  %1213 = vmatpush2.bf16.msra.mxu0 0
  %1214 = vmatprep.subr.bf16.mxu0 0
  %1215 = vmatpush2.bf16.msra.mxu0 0
  %1216 = vmatprep.subr.bf16.mxu0 0
  %1217 = vmatpush2.bf16.msra.mxu0 0
  %1218 = vmatprep.subr.bf16.mxu0 0
  %1219 = vmatpush2.bf16.msra.mxu0 0
  %1220 = vmatprep.subr.bf16.mxu0 0
  %1221 = vmatpush2.bf16.msra.mxu0 0
  %1222 = vmatprep.subr.bf16.mxu0 0
  %1223 = vmatpush2.bf16.msra.mxu0 0
  %1224 = vmatprep.mubr.bf16.mxu0 0
  %1225 = vmatmul.mubr.bf16.gmra.mxu0 %v958
  %v1226 = vpop.f32.mrf.mxu0
  %v1227 = vadd.f32 0.0, %v1226
  %v1228 = vpop.f32.mrf.mxu0
  %v1229 = vadd.f32 0.0, %v1228
  %v1230 = vpop.f32.mrf.mxu0
  %v1231 = vpop.f32.mrf.mxu0
  %1232 = vdwg.mxu0
  %v1233 = vadd.f32 %v953, %v1186
  %v1234 = vadd.f32 %v954, %v1188
  %v1235 = vadd.f32 %v955, %v1227
  %v1236 = vadd.f32 %v956, %v1229
  %v1237 = vxor.u32 %v1233, 2147483648
  %v1238 = vmul.f32 %v1237, 1.442695
  %v1239 = vpow.pop %v1238
  %v1240 = vadd.f32 %v1239, 1.0
  %v1241 = vrcp.pop %v1240
  %v1242 = vmul.f32 1.0, %v1241
  %v1243 = vxor.u32 %v1234, 2147483648
  %v1244 = vmul.f32 %v1243, 1.442695
  %v1245 = vpow.pop %v1244
  %v1246 = vadd.f32 %v1245, 1.0
  %v1247 = vrcp.pop %v1246
  %v1248 = vmul.f32 1.0, %v1247
  %v1249 = vtanh.pop %v1235
  %v1250 = vxor.u32 %v1236, 2147483648
  %v1251 = vmul.f32 %v1250, 1.442695
  %v1252 = vpow.pop %v1251
  %v1253 = vadd.f32 %v1252, 1.0
  %v1254 = vrcp.pop %v1253
  %v1255 = vmul.f32 1.0, %v1254
  %v1256 = vld [vmem:[#allocation3] sm:$0xff]
  %v1257 = vmul.f32 %v1248, %v1256
  %v1258 = vmul.f32 %v1242, %v1249
  %v1259 = vadd.f32 %v1257, %v1258
  %v1260 = vtanh.pop %v1259
  %v1261 = vmul.f32 %v1255, %v1260
  %1262 = vst [vmem:[#allocation3] sm:$0xff] %v1259
  %1263 = vst [vmem:[#allocation2] sm:$0xff] %v1261
  %v1264 = vpack.c.bf16 %v1261, %v1261
  %1265 = vst [vmem:[%s2 + $0xc] sm:$0xf] %v1264
  // Predicated region
  $region10: #{network_forward.4} parent=0 // pred_check
    _
  $region11: #{network_forward.4} parent=0 // pred_check_branch
    %1267 = sbr.rel (0) target = $region13
  $region12: #{network_forward.4} parent=0 // pred_region
    _
  $region13: #{network_forward.4} parent=0 // pred_fallthru
    _
  // Predicated region
  $region14: #{network_forward.4} parent=0 // pred_check
    _
  $region15: #{network_forward.4} parent=0 // pred_check_branch
    %1269 = sbr.rel (0) target = $region17
  $region16: #{network_forward.4} parent=0 // pred_region
    _
  $region17: #{network_forward.4} parent=0 // pred_fallthru
    _

</llo_original>
